<compile_context>
chip_gen: v7x
topology: tpu7x:2x2x1
jax: 0.10.0
libtpu: 0.0.40
codegen_flags: <defaults>
</compile_context>

<pallas_src>
import functools
import math

import jax
import jax.numpy as jnp
from jax.experimental import pallas as pl
from jax.experimental.pallas import tpu as pltpu


# ----------------------------- kernel body -----------------------------

def _layernorm(x, g, b, eps=1e-5):
    # Biased variance + eps inside rsqrt (matches torch.nn.LayerNorm).
    mean = jnp.mean(x, axis=-1, keepdims=True)
    c = x - mean
    var = jnp.mean(c * c, axis=-1, keepdims=True)
    return c * jax.lax.rsqrt(var + eps) * g + b


def fused_model_kernel(x_ref,
                       wqkv_ref, bqkv_ref, wo_ref, bo_ref,
                       g1_ref, be1_ref, w1_ref, b1_ref, w2_ref, b2_ref,
                       g2_ref, be2_ref, fcw_ref, fcb_ref,
                       o_ref, *, num_layers, num_heads, batch_per_block, seq_len):
    """All encoder layers + fc head on a (batch_per_block*S, D) activation slab."""
    x = x_ref[...].astype(jnp.float32)                   # (Bblk*S, D)
    D = x.shape[-1]
    H = num_heads
    dh = D // H
    S = seq_len

    for l in range(num_layers):                          # static layer loop
        # --- packed QKV projection: one lane-dense matmul (scale folded into Wq) ---
        qkv = jnp.dot(x, wqkv_ref[l], preferred_element_type=jnp.float32) + bqkv_ref[l]

        # --- per-batch, per-head attention on the projected slab (tiny static loops) ---
        attn_rows = []
        for b in range(batch_per_block):
            r0 = b * S
            head_outs = []
            for h in range(H):
                c = h * dh
                q = qkv[r0:r0 + S, c:c + dh]
                k = qkv[r0:r0 + S, D + c:D + c + dh]
                v = qkv[r0:r0 + S, 2 * D + c:2 * D + c + dh]
                # scores = q @ k^T (contract head dim of both; scaling already in Wq)
                s = jax.lax.dot_general(q, k, (((1,), (1,)), ((), ())),
                                        preferred_element_type=jnp.float32)
                s = s - jnp.max(s, axis=-1, keepdims=True)
                p = jnp.exp(s)
                p = p / jnp.sum(p, axis=-1, keepdims=True)
                head_outs.append(jnp.dot(p, v, preferred_element_type=jnp.float32))
            attn_rows.append(jnp.concatenate(head_outs, axis=-1))      # (S, D)
        attn = attn_rows[0] if batch_per_block == 1 else jnp.concatenate(attn_rows, axis=0)

        # --- packed out_proj: one lane-dense matmul ---
        attn = jnp.dot(attn, wo_ref[l], preferred_element_type=jnp.float32) + bo_ref[l]

        # --- add & norm 1 ---
        x = _layernorm(x + attn, g1_ref[l], be1_ref[l])

        # --- feedforward ---
        f = jnp.dot(x, w1_ref[l], preferred_element_type=jnp.float32) + b1_ref[l]
        f = jnp.maximum(f, 0.0)
        f = jnp.dot(f, w2_ref[l], preferred_element_type=jnp.float32) + b2_ref[l]

        # --- add & norm 2 ---
        x = _layernorm(x + f, g2_ref[l], be2_ref[l])

    # --- final fc (D -> 1): VPU multiply + lane reduce (no 1-lane matmul) ---
    y = jnp.sum(x * fcw_ref[...], axis=-1, keepdims=True) + fcb_ref[...]
    o_ref[...] = y.astype(o_ref.dtype)


# ----------------------------- pallas_call wrapper -----------------------------

def time_series_transformer_forward(x, params, num_heads, batch_blocks=None):
    """x: (S, B, D) (PyTorch batch_first=False) -> (S, B, 1)."""
    S, B, D = x.shape
    L = params["wqkv"].shape[0]
    F = params["w1"].shape[-1]

    # Grid choice: two "parallel" fat batch-chunks (one per v7x TensorCore) when
    # B is even; otherwise a single step (no serial per-batch grid loop).
    if batch_blocks is None:
        batch_blocks = 2 if (B >= 2 and B % 2 == 0) else 1
    nb = batch_blocks
    bpb = B // nb
    rows = bpb * S

    xb = jnp.transpose(x, (1, 0, 2)).reshape(B * S, D)   # one relayout for whole model

    def const_spec(shape):
        # Whole-array block, constant index map -> DMA'd once, resident in VMEM.
        return pl.BlockSpec(shape, lambda i, _n=len(shape): (0,) * _n)

    in_specs = [
        pl.BlockSpec((rows, D), lambda i: (i, 0)),        # activation slab
        const_spec((L, D, 3 * D)), const_spec((L, 1, 3 * D)),
        const_spec((L, D, D)), const_spec((L, 1, D)),
        const_spec((L, 1, D)), const_spec((L, 1, D)),
        const_spec((L, D, F)), const_spec((L, 1, F)),
        const_spec((L, F, D)), const_spec((L, 1, D)),
        const_spec((L, 1, D)), const_spec((L, 1, D)),
        const_spec((1, D)), const_spec((1, 1)),
    ]
    args = [xb,
            params["wqkv"], params["bqkv"], params["wo"], params["bo"],
            params["ln1_g"], params["ln1_b"],
            params["w1"], params["b1"], params["w2"], params["b2"],
            params["ln2_g"], params["ln2_b"],
            params["fc_w"], params["fc_b"]]

    kern = functools.partial(fused_model_kernel,
                             num_layers=L, num_heads=num_heads,
                             batch_per_block=bpb, seq_len=S)

    y = pl.pallas_call(
        kern,
        out_shape=jax.ShapeDtypeStruct((B * S, 1), x.dtype),
        grid=(nb,),
        in_specs=in_specs,
        out_specs=pl.BlockSpec((rows, 1), lambda i: (i, 0)),
        compiler_params=pltpu.CompilerParams(
            dimension_semantics=("parallel",),
            vmem_limit_bytes=32 * 1024 * 1024),
    )(*args)

    return jnp.transpose(y.reshape(B, S, 1), (1, 0, 2))   # (S, B, 1)


# ----------------------------- params -----------------------------

def init_params(key, num_layers, num_heads, d_model, dim_feedforward):
    """PyTorch-style packed weights, stacked on a leading layer axis, laid out
    for x @ W^T, with the attention scale folded into the Q projection."""
    L, H, D, F = num_layers, num_heads, d_model, dim_feedforward
    dh = D // H
    scale = 1.0 / math.sqrt(dh)
    ks = jax.random.split(key, 4 * L + 1)

    wqkv, bqkv, wo, bo = [], [], [], []
    w1, b1, w2, b2 = [], [], [], []
    g1, be1, g2, be2 = [], [], [], []
    qscale = jnp.concatenate([jnp.full((D,), scale, jnp.float32),
                              jnp.ones((2 * D,), jnp.float32)])
    for l in range(L):
        k0, k1, k2, k3 = ks[4 * l:4 * l + 4]
        in_proj_wT = jax.random.normal(k0, (D, 3 * D), jnp.float32) * 0.05
        in_proj_b = jnp.zeros((3 * D,), jnp.float32)
        wqkv.append(in_proj_wT * qscale[None, :])          # fold 1/sqrt(dh) into Wq
        bqkv.append((in_proj_b * qscale).reshape(1, 3 * D))
        wo.append(jax.random.normal(k1, (D, D), jnp.float32) * 0.05)
        bo.append(jnp.zeros((1, D), jnp.float32))
        w1.append(jax.random.normal(k2, (D, F), jnp.float32) * 0.05)
        b1.append(jnp.zeros((1, F), jnp.float32))
        w2.append(jax.random.normal(k3, (F, D), jnp.float32) * 0.05)
        b2.append(jnp.zeros((1, D), jnp.float32))
        g1.append(jnp.ones((1, D), jnp.float32)); be1.append(jnp.zeros((1, D), jnp.float32))
        g2.append(jnp.ones((1, D), jnp.float32)); be2.append(jnp.zeros((1, D), jnp.float32))

    return dict(
        wqkv=jnp.stack(wqkv), bqkv=jnp.stack(bqkv),
        wo=jnp.stack(wo), bo=jnp.stack(bo),
        ln1_g=jnp.stack(g1), ln1_b=jnp.stack(be1),
        w1=jnp.stack(w1), b1=jnp.stack(b1),
        w2=jnp.stack(w2), b2=jnp.stack(b2),
        ln2_g=jnp.stack(g2), ln2_b=jnp.stack(be2),
        fc_w=jax.random.normal(ks[-1], (1, D), jnp.float32) * 0.05,
        fc_b=jnp.zeros((1, 1), jnp.float32),
    )


if __name__ == "__main__":
    num_layers = 2
    num_heads = 4
    d_model = 32
    dim_feedforward = 64
    seq_len = 8
    batch = 2

    key = jax.random.PRNGKey(0)
    key, kx = jax.random.split(key)
    # layout: (seq, batch, d_model) — PyTorch batch_first=False convention
    x = jax.random.normal(kx, (seq_len, batch, d_model), jnp.float32)
    params = init_params(key, num_layers, num_heads, d_model, dim_feedforward)

    fwd = jax.jit(functools.partial(time_series_transformer_forward,
                                    num_heads=num_heads))
    out = jax.block_until_ready(fwd(x, params))
    assert out.shape == (seq_len, batch, 1)
    print("KERNEL_OK")
</pallas_src>

<mosaic_0001>
module attributes {stable_mosaic.version = 11 : i64} {
  func.func @fused_model_kernel(%arg0: i32, %arg1: memref<8x32xf32, #tpu.memory_space<vmem>>, %arg2: memref<2x32x96xf32, #tpu.memory_space<vmem>>, %arg3: memref<2x1x96xf32, #tpu.memory_space<vmem>>, %arg4: memref<2x32x32xf32, #tpu.memory_space<vmem>>, %arg5: memref<2x1x32xf32, #tpu.memory_space<vmem>>, %arg6: memref<2x1x32xf32, #tpu.memory_space<vmem>>, %arg7: memref<2x1x32xf32, #tpu.memory_space<vmem>>, %arg8: memref<2x32x64xf32, #tpu.memory_space<vmem>>, %arg9: memref<2x1x64xf32, #tpu.memory_space<vmem>>, %arg10: memref<2x64x32xf32, #tpu.memory_space<vmem>>, %arg11: memref<2x1x32xf32, #tpu.memory_space<vmem>>, %arg12: memref<2x1x32xf32, #tpu.memory_space<vmem>>, %arg13: memref<2x1x32xf32, #tpu.memory_space<vmem>>, %arg14: memref<1x32xf32, #tpu.memory_space<vmem>>, %arg15: memref<1x1xf32, #tpu.memory_space<vmem>>, %arg16: memref<8x1xf32, #tpu.memory_space<vmem>>) attributes {dimension_semantics = [#tpu.dimension_semantics<parallel>], iteration_bounds = array<i64: 2>, scalar_prefetch = 0 : i64, scratch_operands = 0 : i64, tpu.core_type = #tpu.core_type<tc>, window_params = [{transform_indices = @transform_0, window_bounds = array<i64: 8, 32>}, {pipeline_mode = #tpu.pipeline_mode<synchronous>, transform_indices = @transform_1, window_bounds = array<i64: 2, 32, 96>}, {pipeline_mode = #tpu.pipeline_mode<synchronous>, transform_indices = @transform_2, window_bounds = array<i64: 2, 1, 96>}, {pipeline_mode = #tpu.pipeline_mode<synchronous>, transform_indices = @transform_3, window_bounds = array<i64: 2, 32, 32>}, {pipeline_mode = #tpu.pipeline_mode<synchronous>, transform_indices = @transform_4, window_bounds = array<i64: 2, 1, 32>}, {pipeline_mode = #tpu.pipeline_mode<synchronous>, transform_indices = @transform_5, window_bounds = array<i64: 2, 1, 32>}, {pipeline_mode = #tpu.pipeline_mode<synchronous>, transform_indices = @transform_6, window_bounds = array<i64: 2, 1, 32>}, {pipeline_mode = #tpu.pipeline_mode<synchronous>, transform_indices = @transform_7, window_bounds = array<i64: 2, 32, 64>}, {pipeline_mode = #tpu.pipeline_mode<synchronous>, transform_indices = @transform_8, window_bounds = array<i64: 2, 1, 64>}, {pipeline_mode = #tpu.pipeline_mode<synchronous>, transform_indices = @transform_9, window_bounds = array<i64: 2, 64, 32>}, {pipeline_mode = #tpu.pipeline_mode<synchronous>, transform_indices = @transform_10, window_bounds = array<i64: 2, 1, 32>}, {pipeline_mode = #tpu.pipeline_mode<synchronous>, transform_indices = @transform_11, window_bounds = array<i64: 2, 1, 32>}, {pipeline_mode = #tpu.pipeline_mode<synchronous>, transform_indices = @transform_12, window_bounds = array<i64: 2, 1, 32>}, {pipeline_mode = #tpu.pipeline_mode<synchronous>, transform_indices = @transform_13, window_bounds = array<i64: 1, 32>}, {pipeline_mode = #tpu.pipeline_mode<synchronous>, transform_indices = @transform_14, window_bounds = array<i64: 1, 1>}, {transform_indices = @transform_15, window_bounds = array<i64: 8, 1>}]} {
    %c0 = arith.constant 0 : index
    %c0_0 = arith.constant 0 : index
    %0 = vector.load %arg1[%c0, %c0_0] : memref<8x32xf32, #tpu.memory_space<vmem>>, vector<8x32xf32>
    %c0_1 = arith.constant 0 : index
    %c0_2 = arith.constant 0 : index
    %c0_3 = arith.constant 0 : index
    %1 = vector.load %arg2[%c0_1, %c0_2, %c0_3] : memref<2x32x96xf32, #tpu.memory_space<vmem>>, vector<1x32x96xf32>
    %2 = vector.shape_cast %1 : vector<1x32x96xf32> to vector<32x96xf32>
    %cst = arith.constant dense<0.000000e+00> : vector<8x96xf32>
    %3 = tpu.matmul %0, %2, %cst {dimension_numbers = #tpu.dot_dimension_numbers<[1], [0], [0], [1], [0, 0, 1, 1], [], []>} : vector<8x32xf32>, vector<32x96xf32>, vector<8x96xf32> -> vector<8x96xf32>
    %c0_4 = arith.constant 0 : index
    %c0_5 = arith.constant 0 : index
    %c0_6 = arith.constant 0 : index
    %4 = vector.load %arg3[%c0_4, %c0_5, %c0_6] : memref<2x1x96xf32, #tpu.memory_space<vmem>>, vector<1x1x96xf32>
    %5 = vector.shape_cast %4 : vector<1x1x96xf32> to vector<1x96xf32>
    %6 = vector.broadcast %5 : vector<1x96xf32> to vector<8x96xf32>
    %7 = arith.addf %3, %6 : vector<8x96xf32>
    %8 = vector.extract_strided_slice %7 {offsets = [0, 0], sizes = [8, 8], strides = [1, 1]} : vector<8x96xf32> to vector<8x8xf32>
    %9 = vector.extract_strided_slice %7 {offsets = [0, 32], sizes = [8, 8], strides = [1, 1]} : vector<8x96xf32> to vector<8x8xf32>
    %10 = vector.extract_strided_slice %7 {offsets = [0, 64], sizes = [8, 8], strides = [1, 1]} : vector<8x96xf32> to vector<8x8xf32>
    %cst_7 = arith.constant dense<0.000000e+00> : vector<8x8xf32>
    %11 = tpu.matmul %8, %9, %cst_7 {dimension_numbers = #tpu.dot_dimension_numbers<[1], [1], [0], [0], [0, 0, 1, 0], [], []>} : vector<8x8xf32>, vector<8x8xf32>, vector<8x8xf32> -> vector<8x8xf32>
    %cst_8 = arith.constant dense<0xFF800000> : vector<8xf32>
    %12 = vector.multi_reduction <maximumf>, %11, %cst_8 [1] : vector<8x8xf32> to vector<8xf32>
    %13 = vector.shape_cast %12 : vector<8xf32> to vector<8x1xf32>
    %14 = vector.broadcast %13 : vector<8x1xf32> to vector<8x8xf32>
    %15 = arith.subf %11, %14 : vector<8x8xf32>
    %16 = math.exp %15 : vector<8x8xf32>
    %cst_9 = arith.constant dense<0.000000e+00> : vector<8xf32>
    %17 = vector.multi_reduction <add>, %16, %cst_9 [1] : vector<8x8xf32> to vector<8xf32>
    %18 = vector.shape_cast %17 : vector<8xf32> to vector<8x1xf32>
    %19 = vector.broadcast %18 : vector<8x1xf32> to vector<8x8xf32>
    %20 = arith.divf %16, %19 : vector<8x8xf32>
    %cst_10 = arith.constant dense<0.000000e+00> : vector<8x8xf32>
    %21 = tpu.matmul %20, %10, %cst_10 {dimension_numbers = #tpu.dot_dimension_numbers<[1], [0], [0], [1], [0, 0, 1, 1], [], []>} : vector<8x8xf32>, vector<8x8xf32>, vector<8x8xf32> -> vector<8x8xf32>
    %22 = vector.extract_strided_slice %7 {offsets = [0, 8], sizes = [8, 8], strides = [1, 1]} : vector<8x96xf32> to vector<8x8xf32>
    %23 = vector.extract_strided_slice %7 {offsets = [0, 40], sizes = [8, 8], strides = [1, 1]} : vector<8x96xf32> to vector<8x8xf32>
    %24 = vector.extract_strided_slice %7 {offsets = [0, 72], sizes = [8, 8], strides = [1, 1]} : vector<8x96xf32> to vector<8x8xf32>
    %cst_11 = arith.constant dense<0.000000e+00> : vector<8x8xf32>
    %25 = tpu.matmul %22, %23, %cst_11 {dimension_numbers = #tpu.dot_dimension_numbers<[1], [1], [0], [0], [0, 0, 1, 0], [], []>} : vector<8x8xf32>, vector<8x8xf32>, vector<8x8xf32> -> vector<8x8xf32>
    %cst_12 = arith.constant dense<0xFF800000> : vector<8xf32>
    %26 = vector.multi_reduction <maximumf>, %25, %cst_12 [1] : vector<8x8xf32> to vector<8xf32>
    %27 = vector.shape_cast %26 : vector<8xf32> to vector<8x1xf32>
    %28 = vector.broadcast %27 : vector<8x1xf32> to vector<8x8xf32>
    %29 = arith.subf %25, %28 : vector<8x8xf32>
    %30 = math.exp %29 : vector<8x8xf32>
    %cst_13 = arith.constant dense<0.000000e+00> : vector<8xf32>
    %31 = vector.multi_reduction <add>, %30, %cst_13 [1] : vector<8x8xf32> to vector<8xf32>
    %32 = vector.shape_cast %31 : vector<8xf32> to vector<8x1xf32>
    %33 = vector.broadcast %32 : vector<8x1xf32> to vector<8x8xf32>
    %34 = arith.divf %30, %33 : vector<8x8xf32>
    %cst_14 = arith.constant dense<0.000000e+00> : vector<8x8xf32>
    %35 = tpu.matmul %34, %24, %cst_14 {dimension_numbers = #tpu.dot_dimension_numbers<[1], [0], [0], [1], [0, 0, 1, 1], [], []>} : vector<8x8xf32>, vector<8x8xf32>, vector<8x8xf32> -> vector<8x8xf32>
    %36 = vector.extract_strided_slice %7 {offsets = [0, 16], sizes = [8, 8], strides = [1, 1]} : vector<8x96xf32> to vector<8x8xf32>
    %37 = vector.extract_strided_slice %7 {offsets = [0, 48], sizes = [8, 8], strides = [1, 1]} : vector<8x96xf32> to vector<8x8xf32>
    %38 = vector.extract_strided_slice %7 {offsets = [0, 80], sizes = [8, 8], strides = [1, 1]} : vector<8x96xf32> to vector<8x8xf32>
    %cst_15 = arith.constant dense<0.000000e+00> : vector<8x8xf32>
    %39 = tpu.matmul %36, %37, %cst_15 {dimension_numbers = #tpu.dot_dimension_numbers<[1], [1], [0], [0], [0, 0, 1, 0], [], []>} : vector<8x8xf32>, vector<8x8xf32>, vector<8x8xf32> -> vector<8x8xf32>
    %cst_16 = arith.constant dense<0xFF800000> : vector<8xf32>
    %40 = vector.multi_reduction <maximumf>, %39, %cst_16 [1] : vector<8x8xf32> to vector<8xf32>
    %41 = vector.shape_cast %40 : vector<8xf32> to vector<8x1xf32>
    %42 = vector.broadcast %41 : vector<8x1xf32> to vector<8x8xf32>
    %43 = arith.subf %39, %42 : vector<8x8xf32>
    %44 = math.exp %43 : vector<8x8xf32>
    %cst_17 = arith.constant dense<0.000000e+00> : vector<8xf32>
    %45 = vector.multi_reduction <add>, %44, %cst_17 [1] : vector<8x8xf32> to vector<8xf32>
    %46 = vector.shape_cast %45 : vector<8xf32> to vector<8x1xf32>
    %47 = vector.broadcast %46 : vector<8x1xf32> to vector<8x8xf32>
    %48 = arith.divf %44, %47 : vector<8x8xf32>
    %cst_18 = arith.constant dense<0.000000e+00> : vector<8x8xf32>
    %49 = tpu.matmul %48, %38, %cst_18 {dimension_numbers = #tpu.dot_dimension_numbers<[1], [0], [0], [1], [0, 0, 1, 1], [], []>} : vector<8x8xf32>, vector<8x8xf32>, vector<8x8xf32> -> vector<8x8xf32>
    %50 = vector.extract_strided_slice %7 {offsets = [0, 24], sizes = [8, 8], strides = [1, 1]} : vector<8x96xf32> to vector<8x8xf32>
    %51 = vector.extract_strided_slice %7 {offsets = [0, 56], sizes = [8, 8], strides = [1, 1]} : vector<8x96xf32> to vector<8x8xf32>
    %52 = vector.extract_strided_slice %7 {offsets = [0, 88], sizes = [8, 8], strides = [1, 1]} : vector<8x96xf32> to vector<8x8xf32>
    %cst_19 = arith.constant dense<0.000000e+00> : vector<8x8xf32>
    %53 = tpu.matmul %50, %51, %cst_19 {dimension_numbers = #tpu.dot_dimension_numbers<[1], [1], [0], [0], [0, 0, 1, 0], [], []>} : vector<8x8xf32>, vector<8x8xf32>, vector<8x8xf32> -> vector<8x8xf32>
    %cst_20 = arith.constant dense<0xFF800000> : vector<8xf32>
    %54 = vector.multi_reduction <maximumf>, %53, %cst_20 [1] : vector<8x8xf32> to vector<8xf32>
    %55 = vector.shape_cast %54 : vector<8xf32> to vector<8x1xf32>
    %56 = vector.broadcast %55 : vector<8x1xf32> to vector<8x8xf32>
    %57 = arith.subf %53, %56 : vector<8x8xf32>
    %58 = math.exp %57 : vector<8x8xf32>
    %cst_21 = arith.constant dense<0.000000e+00> : vector<8xf32>
    %59 = vector.multi_reduction <add>, %58, %cst_21 [1] : vector<8x8xf32> to vector<8xf32>
    %60 = vector.shape_cast %59 : vector<8xf32> to vector<8x1xf32>
    %61 = vector.broadcast %60 : vector<8x1xf32> to vector<8x8xf32>
    %62 = arith.divf %58, %61 : vector<8x8xf32>
    %cst_22 = arith.constant dense<0.000000e+00> : vector<8x8xf32>
    %63 = tpu.matmul %62, %52, %cst_22 {dimension_numbers = #tpu.dot_dimension_numbers<[1], [0], [0], [1], [0, 0, 1, 1], [], []>} : vector<8x8xf32>, vector<8x8xf32>, vector<8x8xf32> -> vector<8x8xf32>
    %64 = tpu.concatenate %21, %35, %49, %63 in 1 : vector<8x8xf32>, vector<8x8xf32>, vector<8x8xf32>, vector<8x8xf32> -> vector<8x32xf32>
    %c0_23 = arith.constant 0 : index
    %c0_24 = arith.constant 0 : index
    %c0_25 = arith.constant 0 : index
    %65 = vector.load %arg4[%c0_23, %c0_24, %c0_25] : memref<2x32x32xf32, #tpu.memory_space<vmem>>, vector<1x32x32xf32>
    %66 = vector.shape_cast %65 : vector<1x32x32xf32> to vector<32x32xf32>
    %cst_26 = arith.constant dense<0.000000e+00> : vector<8x32xf32>
    %67 = tpu.matmul %64, %66, %cst_26 {dimension_numbers = #tpu.dot_dimension_numbers<[1], [0], [0], [1], [0, 0, 1, 1], [], []>} : vector<8x32xf32>, vector<32x32xf32>, vector<8x32xf32> -> vector<8x32xf32>
    %c0_27 = arith.constant 0 : index
    %c0_28 = arith.constant 0 : index
    %c0_29 = arith.constant 0 : index
    %68 = vector.load %arg5[%c0_27, %c0_28, %c0_29] : memref<2x1x32xf32, #tpu.memory_space<vmem>>, vector<1x1x32xf32>
    %69 = vector.shape_cast %68 : vector<1x1x32xf32> to vector<1x32xf32>
    %70 = vector.broadcast %69 : vector<1x32xf32> to vector<8x32xf32>
    %71 = arith.addf %67, %70 : vector<8x32xf32>
    %72 = arith.addf %0, %71 : vector<8x32xf32>
    %c0_30 = arith.constant 0 : index
    %c0_31 = arith.constant 0 : index
    %c0_32 = arith.constant 0 : index
    %73 = vector.load %arg6[%c0_30, %c0_31, %c0_32] : memref<2x1x32xf32, #tpu.memory_space<vmem>>, vector<1x1x32xf32>
    %74 = vector.shape_cast %73 : vector<1x1x32xf32> to vector<1x32xf32>
    %c0_33 = arith.constant 0 : index
    %c0_34 = arith.constant 0 : index
    %c0_35 = arith.constant 0 : index
    %75 = vector.load %arg7[%c0_33, %c0_34, %c0_35] : memref<2x1x32xf32, #tpu.memory_space<vmem>>, vector<1x1x32xf32>
    %76 = vector.shape_cast %75 : vector<1x1x32xf32> to vector<1x32xf32>
    %cst_36 = arith.constant dense<0.000000e+00> : vector<8xf32>
    %77 = vector.multi_reduction <add>, %72, %cst_36 [1] : vector<8x32xf32> to vector<8xf32>
    %78 = vector.shape_cast %77 : vector<8xf32> to vector<8x1xf32>
    %cst_37 = arith.constant 3.200000e+01 : f32
    %79 = vector.broadcast %cst_37 : f32 to vector<8x1xf32>
    %80 = arith.divf %78, %79 : vector<8x1xf32>
    %81 = vector.broadcast %80 : vector<8x1xf32> to vector<8x32xf32>
    %82 = arith.subf %72, %81 : vector<8x32xf32>
    %83 = arith.mulf %82, %82 : vector<8x32xf32>
    %cst_38 = arith.constant dense<0.000000e+00> : vector<8xf32>
    %84 = vector.multi_reduction <add>, %83, %cst_38 [1] : vector<8x32xf32> to vector<8xf32>
    %85 = vector.shape_cast %84 : vector<8xf32> to vector<8x1xf32>
    %cst_39 = arith.constant 3.200000e+01 : f32
    %86 = vector.broadcast %cst_39 : f32 to vector<8x1xf32>
    %87 = arith.divf %85, %86 : vector<8x1xf32>
    %cst_40 = arith.constant 9.99999974E-6 : f32
    %88 = vector.broadcast %cst_40 : f32 to vector<8x1xf32>
    %89 = arith.addf %87, %88 : vector<8x1xf32>
    %90 = math.rsqrt %89 : vector<8x1xf32>
    %91 = vector.broadcast %90 : vector<8x1xf32> to vector<8x32xf32>
    %92 = arith.mulf %82, %91 : vector<8x32xf32>
    %93 = vector.broadcast %74 : vector<1x32xf32> to vector<8x32xf32>
    %94 = arith.mulf %92, %93 : vector<8x32xf32>
    %95 = vector.broadcast %76 : vector<1x32xf32> to vector<8x32xf32>
    %96 = arith.addf %94, %95 : vector<8x32xf32>
    %c0_41 = arith.constant 0 : index
    %c0_42 = arith.constant 0 : index
    %c0_43 = arith.constant 0 : index
    %97 = vector.load %arg8[%c0_41, %c0_42, %c0_43] : memref<2x32x64xf32, #tpu.memory_space<vmem>>, vector<1x32x64xf32>
    %98 = vector.shape_cast %97 : vector<1x32x64xf32> to vector<32x64xf32>
    %cst_44 = arith.constant dense<0.000000e+00> : vector<8x64xf32>
    %99 = tpu.matmul %96, %98, %cst_44 {dimension_numbers = #tpu.dot_dimension_numbers<[1], [0], [0], [1], [0, 0, 1, 1], [], []>} : vector<8x32xf32>, vector<32x64xf32>, vector<8x64xf32> -> vector<8x64xf32>
    %c0_45 = arith.constant 0 : index
    %c0_46 = arith.constant 0 : index
    %c0_47 = arith.constant 0 : index
    %100 = vector.load %arg9[%c0_45, %c0_46, %c0_47] : memref<2x1x64xf32, #tpu.memory_space<vmem>>, vector<1x1x64xf32>
    %101 = vector.shape_cast %100 : vector<1x1x64xf32> to vector<1x64xf32>
    %102 = vector.broadcast %101 : vector<1x64xf32> to vector<8x64xf32>
    %103 = arith.addf %99, %102 : vector<8x64xf32>
    %cst_48 = arith.constant 0.000000e+00 : f32
    %104 = vector.broadcast %cst_48 : f32 to vector<8x64xf32>
    %105 = arith.maximumf %103, %104 : vector<8x64xf32>
    %c0_49 = arith.constant 0 : index
    %c0_50 = arith.constant 0 : index
    %c0_51 = arith.constant 0 : index
    %106 = vector.load %arg10[%c0_49, %c0_50, %c0_51] : memref<2x64x32xf32, #tpu.memory_space<vmem>>, vector<1x64x32xf32>
    %107 = vector.shape_cast %106 : vector<1x64x32xf32> to vector<64x32xf32>
    %cst_52 = arith.constant dense<0.000000e+00> : vector<8x32xf32>
    %108 = tpu.matmul %105, %107, %cst_52 {dimension_numbers = #tpu.dot_dimension_numbers<[1], [0], [0], [1], [0, 0, 1, 1], [], []>} : vector<8x64xf32>, vector<64x32xf32>, vector<8x32xf32> -> vector<8x32xf32>
    %c0_53 = arith.constant 0 : index
    %c0_54 = arith.constant 0 : index
    %c0_55 = arith.constant 0 : index
    %109 = vector.load %arg11[%c0_53, %c0_54, %c0_55] : memref<2x1x32xf32, #tpu.memory_space<vmem>>, vector<1x1x32xf32>
    %110 = vector.shape_cast %109 : vector<1x1x32xf32> to vector<1x32xf32>
    %111 = vector.broadcast %110 : vector<1x32xf32> to vector<8x32xf32>
    %112 = arith.addf %108, %111 : vector<8x32xf32>
    %113 = arith.addf %96, %112 : vector<8x32xf32>
    %c0_56 = arith.constant 0 : index
    %c0_57 = arith.constant 0 : index
    %c0_58 = arith.constant 0 : index
    %114 = vector.load %arg12[%c0_56, %c0_57, %c0_58] : memref<2x1x32xf32, #tpu.memory_space<vmem>>, vector<1x1x32xf32>
    %115 = vector.shape_cast %114 : vector<1x1x32xf32> to vector<1x32xf32>
    %c0_59 = arith.constant 0 : index
    %c0_60 = arith.constant 0 : index
    %c0_61 = arith.constant 0 : index
    %116 = vector.load %arg13[%c0_59, %c0_60, %c0_61] : memref<2x1x32xf32, #tpu.memory_space<vmem>>, vector<1x1x32xf32>
    %117 = vector.shape_cast %116 : vector<1x1x32xf32> to vector<1x32xf32>
    %cst_62 = arith.constant dense<0.000000e+00> : vector<8xf32>
    %118 = vector.multi_reduction <add>, %113, %cst_62 [1] : vector<8x32xf32> to vector<8xf32>
    %119 = vector.shape_cast %118 : vector<8xf32> to vector<8x1xf32>
    %cst_63 = arith.constant 3.200000e+01 : f32
    %120 = vector.broadcast %cst_63 : f32 to vector<8x1xf32>
    %121 = arith.divf %119, %120 : vector<8x1xf32>
    %122 = vector.broadcast %121 : vector<8x1xf32> to vector<8x32xf32>
    %123 = arith.subf %113, %122 : vector<8x32xf32>
    %124 = arith.mulf %123, %123 : vector<8x32xf32>
    %cst_64 = arith.constant dense<0.000000e+00> : vector<8xf32>
    %125 = vector.multi_reduction <add>, %124, %cst_64 [1] : vector<8x32xf32> to vector<8xf32>
    %126 = vector.shape_cast %125 : vector<8xf32> to vector<8x1xf32>
    %cst_65 = arith.constant 3.200000e+01 : f32
    %127 = vector.broadcast %cst_65 : f32 to vector<8x1xf32>
    %128 = arith.divf %126, %127 : vector<8x1xf32>
    %cst_66 = arith.constant 9.99999974E-6 : f32
    %129 = vector.broadcast %cst_66 : f32 to vector<8x1xf32>
    %130 = arith.addf %128, %129 : vector<8x1xf32>
    %131 = math.rsqrt %130 : vector<8x1xf32>
    %132 = vector.broadcast %131 : vector<8x1xf32> to vector<8x32xf32>
    %133 = arith.mulf %123, %132 : vector<8x32xf32>
    %134 = vector.broadcast %115 : vector<1x32xf32> to vector<8x32xf32>
    %135 = arith.mulf %133, %134 : vector<8x32xf32>
    %136 = vector.broadcast %117 : vector<1x32xf32> to vector<8x32xf32>
    %137 = arith.addf %135, %136 : vector<8x32xf32>
    %c1 = arith.constant 1 : index
    %c0_67 = arith.constant 0 : index
    %c0_68 = arith.constant 0 : index
    %138 = vector.load %arg2[%c1, %c0_67, %c0_68] : memref<2x32x96xf32, #tpu.memory_space<vmem>>, vector<1x32x96xf32>
    %139 = vector.shape_cast %138 : vector<1x32x96xf32> to vector<32x96xf32>
    %cst_69 = arith.constant dense<0.000000e+00> : vector<8x96xf32>
    %140 = tpu.matmul %137, %139, %cst_69 {dimension_numbers = #tpu.dot_dimension_numbers<[1], [0], [0], [1], [0, 0, 1, 1], [], []>} : vector<8x32xf32>, vector<32x96xf32>, vector<8x96xf32> -> vector<8x96xf32>
    %c1_70 = arith.constant 1 : index
    %c0_71 = arith.constant 0 : index
    %c0_72 = arith.constant 0 : index
    %141 = vector.load %arg3[%c1_70, %c0_71, %c0_72] : memref<2x1x96xf32, #tpu.memory_space<vmem>>, vector<1x1x96xf32>
    %142 = vector.shape_cast %141 : vector<1x1x96xf32> to vector<1x96xf32>
    %143 = vector.broadcast %142 : vector<1x96xf32> to vector<8x96xf32>
    %144 = arith.addf %140, %143 : vector<8x96xf32>
    %145 = vector.extract_strided_slice %144 {offsets = [0, 0], sizes = [8, 8], strides = [1, 1]} : vector<8x96xf32> to vector<8x8xf32>
    %146 = vector.extract_strided_slice %144 {offsets = [0, 32], sizes = [8, 8], strides = [1, 1]} : vector<8x96xf32> to vector<8x8xf32>
    %147 = vector.extract_strided_slice %144 {offsets = [0, 64], sizes = [8, 8], strides = [1, 1]} : vector<8x96xf32> to vector<8x8xf32>
    %cst_73 = arith.constant dense<0.000000e+00> : vector<8x8xf32>
    %148 = tpu.matmul %145, %146, %cst_73 {dimension_numbers = #tpu.dot_dimension_numbers<[1], [1], [0], [0], [0, 0, 1, 0], [], []>} : vector<8x8xf32>, vector<8x8xf32>, vector<8x8xf32> -> vector<8x8xf32>
    %cst_74 = arith.constant dense<0xFF800000> : vector<8xf32>
    %149 = vector.multi_reduction <maximumf>, %148, %cst_74 [1] : vector<8x8xf32> to vector<8xf32>
    %150 = vector.shape_cast %149 : vector<8xf32> to vector<8x1xf32>
    %151 = vector.broadcast %150 : vector<8x1xf32> to vector<8x8xf32>
    %152 = arith.subf %148, %151 : vector<8x8xf32>
    %153 = math.exp %152 : vector<8x8xf32>
    %cst_75 = arith.constant dense<0.000000e+00> : vector<8xf32>
    %154 = vector.multi_reduction <add>, %153, %cst_75 [1] : vector<8x8xf32> to vector<8xf32>
    %155 = vector.shape_cast %154 : vector<8xf32> to vector<8x1xf32>
    %156 = vector.broadcast %155 : vector<8x1xf32> to vector<8x8xf32>
    %157 = arith.divf %153, %156 : vector<8x8xf32>
    %cst_76 = arith.constant dense<0.000000e+00> : vector<8x8xf32>
    %158 = tpu.matmul %157, %147, %cst_76 {dimension_numbers = #tpu.dot_dimension_numbers<[1], [0], [0], [1], [0, 0, 1, 1], [], []>} : vector<8x8xf32>, vector<8x8xf32>, vector<8x8xf32> -> vector<8x8xf32>
    %159 = vector.extract_strided_slice %144 {offsets = [0, 8], sizes = [8, 8], strides = [1, 1]} : vector<8x96xf32> to vector<8x8xf32>
    %160 = vector.extract_strided_slice %144 {offsets = [0, 40], sizes = [8, 8], strides = [1, 1]} : vector<8x96xf32> to vector<8x8xf32>
    %161 = vector.extract_strided_slice %144 {offsets = [0, 72], sizes = [8, 8], strides = [1, 1]} : vector<8x96xf32> to vector<8x8xf32>
    %cst_77 = arith.constant dense<0.000000e+00> : vector<8x8xf32>
    %162 = tpu.matmul %159, %160, %cst_77 {dimension_numbers = #tpu.dot_dimension_numbers<[1], [1], [0], [0], [0, 0, 1, 0], [], []>} : vector<8x8xf32>, vector<8x8xf32>, vector<8x8xf32> -> vector<8x8xf32>
    %cst_78 = arith.constant dense<0xFF800000> : vector<8xf32>
    %163 = vector.multi_reduction <maximumf>, %162, %cst_78 [1] : vector<8x8xf32> to vector<8xf32>
    %164 = vector.shape_cast %163 : vector<8xf32> to vector<8x1xf32>
    %165 = vector.broadcast %164 : vector<8x1xf32> to vector<8x8xf32>
    %166 = arith.subf %162, %165 : vector<8x8xf32>
    %167 = math.exp %166 : vector<8x8xf32>
    %cst_79 = arith.constant dense<0.000000e+00> : vector<8xf32>
    %168 = vector.multi_reduction <add>, %167, %cst_79 [1] : vector<8x8xf32> to vector<8xf32>
    %169 = vector.shape_cast %168 : vector<8xf32> to vector<8x1xf32>
    %170 = vector.broadcast %169 : vector<8x1xf32> to vector<8x8xf32>
    %171 = arith.divf %167, %170 : vector<8x8xf32>
    %cst_80 = arith.constant dense<0.000000e+00> : vector<8x8xf32>
    %172 = tpu.matmul %171, %161, %cst_80 {dimension_numbers = #tpu.dot_dimension_numbers<[1], [0], [0], [1], [0, 0, 1, 1], [], []>} : vector<8x8xf32>, vector<8x8xf32>, vector<8x8xf32> -> vector<8x8xf32>
    %173 = vector.extract_strided_slice %144 {offsets = [0, 16], sizes = [8, 8], strides = [1, 1]} : vector<8x96xf32> to vector<8x8xf32>
    %174 = vector.extract_strided_slice %144 {offsets = [0, 48], sizes = [8, 8], strides = [1, 1]} : vector<8x96xf32> to vector<8x8xf32>
    %175 = vector.extract_strided_slice %144 {offsets = [0, 80], sizes = [8, 8], strides = [1, 1]} : vector<8x96xf32> to vector<8x8xf32>
    %cst_81 = arith.constant dense<0.000000e+00> : vector<8x8xf32>
    %176 = tpu.matmul %173, %174, %cst_81 {dimension_numbers = #tpu.dot_dimension_numbers<[1], [1], [0], [0], [0, 0, 1, 0], [], []>} : vector<8x8xf32>, vector<8x8xf32>, vector<8x8xf32> -> vector<8x8xf32>
    %cst_82 = arith.constant dense<0xFF800000> : vector<8xf32>
    %177 = vector.multi_reduction <maximumf>, %176, %cst_82 [1] : vector<8x8xf32> to vector<8xf32>
    %178 = vector.shape_cast %177 : vector<8xf32> to vector<8x1xf32>
    %179 = vector.broadcast %178 : vector<8x1xf32> to vector<8x8xf32>
    %180 = arith.subf %176, %179 : vector<8x8xf32>
    %181 = math.exp %180 : vector<8x8xf32>
    %cst_83 = arith.constant dense<0.000000e+00> : vector<8xf32>
    %182 = vector.multi_reduction <add>, %181, %cst_83 [1] : vector<8x8xf32> to vector<8xf32>
    %183 = vector.shape_cast %182 : vector<8xf32> to vector<8x1xf32>
    %184 = vector.broadcast %183 : vector<8x1xf32> to vector<8x8xf32>
    %185 = arith.divf %181, %184 : vector<8x8xf32>
    %cst_84 = arith.constant dense<0.000000e+00> : vector<8x8xf32>
    %186 = tpu.matmul %185, %175, %cst_84 {dimension_numbers = #tpu.dot_dimension_numbers<[1], [0], [0], [1], [0, 0, 1, 1], [], []>} : vector<8x8xf32>, vector<8x8xf32>, vector<8x8xf32> -> vector<8x8xf32>
    %187 = vector.extract_strided_slice %144 {offsets = [0, 24], sizes = [8, 8], strides = [1, 1]} : vector<8x96xf32> to vector<8x8xf32>
    %188 = vector.extract_strided_slice %144 {offsets = [0, 56], sizes = [8, 8], strides = [1, 1]} : vector<8x96xf32> to vector<8x8xf32>
    %189 = vector.extract_strided_slice %144 {offsets = [0, 88], sizes = [8, 8], strides = [1, 1]} : vector<8x96xf32> to vector<8x8xf32>
    %cst_85 = arith.constant dense<0.000000e+00> : vector<8x8xf32>
    %190 = tpu.matmul %187, %188, %cst_85 {dimension_numbers = #tpu.dot_dimension_numbers<[1], [1], [0], [0], [0, 0, 1, 0], [], []>} : vector<8x8xf32>, vector<8x8xf32>, vector<8x8xf32> -> vector<8x8xf32>
    %cst_86 = arith.constant dense<0xFF800000> : vector<8xf32>
    %191 = vector.multi_reduction <maximumf>, %190, %cst_86 [1] : vector<8x8xf32> to vector<8xf32>
    %192 = vector.shape_cast %191 : vector<8xf32> to vector<8x1xf32>
    %193 = vector.broadcast %192 : vector<8x1xf32> to vector<8x8xf32>
    %194 = arith.subf %190, %193 : vector<8x8xf32>
    %195 = math.exp %194 : vector<8x8xf32>
    %cst_87 = arith.constant dense<0.000000e+00> : vector<8xf32>
    %196 = vector.multi_reduction <add>, %195, %cst_87 [1] : vector<8x8xf32> to vector<8xf32>
    %197 = vector.shape_cast %196 : vector<8xf32> to vector<8x1xf32>
    %198 = vector.broadcast %197 : vector<8x1xf32> to vector<8x8xf32>
    %199 = arith.divf %195, %198 : vector<8x8xf32>
    %cst_88 = arith.constant dense<0.000000e+00> : vector<8x8xf32>
    %200 = tpu.matmul %199, %189, %cst_88 {dimension_numbers = #tpu.dot_dimension_numbers<[1], [0], [0], [1], [0, 0, 1, 1], [], []>} : vector<8x8xf32>, vector<8x8xf32>, vector<8x8xf32> -> vector<8x8xf32>
    %201 = tpu.concatenate %158, %172, %186, %200 in 1 : vector<8x8xf32>, vector<8x8xf32>, vector<8x8xf32>, vector<8x8xf32> -> vector<8x32xf32>
    %c1_89 = arith.constant 1 : index
    %c0_90 = arith.constant 0 : index
    %c0_91 = arith.constant 0 : index
    %202 = vector.load %arg4[%c1_89, %c0_90, %c0_91] : memref<2x32x32xf32, #tpu.memory_space<vmem>>, vector<1x32x32xf32>
    %203 = vector.shape_cast %202 : vector<1x32x32xf32> to vector<32x32xf32>
    %cst_92 = arith.constant dense<0.000000e+00> : vector<8x32xf32>
    %204 = tpu.matmul %201, %203, %cst_92 {dimension_numbers = #tpu.dot_dimension_numbers<[1], [0], [0], [1], [0, 0, 1, 1], [], []>} : vector<8x32xf32>, vector<32x32xf32>, vector<8x32xf32> -> vector<8x32xf32>
    %c1_93 = arith.constant 1 : index
    %c0_94 = arith.constant 0 : index
    %c0_95 = arith.constant 0 : index
    %205 = vector.load %arg5[%c1_93, %c0_94, %c0_95] : memref<2x1x32xf32, #tpu.memory_space<vmem>>, vector<1x1x32xf32>
    %206 = vector.shape_cast %205 : vector<1x1x32xf32> to vector<1x32xf32>
    %207 = vector.broadcast %206 : vector<1x32xf32> to vector<8x32xf32>
    %208 = arith.addf %204, %207 : vector<8x32xf32>
    %209 = arith.addf %137, %208 : vector<8x32xf32>
    %c1_96 = arith.constant 1 : index
    %c0_97 = arith.constant 0 : index
    %c0_98 = arith.constant 0 : index
    %210 = vector.load %arg6[%c1_96, %c0_97, %c0_98] : memref<2x1x32xf32, #tpu.memory_space<vmem>>, vector<1x1x32xf32>
    %211 = vector.shape_cast %210 : vector<1x1x32xf32> to vector<1x32xf32>
    %c1_99 = arith.constant 1 : index
    %c0_100 = arith.constant 0 : index
    %c0_101 = arith.constant 0 : index
    %212 = vector.load %arg7[%c1_99, %c0_100, %c0_101] : memref<2x1x32xf32, #tpu.memory_space<vmem>>, vector<1x1x32xf32>
    %213 = vector.shape_cast %212 : vector<1x1x32xf32> to vector<1x32xf32>
    %cst_102 = arith.constant dense<0.000000e+00> : vector<8xf32>
    %214 = vector.multi_reduction <add>, %209, %cst_102 [1] : vector<8x32xf32> to vector<8xf32>
    %215 = vector.shape_cast %214 : vector<8xf32> to vector<8x1xf32>
    %cst_103 = arith.constant 3.200000e+01 : f32
    %216 = vector.broadcast %cst_103 : f32 to vector<8x1xf32>
    %217 = arith.divf %215, %216 : vector<8x1xf32>
    %218 = vector.broadcast %217 : vector<8x1xf32> to vector<8x32xf32>
    %219 = arith.subf %209, %218 : vector<8x32xf32>
    %220 = arith.mulf %219, %219 : vector<8x32xf32>
    %cst_104 = arith.constant dense<0.000000e+00> : vector<8xf32>
    %221 = vector.multi_reduction <add>, %220, %cst_104 [1] : vector<8x32xf32> to vector<8xf32>
    %222 = vector.shape_cast %221 : vector<8xf32> to vector<8x1xf32>
    %cst_105 = arith.constant 3.200000e+01 : f32
    %223 = vector.broadcast %cst_105 : f32 to vector<8x1xf32>
    %224 = arith.divf %222, %223 : vector<8x1xf32>
    %cst_106 = arith.constant 9.99999974E-6 : f32
    %225 = vector.broadcast %cst_106 : f32 to vector<8x1xf32>
    %226 = arith.addf %224, %225 : vector<8x1xf32>
    %227 = math.rsqrt %226 : vector<8x1xf32>
    %228 = vector.broadcast %227 : vector<8x1xf32> to vector<8x32xf32>
    %229 = arith.mulf %219, %228 : vector<8x32xf32>
    %230 = vector.broadcast %211 : vector<1x32xf32> to vector<8x32xf32>
    %231 = arith.mulf %229, %230 : vector<8x32xf32>
    %232 = vector.broadcast %213 : vector<1x32xf32> to vector<8x32xf32>
    %233 = arith.addf %231, %232 : vector<8x32xf32>
    %c1_107 = arith.constant 1 : index
    %c0_108 = arith.constant 0 : index
    %c0_109 = arith.constant 0 : index
    %234 = vector.load %arg8[%c1_107, %c0_108, %c0_109] : memref<2x32x64xf32, #tpu.memory_space<vmem>>, vector<1x32x64xf32>
    %235 = vector.shape_cast %234 : vector<1x32x64xf32> to vector<32x64xf32>
    %cst_110 = arith.constant dense<0.000000e+00> : vector<8x64xf32>
    %236 = tpu.matmul %233, %235, %cst_110 {dimension_numbers = #tpu.dot_dimension_numbers<[1], [0], [0], [1], [0, 0, 1, 1], [], []>} : vector<8x32xf32>, vector<32x64xf32>, vector<8x64xf32> -> vector<8x64xf32>
    %c1_111 = arith.constant 1 : index
    %c0_112 = arith.constant 0 : index
    %c0_113 = arith.constant 0 : index
    %237 = vector.load %arg9[%c1_111, %c0_112, %c0_113] : memref<2x1x64xf32, #tpu.memory_space<vmem>>, vector<1x1x64xf32>
    %238 = vector.shape_cast %237 : vector<1x1x64xf32> to vector<1x64xf32>
    %239 = vector.broadcast %238 : vector<1x64xf32> to vector<8x64xf32>
    %240 = arith.addf %236, %239 : vector<8x64xf32>
    %cst_114 = arith.constant 0.000000e+00 : f32
    %241 = vector.broadcast %cst_114 : f32 to vector<8x64xf32>
    %242 = arith.maximumf %240, %241 : vector<8x64xf32>
    %c1_115 = arith.constant 1 : index
    %c0_116 = arith.constant 0 : index
    %c0_117 = arith.constant 0 : index
    %243 = vector.load %arg10[%c1_115, %c0_116, %c0_117] : memref<2x64x32xf32, #tpu.memory_space<vmem>>, vector<1x64x32xf32>
    %244 = vector.shape_cast %243 : vector<1x64x32xf32> to vector<64x32xf32>
    %cst_118 = arith.constant dense<0.000000e+00> : vector<8x32xf32>
    %245 = tpu.matmul %242, %244, %cst_118 {dimension_numbers = #tpu.dot_dimension_numbers<[1], [0], [0], [1], [0, 0, 1, 1], [], []>} : vector<8x64xf32>, vector<64x32xf32>, vector<8x32xf32> -> vector<8x32xf32>
    %c1_119 = arith.constant 1 : index
    %c0_120 = arith.constant 0 : index
    %c0_121 = arith.constant 0 : index
    %246 = vector.load %arg11[%c1_119, %c0_120, %c0_121] : memref<2x1x32xf32, #tpu.memory_space<vmem>>, vector<1x1x32xf32>
    %247 = vector.shape_cast %246 : vector<1x1x32xf32> to vector<1x32xf32>
    %248 = vector.broadcast %247 : vector<1x32xf32> to vector<8x32xf32>
    %249 = arith.addf %245, %248 : vector<8x32xf32>
    %250 = arith.addf %233, %249 : vector<8x32xf32>
    %c1_122 = arith.constant 1 : index
    %c0_123 = arith.constant 0 : index
    %c0_124 = arith.constant 0 : index
    %251 = vector.load %arg12[%c1_122, %c0_123, %c0_124] : memref<2x1x32xf32, #tpu.memory_space<vmem>>, vector<1x1x32xf32>
    %252 = vector.shape_cast %251 : vector<1x1x32xf32> to vector<1x32xf32>
    %c1_125 = arith.constant 1 : index
    %c0_126 = arith.constant 0 : index
    %c0_127 = arith.constant 0 : index
    %253 = vector.load %arg13[%c1_125, %c0_126, %c0_127] : memref<2x1x32xf32, #tpu.memory_space<vmem>>, vector<1x1x32xf32>
    %254 = vector.shape_cast %253 : vector<1x1x32xf32> to vector<1x32xf32>
    %cst_128 = arith.constant dense<0.000000e+00> : vector<8xf32>
    %255 = vector.multi_reduction <add>, %250, %cst_128 [1] : vector<8x32xf32> to vector<8xf32>
    %256 = vector.shape_cast %255 : vector<8xf32> to vector<8x1xf32>
    %cst_129 = arith.constant 3.200000e+01 : f32
    %257 = vector.broadcast %cst_129 : f32 to vector<8x1xf32>
    %258 = arith.divf %256, %257 : vector<8x1xf32>
    %259 = vector.broadcast %258 : vector<8x1xf32> to vector<8x32xf32>
    %260 = arith.subf %250, %259 : vector<8x32xf32>
    %261 = arith.mulf %260, %260 : vector<8x32xf32>
    %cst_130 = arith.constant dense<0.000000e+00> : vector<8xf32>
    %262 = vector.multi_reduction <add>, %261, %cst_130 [1] : vector<8x32xf32> to vector<8xf32>
    %263 = vector.shape_cast %262 : vector<8xf32> to vector<8x1xf32>
    %cst_131 = arith.constant 3.200000e+01 : f32
    %264 = vector.broadcast %cst_131 : f32 to vector<8x1xf32>
    %265 = arith.divf %263, %264 : vector<8x1xf32>
    %cst_132 = arith.constant 9.99999974E-6 : f32
    %266 = vector.broadcast %cst_132 : f32 to vector<8x1xf32>
    %267 = arith.addf %265, %266 : vector<8x1xf32>
    %268 = math.rsqrt %267 : vector<8x1xf32>
    %269 = vector.broadcast %268 : vector<8x1xf32> to vector<8x32xf32>
    %270 = arith.mulf %260, %269 : vector<8x32xf32>
    %271 = vector.broadcast %252 : vector<1x32xf32> to vector<8x32xf32>
    %272 = arith.mulf %270, %271 : vector<8x32xf32>
    %273 = vector.broadcast %254 : vector<1x32xf32> to vector<8x32xf32>
    %274 = arith.addf %272, %273 : vector<8x32xf32>
    %c0_133 = arith.constant 0 : index
    %c0_134 = arith.constant 0 : index
    %275 = vector.load %arg14[%c0_133, %c0_134] : memref<1x32xf32, #tpu.memory_space<vmem>>, vector<1x32xf32>
    %276 = vector.broadcast %275 : vector<1x32xf32> to vector<8x32xf32>
    %277 = arith.mulf %274, %276 : vector<8x32xf32>
    %cst_135 = arith.constant dense<0.000000e+00> : vector<8xf32>
    %278 = vector.multi_reduction <add>, %277, %cst_135 [1] : vector<8x32xf32> to vector<8xf32>
    %279 = vector.shape_cast %278 : vector<8xf32> to vector<8x1xf32>
    %c0_136 = arith.constant 0 : index
    %c0_137 = arith.constant 0 : index
    %280 = vector.load %arg15[%c0_136, %c0_137] : memref<1x1xf32, #tpu.memory_space<vmem>>, vector<1x1xf32>
    %281 = vector.broadcast %280 : vector<1x1xf32> to vector<8x1xf32>
    %282 = arith.addf %279, %281 : vector<8x1xf32>
    %c0_138 = arith.constant 0 : index
    %c0_139 = arith.constant 0 : index
    %283 = vector.load %arg16[%c0_138, %c0_139] : memref<8x1xf32, #tpu.memory_space<vmem>>, vector<8x1xf32>
    tpu.vector_store %arg16[%c0_138, %c0_139], %282 {strides = array<i32>} : memref<8x1xf32, #tpu.memory_space<vmem>>, vector<8x1xf32>,
    return
  }
  func.func @transform_0(%arg0: i32) -> (i32, i32) {
    %c0_i32 = arith.constant 0 : i32
    %c0_i32_0 = arith.constant 0 : i32
    return %arg0, %c0_i32 : i32, i32
  }
  func.func @transform_1(%arg0: i32) -> (i32, i32, i32) {
    %c0_i32 = arith.constant 0 : i32
    %c0_i32_0 = arith.constant 0 : i32
    %c0_i32_1 = arith.constant 0 : i32
    %c0_i32_2 = arith.constant 0 : i32
    return %c0_i32, %c0_i32_0, %c0_i32_1 : i32, i32, i32
  }
  func.func @transform_2(%arg0: i32) -> (i32, i32, i32) {
    %c0_i32 = arith.constant 0 : i32
    %c0_i32_0 = arith.constant 0 : i32
    %c0_i32_1 = arith.constant 0 : i32
    %c0_i32_2 = arith.constant 0 : i32
    return %c0_i32, %c0_i32_0, %c0_i32_1 : i32, i32, i32
  }
  func.func @transform_3(%arg0: i32) -> (i32, i32, i32) {
    %c0_i32 = arith.constant 0 : i32
    %c0_i32_0 = arith.constant 0 : i32
    %c0_i32_1 = arith.constant 0 : i32
    %c0_i32_2 = arith.constant 0 : i32
    return %c0_i32, %c0_i32_0, %c0_i32_1 : i32, i32, i32
  }
  func.func @transform_4(%arg0: i32) -> (i32, i32, i32) {
    %c0_i32 = arith.constant 0 : i32
    %c0_i32_0 = arith.constant 0 : i32
    %c0_i32_1 = arith.constant 0 : i32
    %c0_i32_2 = arith.constant 0 : i32
    return %c0_i32, %c0_i32_0, %c0_i32_1 : i32, i32, i32
  }
  func.func @transform_5(%arg0: i32) -> (i32, i32, i32) {
    %c0_i32 = arith.constant 0 : i32
    %c0_i32_0 = arith.constant 0 : i32
    %c0_i32_1 = arith.constant 0 : i32
    %c0_i32_2 = arith.constant 0 : i32
    return %c0_i32, %c0_i32_0, %c0_i32_1 : i32, i32, i32
  }
  func.func @transform_6(%arg0: i32) -> (i32, i32, i32) {
    %c0_i32 = arith.constant 0 : i32
    %c0_i32_0 = arith.constant 0 : i32
    %c0_i32_1 = arith.constant 0 : i32
    %c0_i32_2 = arith.constant 0 : i32
    return %c0_i32, %c0_i32_0, %c0_i32_1 : i32, i32, i32
  }
  func.func @transform_7(%arg0: i32) -> (i32, i32, i32) {
    %c0_i32 = arith.constant 0 : i32
    %c0_i32_0 = arith.constant 0 : i32
    %c0_i32_1 = arith.constant 0 : i32
    %c0_i32_2 = arith.constant 0 : i32
    return %c0_i32, %c0_i32_0, %c0_i32_1 : i32, i32, i32
  }
  func.func @transform_8(%arg0: i32) -> (i32, i32, i32) {
    %c0_i32 = arith.constant 0 : i32
    %c0_i32_0 = arith.constant 0 : i32
    %c0_i32_1 = arith.constant 0 : i32
    %c0_i32_2 = arith.constant 0 : i32
    return %c0_i32, %c0_i32_0, %c0_i32_1 : i32, i32, i32
  }
  func.func @transform_9(%arg0: i32) -> (i32, i32, i32) {
    %c0_i32 = arith.constant 0 : i32
    %c0_i32_0 = arith.constant 0 : i32
    %c0_i32_1 = arith.constant 0 : i32
    %c0_i32_2 = arith.constant 0 : i32
    return %c0_i32, %c0_i32_0, %c0_i32_1 : i32, i32, i32
  }
  func.func @transform_10(%arg0: i32) -> (i32, i32, i32) {
    %c0_i32 = arith.constant 0 : i32
    %c0_i32_0 = arith.constant 0 : i32
    %c0_i32_1 = arith.constant 0 : i32
    %c0_i32_2 = arith.constant 0 : i32
    return %c0_i32, %c0_i32_0, %c0_i32_1 : i32, i32, i32
  }
  func.func @transform_11(%arg0: i32) -> (i32, i32, i32) {
    %c0_i32 = arith.constant 0 : i32
    %c0_i32_0 = arith.constant 0 : i32
    %c0_i32_1 = arith.constant 0 : i32
    %c0_i32_2 = arith.constant 0 : i32
    return %c0_i32, %c0_i32_0, %c0_i32_1 : i32, i32, i32
  }
  func.func @transform_12(%arg0: i32) -> (i32, i32, i32) {
    %c0_i32 = arith.constant 0 : i32
    %c0_i32_0 = arith.constant 0 : i32
    %c0_i32_1 = arith.constant 0 : i32
    %c0_i32_2 = arith.constant 0 : i32
    return %c0_i32, %c0_i32_0, %c0_i32_1 : i32, i32, i32
  }
  func.func @transform_13(%arg0: i32) -> (i32, i32) {
    %c0_i32 = arith.constant 0 : i32
    %c0_i32_0 = arith.constant 0 : i32
    %c0_i32_1 = arith.constant 0 : i32
    return %c0_i32, %c0_i32_0 : i32, i32
  }
  func.func @transform_14(%arg0: i32) -> (i32, i32) {
    %c0_i32 = arith.constant 0 : i32
    %c0_i32_0 = arith.constant 0 : i32
    %c0_i32_1 = arith.constant 0 : i32
    return %c0_i32, %c0_i32_0 : i32, i32
  }
  func.func @transform_15(%arg0: i32) -> (i32, i32) {
    %c0_i32 = arith.constant 0 : i32
    %c0_i32_0 = arith.constant 0 : i32
    return %arg0, %c0_i32 : i32, i32
  }
}

</mosaic_0001>

<llo_original>
// kernel: time_series_transformer_forward.1
$region0: #{time_series_transformer_forward.1}
  #allocation0 [shape = 'u32[]', space=smem, size = 0x4, offset = 0x4, fixed_abs, tag = 'smem constant byte address 0x4 - core index']
  #allocation1 [shape = 'u32[144,128]{1,0:T(1,128)}', space=vmem, size = 0x12000, scoped, tag = 'internal scratch']
  #allocation2 [shape = 'f32[1,1]{1,0:T(1,128)S(1)}', space=vmem, size = 0x200, scoped, tag = 'scoped memory for time_series_transformer_forward.1']
  %s0 = inlined_call_operand.vmem [shape: f32[16,32], index: 0, kind: input, shape index: {}]
  %s1 = inlined_call_operand.vmem [shape: f32[2,32,96], index: 1, kind: input, shape index: {}]
  %s2 = inlined_call_operand.vmem [shape: f32[2,1,96], index: 2, kind: input, shape index: {}]
  %s3 = inlined_call_operand.vmem [shape: f32[2,32,32], index: 3, kind: input, shape index: {}]
  %s4 = inlined_call_operand.vmem [shape: f32[2,1,32], index: 4, kind: input, shape index: {}]
  %s5 = inlined_call_operand.vmem [shape: f32[2,1,32], index: 5, kind: input, shape index: {}]
  %s6 = inlined_call_operand.vmem [shape: f32[2,1,32], index: 6, kind: input, shape index: {}]
  %s7 = inlined_call_operand.vmem [shape: f32[2,32,64], index: 7, kind: input, shape index: {}]
  %s8 = inlined_call_operand.vmem [shape: f32[2,1,64], index: 8, kind: input, shape index: {}]
  %s9 = inlined_call_operand.vmem [shape: f32[2,64,32], index: 9, kind: input, shape index: {}]
  %s10 = inlined_call_operand.vmem [shape: f32[2,1,32], index: 10, kind: input, shape index: {}]
  %s11 = inlined_call_operand.vmem [shape: f32[2,1,32], index: 11, kind: input, shape index: {}]
  %s12 = inlined_call_operand.vmem [shape: f32[2,1,32], index: 12, kind: input, shape index: {}]
  %s13 = inlined_call_operand.vmem [shape: f32[1,32], index: 13, kind: input, shape index: {}]
  %s14 = inlined_call_operand.<no memory space> [shape: f32[1,1], index: 14, kind: input, shape index: {}]
  %s15 = inlined_call_operand.vmem [shape: f32[16,1], index: 15, kind: output, shape index: {}]
  %s16 = sld [smem:[#allocation0]]
  $region93: #{time_series_transformer_forward.1} parent=0
    _
  %s18 = ssub.s32 1, %s16
  %s19 = scalar_select 0, %s18, %s16
  %v20 = vstv %s14
  %21 = vst [vmem:[#allocation2] sm:$0x1] %v20
  loop: start=0, step=1, limit=4
  $region2: #{time_series_transformer_forward.1} parent=0 // loop_pre_header
    _
  $region3: #{time_series_transformer_forward.1} parent=0 // loop_header
    %s23 = sphi 0, %s27
    %p24 = scmp.ge.s32.totalorder %s23, 4
    %s33 = sphi 0, %s35
    %s36 = sphi 0, %s33
    %s37 = sphi 0, %s36
    %s53 = sphi 0, %s37
    %s57 = sphi 0, %s57
    %s59 = sphi 0, %s57
    %s60 = sphi 0, %s59
    %s74 = sphi 0, %s60
    %s78 = sphi 0, %s78
    %s80 = sphi 0, %s78
    %s81 = sphi 0, %s80
    %s95 = sphi 0, %s81
    %s99 = sphi 0, %s99
    %s101 = sphi 0, %s99
    %s102 = sphi 0, %s101
    %s116 = sphi 0, %s102
    %s120 = sphi 0, %s120
    %s122 = sphi 0, %s120
    %s123 = sphi 0, %s122
    %s137 = sphi 0, %s123
    %s141 = sphi 0, %s141
    %s143 = sphi 0, %s141
    %s144 = sphi 0, %s143
    %s158 = sphi 0, %s144
    %s162 = sphi 0, %s162
    %s164 = sphi 0, %s162
    %s165 = sphi 0, %s164
    %s179 = sphi 0, %s165
    %s183 = sphi 0, %s183
    %s185 = sphi 0, %s183
    %s186 = sphi 0, %s185
    %s200 = sphi 0, %s186
    %s204 = sphi 0, %s204
    %s206 = sphi 0, %s204
    %s207 = sphi 0, %s206
    %s221 = sphi 0, %s207
    %s225 = sphi 0, %s225
    %s227 = sphi 0, %s225
    %s228 = sphi 0, %s227
    %s242 = sphi 0, %s228
    %s246 = sphi 0, %s246
    %s248 = sphi 0, %s246
    %s249 = sphi 0, %s248
    %s263 = sphi 0, %s249
    %s267 = sphi 0, %s267
    %s269 = sphi 0, %s267
    %s270 = sphi 0, %s269
    %s284 = sphi 0, %s270
    %s288 = sphi 0, %s288
    %s290 = sphi 0, %s288
    %s291 = sphi 0, %s290
    %s305 = sphi 0, %s291
    %s309 = sphi 0, %s309
    %s311 = sphi 0, %s309
    %s312 = sphi 0, %s311
    %s326 = sphi 0, %s312
    %s330 = sphi 0, %s330
    %s332 = sphi 0, %s330
    %s333 = sphi 0, %s332
    %s347 = sphi 0, %s333
    %s353 = sphi 0, %s355
    %s356 = sphi 0, %s353
    %s357 = sphi 0, %s356
    %s373 = sphi 0, %s357
  $region4: #{time_series_transformer_forward.1} parent=0 // loop_header_branch
    %26 = sbr.rel (%p24) target = $region8
  $region5: #{time_series_transformer_forward.1} parent=0 // loop_body
    %s28 = ssub.s32 %s23, 1
    %s29 = ssub.s32 %s23, 2
    %s30 = sadd.s32 %s23, 1
    %s31 = ssub.s32 %s23, %s30
    %p32 = scmp.eq.s32.totalorder %s31, 0
    %s34 = sadd.s32 %s33, 1
    %s35 = scalar_select %p32, %s33, %s34
    %p38 = pneg %p32
    %p39 = scmp.eq.s32.totalorder %s23, 1
    %p40 = por %p38, %p39
    %p41 = scmp.ne.s32.totalorder %s33, %s36
    %p42 = scmp.eq.s32.totalorder %s23, 0
    %p43 = por %p41, %p42
    %p44 = scmp.ne.s32.totalorder %s33, %s36
    %p45 = scmp.eq.s32.totalorder %s28, 1
    %p46 = por %p44, %p45
    %p47 = scmp.ne.s32.totalorder %s36, %s37
    %p48 = scmp.eq.s32.totalorder %s28, 0
    %p49 = por %p47, %p48
    %p50 = scmp.ne.s32.totalorder %s36, %s37
    %p51 = scmp.eq.s32.totalorder %s29, 1
    %p52 = por %p50, %p51
    %p54 = scmp.ne.s32.totalorder %s37, %s53
    %p55 = scmp.eq.s32.totalorder %s29, 0
    %p56 = por %p54, %p55
    %s58 = sadd.s32 %s57, 1
    %p61 = scmp.eq.s32.totalorder %s23, 1
    %p62 = scmp.ne.s32.totalorder %s57, %s59
    %p63 = scmp.eq.s32.totalorder %s23, 0
    %p64 = por %p62, %p63
    %p65 = scmp.ne.s32.totalorder %s57, %s59
    %p66 = scmp.eq.s32.totalorder %s28, 1
    %p67 = por %p65, %p66
    %p68 = scmp.ne.s32.totalorder %s59, %s60
    %p69 = scmp.eq.s32.totalorder %s28, 0
    %p70 = por %p68, %p69
    %p71 = scmp.ne.s32.totalorder %s59, %s60
    %p72 = scmp.eq.s32.totalorder %s29, 1
    %p73 = por %p71, %p72
    %p75 = scmp.ne.s32.totalorder %s60, %s74
    %p76 = scmp.eq.s32.totalorder %s29, 0
    %p77 = por %p75, %p76
    %s79 = sadd.s32 %s78, 1
    %p82 = scmp.eq.s32.totalorder %s23, 1
    %p83 = scmp.ne.s32.totalorder %s78, %s80
    %p84 = scmp.eq.s32.totalorder %s23, 0
    %p85 = por %p83, %p84
    %p86 = scmp.ne.s32.totalorder %s78, %s80
    %p87 = scmp.eq.s32.totalorder %s28, 1
    %p88 = por %p86, %p87
    %p89 = scmp.ne.s32.totalorder %s80, %s81
    %p90 = scmp.eq.s32.totalorder %s28, 0
    %p91 = por %p89, %p90
    %p92 = scmp.ne.s32.totalorder %s80, %s81
    %p93 = scmp.eq.s32.totalorder %s29, 1
    %p94 = por %p92, %p93
    %p96 = scmp.ne.s32.totalorder %s81, %s95
    %p97 = scmp.eq.s32.totalorder %s29, 0
    %p98 = por %p96, %p97
    %s100 = sadd.s32 %s99, 1
    %p103 = scmp.eq.s32.totalorder %s23, 1
    %p104 = scmp.ne.s32.totalorder %s99, %s101
    %p105 = scmp.eq.s32.totalorder %s23, 0
    %p106 = por %p104, %p105
    %p107 = scmp.ne.s32.totalorder %s99, %s101
    %p108 = scmp.eq.s32.totalorder %s28, 1
    %p109 = por %p107, %p108
    %p110 = scmp.ne.s32.totalorder %s101, %s102
    %p111 = scmp.eq.s32.totalorder %s28, 0
    %p112 = por %p110, %p111
    %p113 = scmp.ne.s32.totalorder %s101, %s102
    %p114 = scmp.eq.s32.totalorder %s29, 1
    %p115 = por %p113, %p114
    %p117 = scmp.ne.s32.totalorder %s102, %s116
    %p118 = scmp.eq.s32.totalorder %s29, 0
    %p119 = por %p117, %p118
    %s121 = sadd.s32 %s120, 1
    %p124 = scmp.eq.s32.totalorder %s23, 1
    %p125 = scmp.ne.s32.totalorder %s120, %s122
    %p126 = scmp.eq.s32.totalorder %s23, 0
    %p127 = por %p125, %p126
    %p128 = scmp.ne.s32.totalorder %s120, %s122
    %p129 = scmp.eq.s32.totalorder %s28, 1
    %p130 = por %p128, %p129
    %p131 = scmp.ne.s32.totalorder %s122, %s123
    %p132 = scmp.eq.s32.totalorder %s28, 0
    %p133 = por %p131, %p132
    %p134 = scmp.ne.s32.totalorder %s122, %s123
    %p135 = scmp.eq.s32.totalorder %s29, 1
    %p136 = por %p134, %p135
    %p138 = scmp.ne.s32.totalorder %s123, %s137
    %p139 = scmp.eq.s32.totalorder %s29, 0
    %p140 = por %p138, %p139
    %s142 = sadd.s32 %s141, 1
    %p145 = scmp.eq.s32.totalorder %s23, 1
    %p146 = scmp.ne.s32.totalorder %s141, %s143
    %p147 = scmp.eq.s32.totalorder %s23, 0
    %p148 = por %p146, %p147
    %p149 = scmp.ne.s32.totalorder %s141, %s143
    %p150 = scmp.eq.s32.totalorder %s28, 1
    %p151 = por %p149, %p150
    %p152 = scmp.ne.s32.totalorder %s143, %s144
    %p153 = scmp.eq.s32.totalorder %s28, 0
    %p154 = por %p152, %p153
    %p155 = scmp.ne.s32.totalorder %s143, %s144
    %p156 = scmp.eq.s32.totalorder %s29, 1
    %p157 = por %p155, %p156
    %p159 = scmp.ne.s32.totalorder %s144, %s158
    %p160 = scmp.eq.s32.totalorder %s29, 0
    %p161 = por %p159, %p160
    %s163 = sadd.s32 %s162, 1
    %p166 = scmp.eq.s32.totalorder %s23, 1
    %p167 = scmp.ne.s32.totalorder %s162, %s164
    %p168 = scmp.eq.s32.totalorder %s23, 0
    %p169 = por %p167, %p168
    %p170 = scmp.ne.s32.totalorder %s162, %s164
    %p171 = scmp.eq.s32.totalorder %s28, 1
    %p172 = por %p170, %p171
    %p173 = scmp.ne.s32.totalorder %s164, %s165
    %p174 = scmp.eq.s32.totalorder %s28, 0
    %p175 = por %p173, %p174
    %p176 = scmp.ne.s32.totalorder %s164, %s165
    %p177 = scmp.eq.s32.totalorder %s29, 1
    %p178 = por %p176, %p177
    %p180 = scmp.ne.s32.totalorder %s165, %s179
    %p181 = scmp.eq.s32.totalorder %s29, 0
    %p182 = por %p180, %p181
    %s184 = sadd.s32 %s183, 1
    %p187 = scmp.eq.s32.totalorder %s23, 1
    %p188 = scmp.ne.s32.totalorder %s183, %s185
    %p189 = scmp.eq.s32.totalorder %s23, 0
    %p190 = por %p188, %p189
    %p191 = scmp.ne.s32.totalorder %s183, %s185
    %p192 = scmp.eq.s32.totalorder %s28, 1
    %p193 = por %p191, %p192
    %p194 = scmp.ne.s32.totalorder %s185, %s186
    %p195 = scmp.eq.s32.totalorder %s28, 0
    %p196 = por %p194, %p195
    %p197 = scmp.ne.s32.totalorder %s185, %s186
    %p198 = scmp.eq.s32.totalorder %s29, 1
    %p199 = por %p197, %p198
    %p201 = scmp.ne.s32.totalorder %s186, %s200
    %p202 = scmp.eq.s32.totalorder %s29, 0
    %p203 = por %p201, %p202
    %s205 = sadd.s32 %s204, 1
    %p208 = scmp.eq.s32.totalorder %s23, 1
    %p209 = scmp.ne.s32.totalorder %s204, %s206
    %p210 = scmp.eq.s32.totalorder %s23, 0
    %p211 = por %p209, %p210
    %p212 = scmp.ne.s32.totalorder %s204, %s206
    %p213 = scmp.eq.s32.totalorder %s28, 1
    %p214 = por %p212, %p213
    %p215 = scmp.ne.s32.totalorder %s206, %s207
    %p216 = scmp.eq.s32.totalorder %s28, 0
    %p217 = por %p215, %p216
    %p218 = scmp.ne.s32.totalorder %s206, %s207
    %p219 = scmp.eq.s32.totalorder %s29, 1
    %p220 = por %p218, %p219
    %p222 = scmp.ne.s32.totalorder %s207, %s221
    %p223 = scmp.eq.s32.totalorder %s29, 0
    %p224 = por %p222, %p223
    %s226 = sadd.s32 %s225, 1
    %p229 = scmp.eq.s32.totalorder %s23, 1
    %p230 = scmp.ne.s32.totalorder %s225, %s227
    %p231 = scmp.eq.s32.totalorder %s23, 0
    %p232 = por %p230, %p231
    %p233 = scmp.ne.s32.totalorder %s225, %s227
    %p234 = scmp.eq.s32.totalorder %s28, 1
    %p235 = por %p233, %p234
    %p236 = scmp.ne.s32.totalorder %s227, %s228
    %p237 = scmp.eq.s32.totalorder %s28, 0
    %p238 = por %p236, %p237
    %p239 = scmp.ne.s32.totalorder %s227, %s228
    %p240 = scmp.eq.s32.totalorder %s29, 1
    %p241 = por %p239, %p240
    %p243 = scmp.ne.s32.totalorder %s228, %s242
    %p244 = scmp.eq.s32.totalorder %s29, 0
    %p245 = por %p243, %p244
    %s247 = sadd.s32 %s246, 1
    %p250 = scmp.eq.s32.totalorder %s23, 1
    %p251 = scmp.ne.s32.totalorder %s246, %s248
    %p252 = scmp.eq.s32.totalorder %s23, 0
    %p253 = por %p251, %p252
    %p254 = scmp.ne.s32.totalorder %s246, %s248
    %p255 = scmp.eq.s32.totalorder %s28, 1
    %p256 = por %p254, %p255
    %p257 = scmp.ne.s32.totalorder %s248, %s249
    %p258 = scmp.eq.s32.totalorder %s28, 0
    %p259 = por %p257, %p258
    %p260 = scmp.ne.s32.totalorder %s248, %s249
    %p261 = scmp.eq.s32.totalorder %s29, 1
    %p262 = por %p260, %p261
    %p264 = scmp.ne.s32.totalorder %s249, %s263
    %p265 = scmp.eq.s32.totalorder %s29, 0
    %p266 = por %p264, %p265
    %s268 = sadd.s32 %s267, 1
    %p271 = scmp.eq.s32.totalorder %s23, 1
    %p272 = scmp.ne.s32.totalorder %s267, %s269
    %p273 = scmp.eq.s32.totalorder %s23, 0
    %p274 = por %p272, %p273
    %p275 = scmp.ne.s32.totalorder %s267, %s269
    %p276 = scmp.eq.s32.totalorder %s28, 1
    %p277 = por %p275, %p276
    %p278 = scmp.ne.s32.totalorder %s269, %s270
    %p279 = scmp.eq.s32.totalorder %s28, 0
    %p280 = por %p278, %p279
    %p281 = scmp.ne.s32.totalorder %s269, %s270
    %p282 = scmp.eq.s32.totalorder %s29, 1
    %p283 = por %p281, %p282
    %p285 = scmp.ne.s32.totalorder %s270, %s284
    %p286 = scmp.eq.s32.totalorder %s29, 0
    %p287 = por %p285, %p286
    %s289 = sadd.s32 %s288, 1
    %p292 = scmp.eq.s32.totalorder %s23, 1
    %p293 = scmp.ne.s32.totalorder %s288, %s290
    %p294 = scmp.eq.s32.totalorder %s23, 0
    %p295 = por %p293, %p294
    %p296 = scmp.ne.s32.totalorder %s288, %s290
    %p297 = scmp.eq.s32.totalorder %s28, 1
    %p298 = por %p296, %p297
    %p299 = scmp.ne.s32.totalorder %s290, %s291
    %p300 = scmp.eq.s32.totalorder %s28, 0
    %p301 = por %p299, %p300
    %p302 = scmp.ne.s32.totalorder %s290, %s291
    %p303 = scmp.eq.s32.totalorder %s29, 1
    %p304 = por %p302, %p303
    %p306 = scmp.ne.s32.totalorder %s291, %s305
    %p307 = scmp.eq.s32.totalorder %s29, 0
    %p308 = por %p306, %p307
    %s310 = sadd.s32 %s309, 1
    %p313 = scmp.eq.s32.totalorder %s23, 1
    %p314 = scmp.ne.s32.totalorder %s309, %s311
    %p315 = scmp.eq.s32.totalorder %s23, 0
    %p316 = por %p314, %p315
    %p317 = scmp.ne.s32.totalorder %s309, %s311
    %p318 = scmp.eq.s32.totalorder %s28, 1
    %p319 = por %p317, %p318
    %p320 = scmp.ne.s32.totalorder %s311, %s312
    %p321 = scmp.eq.s32.totalorder %s28, 0
    %p322 = por %p320, %p321
    %p323 = scmp.ne.s32.totalorder %s311, %s312
    %p324 = scmp.eq.s32.totalorder %s29, 1
    %p325 = por %p323, %p324
    %p327 = scmp.ne.s32.totalorder %s312, %s326
    %p328 = scmp.eq.s32.totalorder %s29, 0
    %p329 = por %p327, %p328
    %s331 = sadd.s32 %s330, 1
    %p334 = scmp.eq.s32.totalorder %s23, 1
    %p335 = scmp.ne.s32.totalorder %s330, %s332
    %p336 = scmp.eq.s32.totalorder %s23, 0
    %p337 = por %p335, %p336
    %p338 = scmp.ne.s32.totalorder %s330, %s332
    %p339 = scmp.eq.s32.totalorder %s28, 1
    %p340 = por %p338, %p339
    %p341 = scmp.ne.s32.totalorder %s332, %s333
    %p342 = scmp.eq.s32.totalorder %s28, 0
    %p343 = por %p341, %p342
    %p344 = scmp.ne.s32.totalorder %s332, %s333
    %p345 = scmp.eq.s32.totalorder %s29, 1
    %p346 = por %p344, %p345
    %p348 = scmp.ne.s32.totalorder %s333, %s347
    %p349 = scmp.eq.s32.totalorder %s29, 0
    %p350 = por %p348, %p349
    %s351 = ssub.s32 %s23, %s30
    %p352 = scmp.eq.s32.totalorder %s351, 0
    %s354 = sadd.s32 %s353, 1
    %s355 = scalar_select %p352, %s353, %s354
    %p358 = pneg %p352
    %p359 = scmp.eq.s32.totalorder %s23, 1
    %p360 = por %p358, %p359
    %p361 = scmp.ne.s32.totalorder %s353, %s356
    %p362 = scmp.eq.s32.totalorder %s23, 0
    %p363 = por %p361, %p362
    %p364 = scmp.ne.s32.totalorder %s353, %s356
    %p365 = scmp.eq.s32.totalorder %s28, 1
    %p366 = por %p364, %p365
    %p367 = scmp.ne.s32.totalorder %s356, %s357
    %p368 = scmp.eq.s32.totalorder %s28, 0
    %p369 = por %p367, %p368
    %p370 = scmp.ne.s32.totalorder %s356, %s357
    %p371 = scmp.eq.s32.totalorder %s29, 1
    %p372 = por %p370, %p371
    %p374 = scmp.ne.s32.totalorder %s357, %s373
    %p375 = scmp.eq.s32.totalorder %s29, 0
    %p376 = por %p374, %p375
    %p377 = scmp.le.s32.totalorder 1, %s23
    %p378 = scmp.lt.s32.totalorder %s23, 3
    %p379 = pnand %p377, %p378
    %p380 = pneg %p379
    // Predicated region
    $region9: #{time_series_transformer_forward.1} parent=5 // pred_check
      _
    $region10: #{time_series_transformer_forward.1} parent=5 // pred_check_branch
      %382 = sbr.rel (%p379) target = $region12
    $region11: #{time_series_transformer_forward.1} parent=5 // pred_region
      %s383 = ssub.s32 %s23, 1
      // Predicated region
      $region13: #{time_series_transformer_forward.1} parent=11 // pred_check
        %p384 = pneg %p70
      $region14: #{time_series_transformer_forward.1} parent=11 // pred_check_branch
        %386 = sbr.rel (%p384) target = $region16
      $region15: #{time_series_transformer_forward.1} parent=11 // pred_region
        _
      $region16: #{time_series_transformer_forward.1} parent=11 // pred_fallthru
        _
      // Predicated region
      $region17: #{time_series_transformer_forward.1} parent=11 // pred_check
        %p387 = pneg %p91
      $region18: #{time_series_transformer_forward.1} parent=11 // pred_check_branch
        %389 = sbr.rel (%p387) target = $region20
      $region19: #{time_series_transformer_forward.1} parent=11 // pred_region
        _
      $region20: #{time_series_transformer_forward.1} parent=11 // pred_fallthru
        _
      // Predicated region
      $region21: #{time_series_transformer_forward.1} parent=11 // pred_check
        %p390 = pneg %p112
      $region22: #{time_series_transformer_forward.1} parent=11 // pred_check_branch
        %392 = sbr.rel (%p390) target = $region24
      $region23: #{time_series_transformer_forward.1} parent=11 // pred_region
        _
      $region24: #{time_series_transformer_forward.1} parent=11 // pred_fallthru
        _
      // Predicated region
      $region25: #{time_series_transformer_forward.1} parent=11 // pred_check
        %p393 = pneg %p133
      $region26: #{time_series_transformer_forward.1} parent=11 // pred_check_branch
        %395 = sbr.rel (%p393) target = $region28
      $region27: #{time_series_transformer_forward.1} parent=11 // pred_region
        _
      $region28: #{time_series_transformer_forward.1} parent=11 // pred_fallthru
        _
      // Predicated region
      $region29: #{time_series_transformer_forward.1} parent=11 // pred_check
        %p396 = pneg %p154
      $region30: #{time_series_transformer_forward.1} parent=11 // pred_check_branch
        %398 = sbr.rel (%p396) target = $region32
      $region31: #{time_series_transformer_forward.1} parent=11 // pred_region
        _
      $region32: #{time_series_transformer_forward.1} parent=11 // pred_fallthru
        _
      // Predicated region
      $region33: #{time_series_transformer_forward.1} parent=11 // pred_check
        %p399 = pneg %p175
      $region34: #{time_series_transformer_forward.1} parent=11 // pred_check_branch
        %401 = sbr.rel (%p399) target = $region36
      $region35: #{time_series_transformer_forward.1} parent=11 // pred_region
        _
      $region36: #{time_series_transformer_forward.1} parent=11 // pred_fallthru
        _
      // Predicated region
      $region37: #{time_series_transformer_forward.1} parent=11 // pred_check
        %p402 = pneg %p196
      $region38: #{time_series_transformer_forward.1} parent=11 // pred_check_branch
        %404 = sbr.rel (%p402) target = $region40
      $region39: #{time_series_transformer_forward.1} parent=11 // pred_region
        _
      $region40: #{time_series_transformer_forward.1} parent=11 // pred_fallthru
        _
      // Predicated region
      $region41: #{time_series_transformer_forward.1} parent=11 // pred_check
        %p405 = pneg %p217
      $region42: #{time_series_transformer_forward.1} parent=11 // pred_check_branch
        %407 = sbr.rel (%p405) target = $region44
      $region43: #{time_series_transformer_forward.1} parent=11 // pred_region
        _
      $region44: #{time_series_transformer_forward.1} parent=11 // pred_fallthru
        _
      // Predicated region
      $region45: #{time_series_transformer_forward.1} parent=11 // pred_check
        %p408 = pneg %p238
      $region46: #{time_series_transformer_forward.1} parent=11 // pred_check_branch
        %410 = sbr.rel (%p408) target = $region48
      $region47: #{time_series_transformer_forward.1} parent=11 // pred_region
        _
      $region48: #{time_series_transformer_forward.1} parent=11 // pred_fallthru
        _
      // Predicated region
      $region49: #{time_series_transformer_forward.1} parent=11 // pred_check
        %p411 = pneg %p259
      $region50: #{time_series_transformer_forward.1} parent=11 // pred_check_branch
        %413 = sbr.rel (%p411) target = $region52
      $region51: #{time_series_transformer_forward.1} parent=11 // pred_region
        _
      $region52: #{time_series_transformer_forward.1} parent=11 // pred_fallthru
        _
      // Predicated region
      $region53: #{time_series_transformer_forward.1} parent=11 // pred_check
        %p414 = pneg %p280
      $region54: #{time_series_transformer_forward.1} parent=11 // pred_check_branch
        %416 = sbr.rel (%p414) target = $region56
      $region55: #{time_series_transformer_forward.1} parent=11 // pred_region
        _
      $region56: #{time_series_transformer_forward.1} parent=11 // pred_fallthru
        _
      // Predicated region
      $region57: #{time_series_transformer_forward.1} parent=11 // pred_check
        %p417 = pneg %p301
      $region58: #{time_series_transformer_forward.1} parent=11 // pred_check_branch
        %419 = sbr.rel (%p417) target = $region60
      $region59: #{time_series_transformer_forward.1} parent=11 // pred_region
        _
      $region60: #{time_series_transformer_forward.1} parent=11 // pred_fallthru
        _
      // Predicated region
      $region61: #{time_series_transformer_forward.1} parent=11 // pred_check
        %p420 = pneg %p322
      $region62: #{time_series_transformer_forward.1} parent=11 // pred_check_branch
        %422 = sbr.rel (%p420) target = $region64
      $region63: #{time_series_transformer_forward.1} parent=11 // pred_region
        _
      $region64: #{time_series_transformer_forward.1} parent=11 // pred_fallthru
        _
      // Predicated region
      $region65: #{time_series_transformer_forward.1} parent=11 // pred_check
        %p423 = pneg %p343
      $region66: #{time_series_transformer_forward.1} parent=11 // pred_check_branch
        %425 = sbr.rel (%p423) target = $region68
      $region67: #{time_series_transformer_forward.1} parent=11 // pred_region
        _
      $region68: #{time_series_transformer_forward.1} parent=11 // pred_fallthru
        _
    $region12: #{time_series_transformer_forward.1} parent=5 // pred_fallthru
      _
    %p426 = scmp.lt.s32.totalorder %s23, 2
    // Predicated region
    $region69: #{time_series_transformer_forward.1} parent=5 // pred_check
      %p427 = pneg %p426
    $region70: #{time_series_transformer_forward.1} parent=5 // pred_check_branch
      %429 = sbr.rel (%p427) target = $region72
    $region71: #{time_series_transformer_forward.1} parent=5 // pred_region
      // Predicated region
      $region73: #{time_series_transformer_forward.1} parent=71 // pred_check
        %p430 = pneg %p43
      $region74: #{time_series_transformer_forward.1} parent=71 // pred_check_branch
        %432 = sbr.rel (%p430) target = $region76
      $region75: #{time_series_transformer_forward.1} parent=71 // pred_region
        %p433 = scmp.lt.s32.totalorder %s23, 1
        %s434 = scalar_select %p433, %s23, 1
        %s435 = smul.addr %s434, 8
        %s436 = scalar_lea.vmem %s0, %s435
      $region76: #{time_series_transformer_forward.1} parent=71 // pred_fallthru
        _
    $region72: #{time_series_transformer_forward.1} parent=5 // pred_fallthru
      _
    %p437 = scmp.le.s32.totalorder 1, %s23
    %p438 = scmp.lt.s32.totalorder %s23, 3
    %p439 = pnand %p437, %p438
    %p440 = pneg %p439
    // Predicated region
    $region77: #{time_series_transformer_forward.1} parent=5 // pred_check
      _
    $region78: #{time_series_transformer_forward.1} parent=5 // pred_check_branch
      %442 = sbr.rel (%p439) target = $region80
    $region79: #{time_series_transformer_forward.1} parent=5 // pred_region
      %s443 = ssub.s32 %s23, 1
      %p444 = scmp.lt.s32.totalorder %s28, 1
      %s445 = scalar_select %p444, %s28, 1
      %s446 = smul.addr %s445, 8
      %s447 = scalar_lea.vmem %s0, %s446
      %p448 = pneg %p49
      %p449 = pneg %p46
      %p450 = pneg %p70
      %p451 = pneg %p67
      %p452 = pneg %p91
      %p453 = pneg %p88
      %p454 = pneg %p112
      %p455 = pneg %p109
      %p456 = pneg %p133
      %p457 = pneg %p130
      %p458 = pneg %p154
      %p459 = pneg %p151
      %p460 = pneg %p175
      %p461 = pneg %p172
      %p462 = pneg %p196
      %p463 = pneg %p193
      %p464 = pneg %p217
      %p465 = pneg %p214
      %p466 = pneg %p238
      %p467 = pneg %p235
      %p468 = pneg %p259
      %p469 = pneg %p256
      %p470 = pneg %p280
      %p471 = pneg %p277
      %p472 = pneg %p301
      %p473 = pneg %p298
      %p474 = pneg %p322
      %p475 = pneg %p319
      %p476 = pneg %p343
      %p477 = pneg %p340
      %p478 = pneg %p369
      %p479 = pneg %p366
      %p480 = scmp.lt.s32.totalorder %s28, 1
      %s481 = scalar_select %p480, %s28, 1
      %s482 = smul.addr %s481, 8
      %s483 = scalar_lea.vmem %s15, %s482
      %p484 = scmp.lt.s32.totalorder %s28, 1
      %s485 = scalar_select %p484, %s28, 1
      %s486 = smul.addr %s485, 8
      %s487 = scalar_lea.vmem %s0, %s486
      %p488 = scmp.lt.s32.totalorder %s28, 1
      %s489 = scalar_select %p488, %s28, 1
      %s490 = smul.addr %s489, 8
      %s491 = scalar_lea.vmem %s15, %s490
      %v492 = vld [vmem:[%s487] sm:$0xff]
      %v493 = vld [vmem:[%s1] sm:$0xff]
      %v494 = vld [vmem:[%s1 + $0x8] sm:$0xff]
      %v495 = vld [vmem:[%s1 + $0x10] sm:$0xff]
      %v496 = vld [vmem:[%s1 + $0x18] sm:$0xff]
      %v497 = vld [vmem:[%s2] sm:$0x1]
      %v499 = vlaneseq
      %v500 = vshrl.u32 %v499, 7
      %v501 = vsub.s32 0, %v500
      %v502 = vrot.slane %v497, %v501
      %vm504 = vcmask 261120
      %v506 = vsel %vm504, %v492, 0
      %508 = vmatprep.subr.mxu0 0.0
      %509 = vmatpush1.msra.mxu0 %v493
      %510 = vmatprep.subr.mxu0 0.0
      %511 = vmatpush1.msra.mxu0 %v494
      %512 = vmatprep.subr.mxu0 0.0
      %513 = vmatpush1.msra.mxu0 %v495
      %514 = vmatprep.subr.mxu0 0.0
      %515 = vmatpush1.msra.mxu0 %v496
      %516 = vmatprep.subr.mxu0 0.0
      %517 = vmatpush1.msra.mxu0 0.0
      %518 = vmatprep.subr.mxu0 0.0
      %519 = vmatpush1.msra.mxu0 0.0
      %520 = vmatprep.subr.mxu0 0.0
      %521 = vmatpush1.msra.mxu0 0.0
      %522 = vmatprep.subr.mxu0 0.0
      %523 = vmatpush1.msra.mxu0 0.0
      %524 = vmatprep.subr.mxu0 0.0
      %525 = vmatpush1.msra.mxu0 0.0
      %526 = vmatprep.subr.mxu0 0.0
      %527 = vmatpush1.msra.mxu0 0.0
      %528 = vmatprep.subr.mxu0 0.0
      %529 = vmatpush1.msra.mxu0 0.0
      %530 = vmatprep.subr.mxu0 0.0
      %531 = vmatpush1.msra.mxu0 0.0
      %532 = vmatprep.subr.mxu0 0.0
      %533 = vmatpush1.msra.mxu0 0.0
      %534 = vmatprep.subr.mxu0 0.0
      %535 = vmatpush1.msra.mxu0 0.0
      %536 = vmatprep.subr.mxu0 0.0
      %537 = vmatpush1.msra.mxu0 0.0
      %538 = vmatprep.subr.mxu0 0.0
      %539 = vmatpush1.msra.mxu0 0.0
      %540 = vmatprep.subr.mxu0 0.0
      %541 = vmatpush1.msra.mxu0 0.0
      %542 = vmatprep.subr.mxu0 0.0
      %543 = vmatpush1.msra.mxu0 0.0
      %544 = vmatprep.subr.mxu0 0.0
      %545 = vmatpush1.msra.mxu0 0.0
      %546 = vmatprep.subr.mxu0 0.0
      %547 = vmatpush1.msra.mxu0 0.0
      %548 = vmatprep.subr.mxu0 0.0
      %549 = vmatpush1.msra.mxu0 0.0
      %550 = vmatprep.subr.mxu0 0.0
      %551 = vmatpush1.msra.mxu0 0.0
      %552 = vmatprep.subr.mxu0 0.0
      %553 = vmatpush1.msra.mxu0 0.0
      %554 = vmatprep.subr.mxu0 0.0
      %555 = vmatpush1.msra.mxu0 0.0
      %556 = vmatprep.subr.mxu0 0.0
      %557 = vmatpush1.msra.mxu0 0.0
      %558 = vmatprep.subr.mxu0 0.0
      %559 = vmatpush1.msra.mxu0 0.0
      %560 = vmatprep.subr.mxu0 0.0
      %561 = vmatpush1.msra.mxu0 0.0
      %562 = vmatprep.subr.mxu0 0.0
      %563 = vmatpush1.msra.mxu0 0.0
      %564 = vmatprep.subr.mxu0 0.0
      %565 = vmatpush1.msra.mxu0 0.0
      %566 = vmatprep.subr.mxu0 0.0
      %567 = vmatpush1.msra.mxu0 0.0
      %568 = vmatprep.subr.mxu0 0.0
      %569 = vmatpush1.msra.mxu0 0.0
      %570 = vmatprep.subr.mxu0 0.0
      %571 = vmatpush1.msra.mxu0 0.0
      %572 = vmatprep.mubr.f32.mxu0 0.0
      %573 = vmatmul.mubr.f32.gmra.mrb[0].mxu0 %v506
      %v574 = vpop.f32.mrb[0].mxu0
      %v575 = vadd.f32 %v502, %v574
      %v576 = vpop.f32.mrb[0].mxu0
      %577 = vdwg.mxu0
      %579 = vrot.lane.b32.xlu0 %v575, 96
      %v580 = vpop.permute.xlu0 %579
      %vm581 = vcmask 64512
      %v582 = vsel %vm581, %v575, 0
      %v584 = vsel %vm581, %v580, 0
      %586 = vmatprep.subr.mxu0 0.0
      %587 = vmatpush1.xpose.msra.mxu0 %v584
      %588 = vmatprep.subr.mxu0 0.0
      %589 = vmatpush1.xpose.msra.mxu0 0.0
      %590 = vmatprep.subr.mxu0 0.0
      %591 = vmatpush1.xpose.msra.mxu0 0.0
      %592 = vmatprep.subr.mxu0 0.0
      %593 = vmatpush1.xpose.msra.mxu0 0.0
      %594 = vmatprep.subr.mxu0 0.0
      %595 = vmatpush1.xpose.msra.mxu0 0.0
      %596 = vmatprep.subr.mxu0 0.0
      %597 = vmatpush1.xpose.msra.mxu0 0.0
      %598 = vmatprep.subr.mxu0 0.0
      %599 = vmatpush1.xpose.msra.mxu0 0.0
      %600 = vmatprep.subr.mxu0 0.0
      %601 = vmatpush1.xpose.msra.mxu0 0.0
      %602 = vmatprep.subr.mxu0 0.0
      %603 = vmatpush1.xpose.msra.mxu0 0.0
      %604 = vmatprep.subr.mxu0 0.0
      %605 = vmatpush1.xpose.msra.mxu0 0.0
      %606 = vmatprep.subr.mxu0 0.0
      %607 = vmatpush1.xpose.msra.mxu0 0.0
      %608 = vmatprep.subr.mxu0 0.0
      %609 = vmatpush1.xpose.msra.mxu0 0.0
      %610 = vmatprep.subr.mxu0 0.0
      %611 = vmatpush1.xpose.msra.mxu0 0.0
      %612 = vmatprep.subr.mxu0 0.0
      %613 = vmatpush1.xpose.msra.mxu0 0.0
      %614 = vmatprep.subr.mxu0 0.0
      %615 = vmatpush1.xpose.msra.mxu0 0.0
      %616 = vmatprep.subr.mxu0 0.0
      %617 = vmatpush1.xpose.msra.mxu0 0.0
      %618 = vmatprep.subr.mxu0 0.0
      %619 = vmatpush1.xpose.msra.mxu0 0.0
      %620 = vmatprep.subr.mxu0 0.0
      %621 = vmatpush1.xpose.msra.mxu0 0.0
      %622 = vmatprep.subr.mxu0 0.0
      %623 = vmatpush1.xpose.msra.mxu0 0.0
      %624 = vmatprep.subr.mxu0 0.0
      %625 = vmatpush1.xpose.msra.mxu0 0.0
      %626 = vmatprep.subr.mxu0 0.0
      %627 = vmatpush1.xpose.msra.mxu0 0.0
      %628 = vmatprep.subr.mxu0 0.0
      %629 = vmatpush1.xpose.msra.mxu0 0.0
      %630 = vmatprep.subr.mxu0 0.0
      %631 = vmatpush1.xpose.msra.mxu0 0.0
      %632 = vmatprep.subr.mxu0 0.0
      %633 = vmatpush1.xpose.msra.mxu0 0.0
      %634 = vmatprep.subr.mxu0 0.0
      %635 = vmatpush1.xpose.msra.mxu0 0.0
      %636 = vmatprep.subr.mxu0 0.0
      %637 = vmatpush1.xpose.msra.mxu0 0.0
      %638 = vmatprep.subr.mxu0 0.0
      %639 = vmatpush1.xpose.msra.mxu0 0.0
      %640 = vmatprep.subr.mxu0 0.0
      %641 = vmatpush1.xpose.msra.mxu0 0.0
      %642 = vmatprep.subr.mxu0 0.0
      %643 = vmatpush1.xpose.msra.mxu0 0.0
      %644 = vmatprep.subr.mxu0 0.0
      %645 = vmatpush1.xpose.msra.mxu0 0.0
      %646 = vmatprep.subr.mxu0 0.0
      %647 = vmatpush1.xpose.msra.mxu0 0.0
      %648 = vmatprep.subr.mxu0 0.0
      %649 = vmatpush1.xpose.msra.mxu0 0.0
      %650 = vmatprep.mubr.f32.mxu0 0.0
      %651 = vmatmul.mubr.f32.gmra.mrb[0].mxu0 %v582
      %v652 = vpop.f32.mrb[0].mxu0
      %v653 = vadd.f32 0.0, %v652
      %v654 = vpop.f32.mrb[0].mxu0
      %655 = vdwg.mxu0
      %v656 = vsel %vm581, %v653, -inf
      %657 = vmax.xlane.f32.xlu0 %v656
      %v658 = vpop.xlane.xlu0 %657
      %v659 = vsub.f32 %v653, %v658
      %v660 = vmul.f32 %v659, 1.442695
      %v661 = vpow.pop %v660
      %v662 = vsel %vm581, %v661, 0.0
      %663 = vadd.xlane.f32.xlu0 %v662
      %v664 = vpop.xlane.xlu0 %663
      %v665 = vrcp.pop %v664
      %v666 = vmul.f32 %v661, %v665
      %667 = vrot.lane.b32.xlu0 %v575, 64
      %v668 = vpop.permute.xlu0 %667
      %v671 = vsel %vm581, %v666, 0
      %673 = vmatprep.subr.mxu0 0.0
      %674 = vmatpush1.msra.mxu0 %v668
      %675 = vmatprep.subr.mxu0 0.0
      %676 = vmatpush1.msra.mxu0 0.0
      %677 = vmatprep.subr.mxu0 0.0
      %678 = vmatpush1.msra.mxu0 0.0
      %679 = vmatprep.subr.mxu0 0.0
      %680 = vmatpush1.msra.mxu0 0.0
      %681 = vmatprep.subr.mxu0 0.0
      %682 = vmatpush1.msra.mxu0 0.0
      %683 = vmatprep.subr.mxu0 0.0
      %684 = vmatpush1.msra.mxu0 0.0
      %685 = vmatprep.subr.mxu0 0.0
      %686 = vmatpush1.msra.mxu0 0.0
      %687 = vmatprep.subr.mxu0 0.0
      %688 = vmatpush1.msra.mxu0 0.0
      %689 = vmatprep.subr.mxu0 0.0
      %690 = vmatpush1.msra.mxu0 0.0
      %691 = vmatprep.subr.mxu0 0.0
      %692 = vmatpush1.msra.mxu0 0.0
      %693 = vmatprep.subr.mxu0 0.0
      %694 = vmatpush1.msra.mxu0 0.0
      %695 = vmatprep.subr.mxu0 0.0
      %696 = vmatpush1.msra.mxu0 0.0
      %697 = vmatprep.subr.mxu0 0.0
      %698 = vmatpush1.msra.mxu0 0.0
      %699 = vmatprep.subr.mxu0 0.0
      %700 = vmatpush1.msra.mxu0 0.0
      %701 = vmatprep.subr.mxu0 0.0
      %702 = vmatpush1.msra.mxu0 0.0
      %703 = vmatprep.subr.mxu0 0.0
      %704 = vmatpush1.msra.mxu0 0.0
      %705 = vmatprep.subr.mxu0 0.0
      %706 = vmatpush1.msra.mxu0 0.0
      %707 = vmatprep.subr.mxu0 0.0
      %708 = vmatpush1.msra.mxu0 0.0
      %709 = vmatprep.subr.mxu0 0.0
      %710 = vmatpush1.msra.mxu0 0.0
      %711 = vmatprep.subr.mxu0 0.0
      %712 = vmatpush1.msra.mxu0 0.0
      %713 = vmatprep.subr.mxu0 0.0
      %714 = vmatpush1.msra.mxu0 0.0
      %715 = vmatprep.subr.mxu0 0.0
      %716 = vmatpush1.msra.mxu0 0.0
      %717 = vmatprep.subr.mxu0 0.0
      %718 = vmatpush1.msra.mxu0 0.0
      %719 = vmatprep.subr.mxu0 0.0
      %720 = vmatpush1.msra.mxu0 0.0
      %721 = vmatprep.subr.mxu0 0.0
      %722 = vmatpush1.msra.mxu0 0.0
      %723 = vmatprep.subr.mxu0 0.0
      %724 = vmatpush1.msra.mxu0 0.0
      %725 = vmatprep.subr.mxu0 0.0
      %726 = vmatpush1.msra.mxu0 0.0
      %727 = vmatprep.subr.mxu0 0.0
      %728 = vmatpush1.msra.mxu0 0.0
      %729 = vmatprep.subr.mxu0 0.0
      %730 = vmatpush1.msra.mxu0 0.0
      %731 = vmatprep.subr.mxu0 0.0
      %732 = vmatpush1.msra.mxu0 0.0
      %733 = vmatprep.subr.mxu0 0.0
      %734 = vmatpush1.msra.mxu0 0.0
      %735 = vmatprep.subr.mxu0 0.0
      %736 = vmatpush1.msra.mxu0 0.0
      %737 = vmatprep.mubr.f32.mxu0 0.0
      %738 = vmatmul.mubr.f32.gmra.mrb[0].mxu0 %v671
      %v739 = vpop.f32.mrb[0].mxu0
      %v740 = vadd.f32 0.0, %v739
      %v741 = vpop.f32.mrb[0].mxu0
      %742 = vdwg.mxu0
      %743 = vrot.lane.b32.xlu0 %v575, 120
      %v744 = vpop.permute.xlu0 %743
      %745 = vrot.lane.b32.xlu0 %v575, 88
      %v746 = vpop.permute.xlu0 %745
      %v747 = vsel %vm581, %v744, 0
      %v749 = vsel %vm581, %v746, 0
      %751 = vmatprep.subr.mxu0 0.0
      %752 = vmatpush1.xpose.msra.mxu0 %v749
      %753 = vmatprep.subr.mxu0 0.0
      %754 = vmatpush1.xpose.msra.mxu0 0.0
      %755 = vmatprep.subr.mxu0 0.0
      %756 = vmatpush1.xpose.msra.mxu0 0.0
      %757 = vmatprep.subr.mxu0 0.0
      %758 = vmatpush1.xpose.msra.mxu0 0.0
      %759 = vmatprep.subr.mxu0 0.0
      %760 = vmatpush1.xpose.msra.mxu0 0.0
      %761 = vmatprep.subr.mxu0 0.0
      %762 = vmatpush1.xpose.msra.mxu0 0.0
      %763 = vmatprep.subr.mxu0 0.0
      %764 = vmatpush1.xpose.msra.mxu0 0.0
      %765 = vmatprep.subr.mxu0 0.0
      %766 = vmatpush1.xpose.msra.mxu0 0.0
      %767 = vmatprep.subr.mxu0 0.0
      %768 = vmatpush1.xpose.msra.mxu0 0.0
      %769 = vmatprep.subr.mxu0 0.0
      %770 = vmatpush1.xpose.msra.mxu0 0.0
      %771 = vmatprep.subr.mxu0 0.0
      %772 = vmatpush1.xpose.msra.mxu0 0.0
      %773 = vmatprep.subr.mxu0 0.0
      %774 = vmatpush1.xpose.msra.mxu0 0.0
      %775 = vmatprep.subr.mxu0 0.0
      %776 = vmatpush1.xpose.msra.mxu0 0.0
      %777 = vmatprep.subr.mxu0 0.0
      %778 = vmatpush1.xpose.msra.mxu0 0.0
      %779 = vmatprep.subr.mxu0 0.0
      %780 = vmatpush1.xpose.msra.mxu0 0.0
      %781 = vmatprep.subr.mxu0 0.0
      %782 = vmatpush1.xpose.msra.mxu0 0.0
      %783 = vmatprep.subr.mxu0 0.0
      %784 = vmatpush1.xpose.msra.mxu0 0.0
      %785 = vmatprep.subr.mxu0 0.0
      %786 = vmatpush1.xpose.msra.mxu0 0.0
      %787 = vmatprep.subr.mxu0 0.0
      %788 = vmatpush1.xpose.msra.mxu0 0.0
      %789 = vmatprep.subr.mxu0 0.0
      %790 = vmatpush1.xpose.msra.mxu0 0.0
      %791 = vmatprep.subr.mxu0 0.0
      %792 = vmatpush1.xpose.msra.mxu0 0.0
      %793 = vmatprep.subr.mxu0 0.0
      %794 = vmatpush1.xpose.msra.mxu0 0.0
      %795 = vmatprep.subr.mxu0 0.0
      %796 = vmatpush1.xpose.msra.mxu0 0.0
      %797 = vmatprep.subr.mxu0 0.0
      %798 = vmatpush1.xpose.msra.mxu0 0.0
      %799 = vmatprep.subr.mxu0 0.0
      %800 = vmatpush1.xpose.msra.mxu0 0.0
      %801 = vmatprep.subr.mxu0 0.0
      %802 = vmatpush1.xpose.msra.mxu0 0.0
      %803 = vmatprep.subr.mxu0 0.0
      %804 = vmatpush1.xpose.msra.mxu0 0.0
      %805 = vmatprep.subr.mxu0 0.0
      %806 = vmatpush1.xpose.msra.mxu0 0.0
      %807 = vmatprep.subr.mxu0 0.0
      %808 = vmatpush1.xpose.msra.mxu0 0.0
      %809 = vmatprep.subr.mxu0 0.0
      %810 = vmatpush1.xpose.msra.mxu0 0.0
      %811 = vmatprep.subr.mxu0 0.0
      %812 = vmatpush1.xpose.msra.mxu0 0.0
      %813 = vmatprep.subr.mxu0 0.0
      %814 = vmatpush1.xpose.msra.mxu0 0.0
      %815 = vmatprep.mubr.f32.mxu0 0.0
      %816 = vmatmul.mubr.f32.gmra.mrb[0].mxu0 %v747
      %v817 = vpop.f32.mrb[0].mxu0
      %v818 = vadd.f32 0.0, %v817
      %v819 = vpop.f32.mrb[0].mxu0
      %820 = vdwg.mxu0
      %v821 = vsel %vm581, %v818, -inf
      %822 = vmax.xlane.f32.xlu0 %v821
      %v823 = vpop.xlane.xlu0 %822
      %v824 = vsub.f32 %v818, %v823
      %v825 = vmul.f32 %v824, 1.442695
      %v826 = vpow.pop %v825
      %v827 = vsel %vm581, %v826, 0.0
      %828 = vadd.xlane.f32.xlu0 %v827
      %v829 = vpop.xlane.xlu0 %828
      %v830 = vrcp.pop %v829
      %v831 = vmul.f32 %v826, %v830
      %832 = vrot.lane.b32.xlu0 %v575, 56
      %v833 = vpop.permute.xlu0 %832
      %v836 = vsel %vm581, %v831, 0
      %838 = vmatprep.subr.mxu0 0.0
      %839 = vmatpush1.msra.mxu0 %v833
      %840 = vmatprep.subr.mxu0 0.0
      %841 = vmatpush1.msra.mxu0 0.0
      %842 = vmatprep.subr.mxu0 0.0
      %843 = vmatpush1.msra.mxu0 0.0
      %844 = vmatprep.subr.mxu0 0.0
      %845 = vmatpush1.msra.mxu0 0.0
      %846 = vmatprep.subr.mxu0 0.0
      %847 = vmatpush1.msra.mxu0 0.0
      %848 = vmatprep.subr.mxu0 0.0
      %849 = vmatpush1.msra.mxu0 0.0
      %850 = vmatprep.subr.mxu0 0.0
      %851 = vmatpush1.msra.mxu0 0.0
      %852 = vmatprep.subr.mxu0 0.0
      %853 = vmatpush1.msra.mxu0 0.0
      %854 = vmatprep.subr.mxu0 0.0
      %855 = vmatpush1.msra.mxu0 0.0
      %856 = vmatprep.subr.mxu0 0.0
      %857 = vmatpush1.msra.mxu0 0.0
      %858 = vmatprep.subr.mxu0 0.0
      %859 = vmatpush1.msra.mxu0 0.0
      %860 = vmatprep.subr.mxu0 0.0
      %861 = vmatpush1.msra.mxu0 0.0
      %862 = vmatprep.subr.mxu0 0.0
      %863 = vmatpush1.msra.mxu0 0.0
      %864 = vmatprep.subr.mxu0 0.0
      %865 = vmatpush1.msra.mxu0 0.0
      %866 = vmatprep.subr.mxu0 0.0
      %867 = vmatpush1.msra.mxu0 0.0
      %868 = vmatprep.subr.mxu0 0.0
      %869 = vmatpush1.msra.mxu0 0.0
      %870 = vmatprep.subr.mxu0 0.0
      %871 = vmatpush1.msra.mxu0 0.0
      %872 = vmatprep.subr.mxu0 0.0
      %873 = vmatpush1.msra.mxu0 0.0
      %874 = vmatprep.subr.mxu0 0.0
      %875 = vmatpush1.msra.mxu0 0.0
      %876 = vmatprep.subr.mxu0 0.0
      %877 = vmatpush1.msra.mxu0 0.0
      %878 = vmatprep.subr.mxu0 0.0
      %879 = vmatpush1.msra.mxu0 0.0
      %880 = vmatprep.subr.mxu0 0.0
      %881 = vmatpush1.msra.mxu0 0.0
      %882 = vmatprep.subr.mxu0 0.0
      %883 = vmatpush1.msra.mxu0 0.0
      %884 = vmatprep.subr.mxu0 0.0
      %885 = vmatpush1.msra.mxu0 0.0
      %886 = vmatprep.subr.mxu0 0.0
      %887 = vmatpush1.msra.mxu0 0.0
      %888 = vmatprep.subr.mxu0 0.0
      %889 = vmatpush1.msra.mxu0 0.0
      %890 = vmatprep.subr.mxu0 0.0
      %891 = vmatpush1.msra.mxu0 0.0
      %892 = vmatprep.subr.mxu0 0.0
      %893 = vmatpush1.msra.mxu0 0.0
      %894 = vmatprep.subr.mxu0 0.0
      %895 = vmatpush1.msra.mxu0 0.0
      %896 = vmatprep.subr.mxu0 0.0
      %897 = vmatpush1.msra.mxu0 0.0
      %898 = vmatprep.subr.mxu0 0.0
      %899 = vmatpush1.msra.mxu0 0.0
      %900 = vmatprep.subr.mxu0 0.0
      %901 = vmatpush1.msra.mxu0 0.0
      %902 = vmatprep.mubr.f32.mxu0 0.0
      %903 = vmatmul.mubr.f32.gmra.mrb[0].mxu0 %v836
      %v904 = vpop.f32.mrb[0].mxu0
      %v905 = vadd.f32 0.0, %v904
      %v906 = vpop.f32.mrb[0].mxu0
      %907 = vdwg.mxu0
      %908 = vrot.lane.b32.xlu0 %v575, 112
      %v909 = vpop.permute.xlu0 %908
      %910 = vrot.lane.b32.xlu0 %v575, 80
      %v911 = vpop.permute.xlu0 %910
      %v912 = vsel %vm581, %v909, 0
      %v914 = vsel %vm581, %v911, 0
      %916 = vmatprep.subr.mxu0 0.0
      %917 = vmatpush1.xpose.msra.mxu0 %v914
      %918 = vmatprep.subr.mxu0 0.0
      %919 = vmatpush1.xpose.msra.mxu0 0.0
      %920 = vmatprep.subr.mxu0 0.0
      %921 = vmatpush1.xpose.msra.mxu0 0.0
      %922 = vmatprep.subr.mxu0 0.0
      %923 = vmatpush1.xpose.msra.mxu0 0.0
      %924 = vmatprep.subr.mxu0 0.0
      %925 = vmatpush1.xpose.msra.mxu0 0.0
      %926 = vmatprep.subr.mxu0 0.0
      %927 = vmatpush1.xpose.msra.mxu0 0.0
      %928 = vmatprep.subr.mxu0 0.0
      %929 = vmatpush1.xpose.msra.mxu0 0.0
      %930 = vmatprep.subr.mxu0 0.0
      %931 = vmatpush1.xpose.msra.mxu0 0.0
      %932 = vmatprep.subr.mxu0 0.0
      %933 = vmatpush1.xpose.msra.mxu0 0.0
      %934 = vmatprep.subr.mxu0 0.0
      %935 = vmatpush1.xpose.msra.mxu0 0.0
      %936 = vmatprep.subr.mxu0 0.0
      %937 = vmatpush1.xpose.msra.mxu0 0.0
      %938 = vmatprep.subr.mxu0 0.0
      %939 = vmatpush1.xpose.msra.mxu0 0.0
      %940 = vmatprep.subr.mxu0 0.0
      %941 = vmatpush1.xpose.msra.mxu0 0.0
      %942 = vmatprep.subr.mxu0 0.0
      %943 = vmatpush1.xpose.msra.mxu0 0.0
      %944 = vmatprep.subr.mxu0 0.0
      %945 = vmatpush1.xpose.msra.mxu0 0.0
      %946 = vmatprep.subr.mxu0 0.0
      %947 = vmatpush1.xpose.msra.mxu0 0.0
      %948 = vmatprep.subr.mxu0 0.0
      %949 = vmatpush1.xpose.msra.mxu0 0.0
      %950 = vmatprep.subr.mxu0 0.0
      %951 = vmatpush1.xpose.msra.mxu0 0.0
      %952 = vmatprep.subr.mxu0 0.0
      %953 = vmatpush1.xpose.msra.mxu0 0.0
      %954 = vmatprep.subr.mxu0 0.0
      %955 = vmatpush1.xpose.msra.mxu0 0.0
      %956 = vmatprep.subr.mxu0 0.0
      %957 = vmatpush1.xpose.msra.mxu0 0.0
      %958 = vmatprep.subr.mxu0 0.0
      %959 = vmatpush1.xpose.msra.mxu0 0.0
      %960 = vmatprep.subr.mxu0 0.0
      %961 = vmatpush1.xpose.msra.mxu0 0.0
      %962 = vmatprep.subr.mxu0 0.0
      %963 = vmatpush1.xpose.msra.mxu0 0.0
      %964 = vmatprep.subr.mxu0 0.0
      %965 = vmatpush1.xpose.msra.mxu0 0.0
      %966 = vmatprep.subr.mxu0 0.0
      %967 = vmatpush1.xpose.msra.mxu0 0.0
      %968 = vmatprep.subr.mxu0 0.0
      %969 = vmatpush1.xpose.msra.mxu0 0.0
      %970 = vmatprep.subr.mxu0 0.0
      %971 = vmatpush1.xpose.msra.mxu0 0.0
      %972 = vmatprep.subr.mxu0 0.0
      %973 = vmatpush1.xpose.msra.mxu0 0.0
      %974 = vmatprep.subr.mxu0 0.0
      %975 = vmatpush1.xpose.msra.mxu0 0.0
      %976 = vmatprep.subr.mxu0 0.0
      %977 = vmatpush1.xpose.msra.mxu0 0.0
      %978 = vmatprep.subr.mxu0 0.0
      %979 = vmatpush1.xpose.msra.mxu0 0.0
      %980 = vmatprep.mubr.f32.mxu0 0.0
      %981 = vmatmul.mubr.f32.gmra.mrb[0].mxu0 %v912
      %v982 = vpop.f32.mrb[0].mxu0
      %v983 = vadd.f32 0.0, %v982
      %v984 = vpop.f32.mrb[0].mxu0
      %985 = vdwg.mxu0
      %v986 = vsel %vm581, %v983, -inf
      %987 = vmax.xlane.f32.xlu0 %v986
      %v988 = vpop.xlane.xlu0 %987
      %v989 = vsub.f32 %v983, %v988
      %v990 = vmul.f32 %v989, 1.442695
      %v991 = vpow.pop %v990
      %v992 = vsel %vm581, %v991, 0.0
      %993 = vadd.xlane.f32.xlu0 %v992
      %v994 = vpop.xlane.xlu0 %993
      %v995 = vrcp.pop %v994
      %v996 = vmul.f32 %v991, %v995
      %997 = vrot.lane.b32.xlu0 %v575, 48
      %v998 = vpop.permute.xlu0 %997
      %v1001 = vsel %vm581, %v996, 0
      %1003 = vmatprep.subr.mxu0 0.0
      %1004 = vmatpush1.msra.mxu0 %v998
      %1005 = vmatprep.subr.mxu0 0.0
      %1006 = vmatpush1.msra.mxu0 0.0
      %1007 = vmatprep.subr.mxu0 0.0
      %1008 = vmatpush1.msra.mxu0 0.0
      %1009 = vmatprep.subr.mxu0 0.0
      %1010 = vmatpush1.msra.mxu0 0.0
      %1011 = vmatprep.subr.mxu0 0.0
      %1012 = vmatpush1.msra.mxu0 0.0
      %1013 = vmatprep.subr.mxu0 0.0
      %1014 = vmatpush1.msra.mxu0 0.0
      %1015 = vmatprep.subr.mxu0 0.0
      %1016 = vmatpush1.msra.mxu0 0.0
      %1017 = vmatprep.subr.mxu0 0.0
      %1018 = vmatpush1.msra.mxu0 0.0
      %1019 = vmatprep.subr.mxu0 0.0
      %1020 = vmatpush1.msra.mxu0 0.0
      %1021 = vmatprep.subr.mxu0 0.0
      %1022 = vmatpush1.msra.mxu0 0.0
      %1023 = vmatprep.subr.mxu0 0.0
      %1024 = vmatpush1.msra.mxu0 0.0
      %1025 = vmatprep.subr.mxu0 0.0
      %1026 = vmatpush1.msra.mxu0 0.0
      %1027 = vmatprep.subr.mxu0 0.0
      %1028 = vmatpush1.msra.mxu0 0.0
      %1029 = vmatprep.subr.mxu0 0.0
      %1030 = vmatpush1.msra.mxu0 0.0
      %1031 = vmatprep.subr.mxu0 0.0
      %1032 = vmatpush1.msra.mxu0 0.0
      %1033 = vmatprep.subr.mxu0 0.0
      %1034 = vmatpush1.msra.mxu0 0.0
      %1035 = vmatprep.subr.mxu0 0.0
      %1036 = vmatpush1.msra.mxu0 0.0
      %1037 = vmatprep.subr.mxu0 0.0
      %1038 = vmatpush1.msra.mxu0 0.0
      %1039 = vmatprep.subr.mxu0 0.0
      %1040 = vmatpush1.msra.mxu0 0.0
      %1041 = vmatprep.subr.mxu0 0.0
      %1042 = vmatpush1.msra.mxu0 0.0
      %1043 = vmatprep.subr.mxu0 0.0
      %1044 = vmatpush1.msra.mxu0 0.0
      %1045 = vmatprep.subr.mxu0 0.0
      %1046 = vmatpush1.msra.mxu0 0.0
      %1047 = vmatprep.subr.mxu0 0.0
      %1048 = vmatpush1.msra.mxu0 0.0
      %1049 = vmatprep.subr.mxu0 0.0
      %1050 = vmatpush1.msra.mxu0 0.0
      %1051 = vmatprep.subr.mxu0 0.0
      %1052 = vmatpush1.msra.mxu0 0.0
      %1053 = vmatprep.subr.mxu0 0.0
      %1054 = vmatpush1.msra.mxu0 0.0
      %1055 = vmatprep.subr.mxu0 0.0
      %1056 = vmatpush1.msra.mxu0 0.0
      %1057 = vmatprep.subr.mxu0 0.0
      %1058 = vmatpush1.msra.mxu0 0.0
      %1059 = vmatprep.subr.mxu0 0.0
      %1060 = vmatpush1.msra.mxu0 0.0
      %1061 = vmatprep.subr.mxu0 0.0
      %1062 = vmatpush1.msra.mxu0 0.0
      %1063 = vmatprep.subr.mxu0 0.0
      %1064 = vmatpush1.msra.mxu0 0.0
      %1065 = vmatprep.subr.mxu0 0.0
      %1066 = vmatpush1.msra.mxu0 0.0
      %1067 = vmatprep.mubr.f32.mxu0 0.0
      %1068 = vmatmul.mubr.f32.gmra.mrb[0].mxu0 %v1001
      %v1069 = vpop.f32.mrb[0].mxu0
      %v1070 = vadd.f32 0.0, %v1069
      %v1071 = vpop.f32.mrb[0].mxu0
      %1072 = vdwg.mxu0
      %1073 = vrot.lane.b32.xlu0 %v575, 104
      %v1074 = vpop.permute.xlu0 %1073
      %1075 = vrot.lane.b32.xlu0 %v575, 72
      %v1076 = vpop.permute.xlu0 %1075
      %v1077 = vsel %vm581, %v1074, 0
      %v1079 = vsel %vm581, %v1076, 0
      %1081 = vmatprep.subr.mxu0 0.0
      %1082 = vmatpush1.xpose.msra.mxu0 %v1079
      %1083 = vmatprep.subr.mxu0 0.0
      %1084 = vmatpush1.xpose.msra.mxu0 0.0
      %1085 = vmatprep.subr.mxu0 0.0
      %1086 = vmatpush1.xpose.msra.mxu0 0.0
      %1087 = vmatprep.subr.mxu0 0.0
      %1088 = vmatpush1.xpose.msra.mxu0 0.0
      %1089 = vmatprep.subr.mxu0 0.0
      %1090 = vmatpush1.xpose.msra.mxu0 0.0
      %1091 = vmatprep.subr.mxu0 0.0
      %1092 = vmatpush1.xpose.msra.mxu0 0.0
      %1093 = vmatprep.subr.mxu0 0.0
      %1094 = vmatpush1.xpose.msra.mxu0 0.0
      %1095 = vmatprep.subr.mxu0 0.0
      %1096 = vmatpush1.xpose.msra.mxu0 0.0
      %1097 = vmatprep.subr.mxu0 0.0
      %1098 = vmatpush1.xpose.msra.mxu0 0.0
      %1099 = vmatprep.subr.mxu0 0.0
      %1100 = vmatpush1.xpose.msra.mxu0 0.0
      %1101 = vmatprep.subr.mxu0 0.0
      %1102 = vmatpush1.xpose.msra.mxu0 0.0
      %1103 = vmatprep.subr.mxu0 0.0
      %1104 = vmatpush1.xpose.msra.mxu0 0.0
      %1105 = vmatprep.subr.mxu0 0.0
      %1106 = vmatpush1.xpose.msra.mxu0 0.0
      %1107 = vmatprep.subr.mxu0 0.0
      %1108 = vmatpush1.xpose.msra.mxu0 0.0
      %1109 = vmatprep.subr.mxu0 0.0
      %1110 = vmatpush1.xpose.msra.mxu0 0.0
      %1111 = vmatprep.subr.mxu0 0.0
      %1112 = vmatpush1.xpose.msra.mxu0 0.0
      %1113 = vmatprep.subr.mxu0 0.0
      %1114 = vmatpush1.xpose.msra.mxu0 0.0
      %1115 = vmatprep.subr.mxu0 0.0
      %1116 = vmatpush1.xpose.msra.mxu0 0.0
      %1117 = vmatprep.subr.mxu0 0.0
      %1118 = vmatpush1.xpose.msra.mxu0 0.0
      %1119 = vmatprep.subr.mxu0 0.0
      %1120 = vmatpush1.xpose.msra.mxu0 0.0
      %1121 = vmatprep.subr.mxu0 0.0
      %1122 = vmatpush1.xpose.msra.mxu0 0.0
      %1123 = vmatprep.subr.mxu0 0.0
      %1124 = vmatpush1.xpose.msra.mxu0 0.0
      %1125 = vmatprep.subr.mxu0 0.0
      %1126 = vmatpush1.xpose.msra.mxu0 0.0
      %1127 = vmatprep.subr.mxu0 0.0
      %1128 = vmatpush1.xpose.msra.mxu0 0.0
      %1129 = vmatprep.subr.mxu0 0.0
      %1130 = vmatpush1.xpose.msra.mxu0 0.0
      %1131 = vmatprep.subr.mxu0 0.0
      %1132 = vmatpush1.xpose.msra.mxu0 0.0
      %1133 = vmatprep.subr.mxu0 0.0
      %1134 = vmatpush1.xpose.msra.mxu0 0.0
      %1135 = vmatprep.subr.mxu0 0.0
      %1136 = vmatpush1.xpose.msra.mxu0 0.0
      %1137 = vmatprep.subr.mxu0 0.0
      %1138 = vmatpush1.xpose.msra.mxu0 0.0
      %1139 = vmatprep.subr.mxu0 0.0
      %1140 = vmatpush1.xpose.msra.mxu0 0.0
      %1141 = vmatprep.subr.mxu0 0.0
      %1142 = vmatpush1.xpose.msra.mxu0 0.0
      %1143 = vmatprep.subr.mxu0 0.0
      %1144 = vmatpush1.xpose.msra.mxu0 0.0
      %1145 = vmatprep.mubr.f32.mxu0 0.0
      %1146 = vmatmul.mubr.f32.gmra.mrb[0].mxu0 %v1077
      %v1147 = vpop.f32.mrb[0].mxu0
      %v1148 = vadd.f32 0.0, %v1147
      %v1149 = vpop.f32.mrb[0].mxu0
      %1150 = vdwg.mxu0
      %v1151 = vsel %vm581, %v1148, -inf
      %1152 = vmax.xlane.f32.xlu0 %v1151
      %v1153 = vpop.xlane.xlu0 %1152
      %v1154 = vsub.f32 %v1148, %v1153
      %v1155 = vmul.f32 %v1154, 1.442695
      %v1156 = vpow.pop %v1155
      %v1157 = vsel %vm581, %v1156, 0.0
      %1158 = vadd.xlane.f32.xlu0 %v1157
      %v1159 = vpop.xlane.xlu0 %1158
      %v1160 = vrcp.pop %v1159
      %v1161 = vmul.f32 %v1156, %v1160
      %1162 = vrot.lane.b32.xlu0 %v575, 40
      %v1163 = vpop.permute.xlu0 %1162
      %v1166 = vsel %vm581, %v1161, 0
      %1168 = vmatprep.subr.mxu0 0.0
      %1169 = vmatpush1.msra.mxu0 %v1163
      %1170 = vmatprep.subr.mxu0 0.0
      %1171 = vmatpush1.msra.mxu0 0.0
      %1172 = vmatprep.subr.mxu0 0.0
      %1173 = vmatpush1.msra.mxu0 0.0
      %1174 = vmatprep.subr.mxu0 0.0
      %1175 = vmatpush1.msra.mxu0 0.0
      %1176 = vmatprep.subr.mxu0 0.0
      %1177 = vmatpush1.msra.mxu0 0.0
      %1178 = vmatprep.subr.mxu0 0.0
      %1179 = vmatpush1.msra.mxu0 0.0
      %1180 = vmatprep.subr.mxu0 0.0
      %1181 = vmatpush1.msra.mxu0 0.0
      %1182 = vmatprep.subr.mxu0 0.0
      %1183 = vmatpush1.msra.mxu0 0.0
      %1184 = vmatprep.subr.mxu0 0.0
      %1185 = vmatpush1.msra.mxu0 0.0
      %1186 = vmatprep.subr.mxu0 0.0
      %1187 = vmatpush1.msra.mxu0 0.0
      %1188 = vmatprep.subr.mxu0 0.0
      %1189 = vmatpush1.msra.mxu0 0.0
      %1190 = vmatprep.subr.mxu0 0.0
      %1191 = vmatpush1.msra.mxu0 0.0
      %1192 = vmatprep.subr.mxu0 0.0
      %1193 = vmatpush1.msra.mxu0 0.0
      %1194 = vmatprep.subr.mxu0 0.0
      %1195 = vmatpush1.msra.mxu0 0.0
      %1196 = vmatprep.subr.mxu0 0.0
      %1197 = vmatpush1.msra.mxu0 0.0
      %1198 = vmatprep.subr.mxu0 0.0
      %1199 = vmatpush1.msra.mxu0 0.0
      %1200 = vmatprep.subr.mxu0 0.0
      %1201 = vmatpush1.msra.mxu0 0.0
      %1202 = vmatprep.subr.mxu0 0.0
      %1203 = vmatpush1.msra.mxu0 0.0
      %1204 = vmatprep.subr.mxu0 0.0
      %1205 = vmatpush1.msra.mxu0 0.0
      %1206 = vmatprep.subr.mxu0 0.0
      %1207 = vmatpush1.msra.mxu0 0.0
      %1208 = vmatprep.subr.mxu0 0.0
      %1209 = vmatpush1.msra.mxu0 0.0
      %1210 = vmatprep.subr.mxu0 0.0
      %1211 = vmatpush1.msra.mxu0 0.0
      %1212 = vmatprep.subr.mxu0 0.0
      %1213 = vmatpush1.msra.mxu0 0.0
      %1214 = vmatprep.subr.mxu0 0.0
      %1215 = vmatpush1.msra.mxu0 0.0
      %1216 = vmatprep.subr.mxu0 0.0
      %1217 = vmatpush1.msra.mxu0 0.0
      %1218 = vmatprep.subr.mxu0 0.0
      %1219 = vmatpush1.msra.mxu0 0.0
      %1220 = vmatprep.subr.mxu0 0.0
      %1221 = vmatpush1.msra.mxu0 0.0
      %1222 = vmatprep.subr.mxu0 0.0
      %1223 = vmatpush1.msra.mxu0 0.0
      %1224 = vmatprep.subr.mxu0 0.0
      %1225 = vmatpush1.msra.mxu0 0.0
      %1226 = vmatprep.subr.mxu0 0.0
      %1227 = vmatpush1.msra.mxu0 0.0
      %1228 = vmatprep.subr.mxu0 0.0
      %1229 = vmatpush1.msra.mxu0 0.0
      %1230 = vmatprep.subr.mxu0 0.0
      %1231 = vmatpush1.msra.mxu0 0.0
      %1232 = vmatprep.mubr.f32.mxu0 0.0
      %1233 = vmatmul.mubr.f32.gmra.mrb[0].mxu0 %v1166
      %v1234 = vpop.f32.mrb[0].mxu0
      %v1235 = vadd.f32 0.0, %v1234
      %v1236 = vpop.f32.mrb[0].mxu0
      %1237 = vdwg.mxu0
      %1239 = vrot.lane.b32.xlu0 %v905, 8
      %v1240 = vpop.permute.xlu0 %1239
      %1243 = vrot.lane.b32.xlu0 %v1070, 16
      %v1244 = vpop.permute.xlu0 %1243
      %1247 = vrot.lane.b32.xlu0 %v1235, 24
      %v1248 = vpop.permute.xlu0 %1247
      %v1250 = vsel %vm581, %v740, %v1240
      %vm1251 = vcmask 130048
      %v1252 = vsel %vm1251, %v1250, %v1244
      %vm1253 = vcmask 195584
      %v1254 = vsel %vm1253, %v1252, %v1248
      %v1255 = vld [vmem:[%s3] sm:$0xff]
      %v1256 = vld [vmem:[%s3 + $0x8] sm:$0xff]
      %v1257 = vld [vmem:[%s3 + $0x10] sm:$0xff]
      %v1258 = vld [vmem:[%s3 + $0x18] sm:$0xff]
      %v1259 = vld [vmem:[%s4] sm:$0x1]
      %v1261 = vlaneseq
      %v1262 = vshrl.u32 %v1261, 7
      %v1263 = vsub.s32 0, %v1262
      %v1264 = vrot.slane %v1259, %v1263
      %v1267 = vsel %vm504, %v1254, 0
      %1269 = vmatprep.subr.mxu0 0.0
      %1270 = vmatpush1.msra.mxu0 %v1255
      %1271 = vmatprep.subr.mxu0 0.0
      %1272 = vmatpush1.msra.mxu0 %v1256
      %1273 = vmatprep.subr.mxu0 0.0
      %1274 = vmatpush1.msra.mxu0 %v1257
      %1275 = vmatprep.subr.mxu0 0.0
      %1276 = vmatpush1.msra.mxu0 %v1258
      %1277 = vmatprep.subr.mxu0 0.0
      %1278 = vmatpush1.msra.mxu0 0.0
      %1279 = vmatprep.subr.mxu0 0.0
      %1280 = vmatpush1.msra.mxu0 0.0
      %1281 = vmatprep.subr.mxu0 0.0
      %1282 = vmatpush1.msra.mxu0 0.0
      %1283 = vmatprep.subr.mxu0 0.0
      %1284 = vmatpush1.msra.mxu0 0.0
      %1285 = vmatprep.subr.mxu0 0.0
      %1286 = vmatpush1.msra.mxu0 0.0
      %1287 = vmatprep.subr.mxu0 0.0
      %1288 = vmatpush1.msra.mxu0 0.0
      %1289 = vmatprep.subr.mxu0 0.0
      %1290 = vmatpush1.msra.mxu0 0.0
      %1291 = vmatprep.subr.mxu0 0.0
      %1292 = vmatpush1.msra.mxu0 0.0
      %1293 = vmatprep.subr.mxu0 0.0
      %1294 = vmatpush1.msra.mxu0 0.0
      %1295 = vmatprep.subr.mxu0 0.0
      %1296 = vmatpush1.msra.mxu0 0.0
      %1297 = vmatprep.subr.mxu0 0.0
      %1298 = vmatpush1.msra.mxu0 0.0
      %1299 = vmatprep.subr.mxu0 0.0
      %1300 = vmatpush1.msra.mxu0 0.0
      %1301 = vmatprep.subr.mxu0 0.0
      %1302 = vmatpush1.msra.mxu0 0.0
      %1303 = vmatprep.subr.mxu0 0.0
      %1304 = vmatpush1.msra.mxu0 0.0
      %1305 = vmatprep.subr.mxu0 0.0
      %1306 = vmatpush1.msra.mxu0 0.0
      %1307 = vmatprep.subr.mxu0 0.0
      %1308 = vmatpush1.msra.mxu0 0.0
      %1309 = vmatprep.subr.mxu0 0.0
      %1310 = vmatpush1.msra.mxu0 0.0
      %1311 = vmatprep.subr.mxu0 0.0
      %1312 = vmatpush1.msra.mxu0 0.0
      %1313 = vmatprep.subr.mxu0 0.0
      %1314 = vmatpush1.msra.mxu0 0.0
      %1315 = vmatprep.subr.mxu0 0.0
      %1316 = vmatpush1.msra.mxu0 0.0
      %1317 = vmatprep.subr.mxu0 0.0
      %1318 = vmatpush1.msra.mxu0 0.0
      %1319 = vmatprep.subr.mxu0 0.0
      %1320 = vmatpush1.msra.mxu0 0.0
      %1321 = vmatprep.subr.mxu0 0.0
      %1322 = vmatpush1.msra.mxu0 0.0
      %1323 = vmatprep.subr.mxu0 0.0
      %1324 = vmatpush1.msra.mxu0 0.0
      %1325 = vmatprep.subr.mxu0 0.0
      %1326 = vmatpush1.msra.mxu0 0.0
      %1327 = vmatprep.subr.mxu0 0.0
      %1328 = vmatpush1.msra.mxu0 0.0
      %1329 = vmatprep.subr.mxu0 0.0
      %1330 = vmatpush1.msra.mxu0 0.0
      %1331 = vmatprep.subr.mxu0 0.0
      %1332 = vmatpush1.msra.mxu0 0.0
      %1333 = vmatprep.mubr.f32.mxu0 0.0
      %1334 = vmatmul.mubr.f32.gmra.mrb[0].mxu0 %v1267
      %v1335 = vpop.f32.mrb[0].mxu0
      %v1336 = vadd.f32 %v1264, %v1335
      %v1337 = vpop.f32.mrb[0].mxu0
      %1338 = vdwg.mxu0
      %v1339 = vadd.f32 %v492, %v1336
      %v1340 = vld [vmem:[%s5] sm:$0x1]
      %v1341 = vld [vmem:[%s6] sm:$0x1]
      %v1342 = vsel %vm504, %v1339, 0.0
      %1343 = vadd.xlane.f32.xlu0 %v1342
      %v1344 = vpop.xlane.xlu0 %1343
      %v1345 = vrcp.pop 32.0
      %v1346 = vmul.f32 %v1344, %v1345
      %v1347 = vsub.f32 %v1339, %v1346
      %v1348 = vmul.f32 %v1347, %v1347
      %v1349 = vsel %vm504, %v1348, 0.0
      %1350 = vadd.xlane.f32.xlu0 %v1349
      %v1351 = vpop.xlane.xlu0 %1350
      %v1352 = vmul.f32 %v1351, %v1345
      %v1353 = vadd.f32 %v1352, 1e-05
      %v1354 = vrsqrt.pop %v1353
      %v1355 = vmul.f32 %v1347, %v1354
      %v1357 = vlaneseq
      %v1358 = vshrl.u32 %v1357, 7
      %v1359 = vsub.s32 0, %v1358
      %v1360 = vrot.slane %v1340, %v1359
      %v1362 = vmul.f32 %v1355, %v1360
      %v1364 = vlaneseq
      %v1365 = vshrl.u32 %v1364, 7
      %v1366 = vsub.s32 0, %v1365
      %v1367 = vrot.slane %v1341, %v1366
      %v1369 = vadd.f32 %v1362, %v1367
      %v1370 = vld [vmem:[%s7] sm:$0xff]
      %v1371 = vld [vmem:[%s7 + $0x8] sm:$0xff]
      %v1372 = vld [vmem:[%s7 + $0x10] sm:$0xff]
      %v1373 = vld [vmem:[%s7 + $0x18] sm:$0xff]
      %v1374 = vld [vmem:[%s8] sm:$0x1]
      %v1376 = vlaneseq
      %v1377 = vshrl.u32 %v1376, 7
      %v1378 = vsub.s32 0, %v1377
      %v1379 = vrot.slane %v1374, %v1378
      %v1382 = vsel %vm504, %v1369, 0
      %1384 = vmatprep.subr.mxu0 0.0
      %1385 = vmatpush1.msra.mxu0 %v1370
      %1386 = vmatprep.subr.mxu0 0.0
      %1387 = vmatpush1.msra.mxu0 %v1371
      %1388 = vmatprep.subr.mxu0 0.0
      %1389 = vmatpush1.msra.mxu0 %v1372
      %1390 = vmatprep.subr.mxu0 0.0
      %1391 = vmatpush1.msra.mxu0 %v1373
      %1392 = vmatprep.subr.mxu0 0.0
      %1393 = vmatpush1.msra.mxu0 0.0
      %1394 = vmatprep.subr.mxu0 0.0
      %1395 = vmatpush1.msra.mxu0 0.0
      %1396 = vmatprep.subr.mxu0 0.0
      %1397 = vmatpush1.msra.mxu0 0.0
      %1398 = vmatprep.subr.mxu0 0.0
      %1399 = vmatpush1.msra.mxu0 0.0
      %1400 = vmatprep.subr.mxu0 0.0
      %1401 = vmatpush1.msra.mxu0 0.0
      %1402 = vmatprep.subr.mxu0 0.0
      %1403 = vmatpush1.msra.mxu0 0.0
      %1404 = vmatprep.subr.mxu0 0.0
      %1405 = vmatpush1.msra.mxu0 0.0
      %1406 = vmatprep.subr.mxu0 0.0
      %1407 = vmatpush1.msra.mxu0 0.0
      %1408 = vmatprep.subr.mxu0 0.0
      %1409 = vmatpush1.msra.mxu0 0.0
      %1410 = vmatprep.subr.mxu0 0.0
      %1411 = vmatpush1.msra.mxu0 0.0
      %1412 = vmatprep.subr.mxu0 0.0
      %1413 = vmatpush1.msra.mxu0 0.0
      %1414 = vmatprep.subr.mxu0 0.0
      %1415 = vmatpush1.msra.mxu0 0.0
      %1416 = vmatprep.subr.mxu0 0.0
      %1417 = vmatpush1.msra.mxu0 0.0
      %1418 = vmatprep.subr.mxu0 0.0
      %1419 = vmatpush1.msra.mxu0 0.0
      %1420 = vmatprep.subr.mxu0 0.0
      %1421 = vmatpush1.msra.mxu0 0.0
      %1422 = vmatprep.subr.mxu0 0.0
      %1423 = vmatpush1.msra.mxu0 0.0
      %1424 = vmatprep.subr.mxu0 0.0
      %1425 = vmatpush1.msra.mxu0 0.0
      %1426 = vmatprep.subr.mxu0 0.0
      %1427 = vmatpush1.msra.mxu0 0.0
      %1428 = vmatprep.subr.mxu0 0.0
      %1429 = vmatpush1.msra.mxu0 0.0
      %1430 = vmatprep.subr.mxu0 0.0
      %1431 = vmatpush1.msra.mxu0 0.0
      %1432 = vmatprep.subr.mxu0 0.0
      %1433 = vmatpush1.msra.mxu0 0.0
      %1434 = vmatprep.subr.mxu0 0.0
      %1435 = vmatpush1.msra.mxu0 0.0
      %1436 = vmatprep.subr.mxu0 0.0
      %1437 = vmatpush1.msra.mxu0 0.0
      %1438 = vmatprep.subr.mxu0 0.0
      %1439 = vmatpush1.msra.mxu0 0.0
      %1440 = vmatprep.subr.mxu0 0.0
      %1441 = vmatpush1.msra.mxu0 0.0
      %1442 = vmatprep.subr.mxu0 0.0
      %1443 = vmatpush1.msra.mxu0 0.0
      %1444 = vmatprep.subr.mxu0 0.0
      %1445 = vmatpush1.msra.mxu0 0.0
      %1446 = vmatprep.subr.mxu0 0.0
      %1447 = vmatpush1.msra.mxu0 0.0
      %1448 = vmatprep.mubr.f32.mxu0 0.0
      %1449 = vmatmul.mubr.f32.gmra.mrb[0].mxu0 %v1382
      %v1450 = vpop.f32.mrb[0].mxu0
      %v1451 = vadd.f32 %v1379, %v1450
      %v1452 = vpop.f32.mrb[0].mxu0
      %1453 = vdwg.mxu0
      %v1454 = vmax.f32 %v1451, 0.0
      %v1455 = vld [vmem:[%s9] sm:$0xff]
      %v1456 = vld [vmem:[%s9 + $0x8] sm:$0xff]
      %v1457 = vld [vmem:[%s9 + $0x10] sm:$0xff]
      %v1458 = vld [vmem:[%s9 + $0x18] sm:$0xff]
      %v1459 = vld [vmem:[%s9 + $0x20] sm:$0xff]
      %v1460 = vld [vmem:[%s9 + $0x28] sm:$0xff]
      %v1461 = vld [vmem:[%s9 + $0x30] sm:$0xff]
      %v1462 = vld [vmem:[%s9 + $0x38] sm:$0xff]
      %v1463 = vld [vmem:[%s10] sm:$0x1]
      %v1465 = vlaneseq
      %v1466 = vshrl.u32 %v1465, 7
      %v1467 = vsub.s32 0, %v1466
      %v1468 = vrot.slane %v1463, %v1467
      %vm1470 = vcmask 523264
      %v1472 = vsel %vm1470, %v1454, 0
      %1474 = vmatprep.subr.mxu0 0.0
      %1475 = vmatpush1.msra.mxu0 %v1455
      %1476 = vmatprep.subr.mxu0 0.0
      %1477 = vmatpush1.msra.mxu0 %v1456
      %1478 = vmatprep.subr.mxu0 0.0
      %1479 = vmatpush1.msra.mxu0 %v1457
      %1480 = vmatprep.subr.mxu0 0.0
      %1481 = vmatpush1.msra.mxu0 %v1458
      %1482 = vmatprep.subr.mxu0 0.0
      %1483 = vmatpush1.msra.mxu0 %v1459
      %1484 = vmatprep.subr.mxu0 0.0
      %1485 = vmatpush1.msra.mxu0 %v1460
      %1486 = vmatprep.subr.mxu0 0.0
      %1487 = vmatpush1.msra.mxu0 %v1461
      %1488 = vmatprep.subr.mxu0 0.0
      %1489 = vmatpush1.msra.mxu0 %v1462
      %1490 = vmatprep.subr.mxu0 0.0
      %1491 = vmatpush1.msra.mxu0 0.0
      %1492 = vmatprep.subr.mxu0 0.0
      %1493 = vmatpush1.msra.mxu0 0.0
      %1494 = vmatprep.subr.mxu0 0.0
      %1495 = vmatpush1.msra.mxu0 0.0
      %1496 = vmatprep.subr.mxu0 0.0
      %1497 = vmatpush1.msra.mxu0 0.0
      %1498 = vmatprep.subr.mxu0 0.0
      %1499 = vmatpush1.msra.mxu0 0.0
      %1500 = vmatprep.subr.mxu0 0.0
      %1501 = vmatpush1.msra.mxu0 0.0
      %1502 = vmatprep.subr.mxu0 0.0
      %1503 = vmatpush1.msra.mxu0 0.0
      %1504 = vmatprep.subr.mxu0 0.0
      %1505 = vmatpush1.msra.mxu0 0.0
      %1506 = vmatprep.subr.mxu0 0.0
      %1507 = vmatpush1.msra.mxu0 0.0
      %1508 = vmatprep.subr.mxu0 0.0
      %1509 = vmatpush1.msra.mxu0 0.0
      %1510 = vmatprep.subr.mxu0 0.0
      %1511 = vmatpush1.msra.mxu0 0.0
      %1512 = vmatprep.subr.mxu0 0.0
      %1513 = vmatpush1.msra.mxu0 0.0
      %1514 = vmatprep.subr.mxu0 0.0
      %1515 = vmatpush1.msra.mxu0 0.0
      %1516 = vmatprep.subr.mxu0 0.0
      %1517 = vmatpush1.msra.mxu0 0.0
      %1518 = vmatprep.subr.mxu0 0.0
      %1519 = vmatpush1.msra.mxu0 0.0
      %1520 = vmatprep.subr.mxu0 0.0
      %1521 = vmatpush1.msra.mxu0 0.0
      %1522 = vmatprep.subr.mxu0 0.0
      %1523 = vmatpush1.msra.mxu0 0.0
      %1524 = vmatprep.subr.mxu0 0.0
      %1525 = vmatpush1.msra.mxu0 0.0
      %1526 = vmatprep.subr.mxu0 0.0
      %1527 = vmatpush1.msra.mxu0 0.0
      %1528 = vmatprep.subr.mxu0 0.0
      %1529 = vmatpush1.msra.mxu0 0.0
      %1530 = vmatprep.subr.mxu0 0.0
      %1531 = vmatpush1.msra.mxu0 0.0
      %1532 = vmatprep.subr.mxu0 0.0
      %1533 = vmatpush1.msra.mxu0 0.0
      %1534 = vmatprep.subr.mxu0 0.0
      %1535 = vmatpush1.msra.mxu0 0.0
      %1536 = vmatprep.subr.mxu0 0.0
      %1537 = vmatpush1.msra.mxu0 0.0
      %1538 = vmatprep.mubr.f32.mxu0 0.0
      %1539 = vmatmul.mubr.f32.gmra.mrb[0].mxu0 %v1472
      %v1540 = vpop.f32.mrb[0].mxu0
      %v1541 = vadd.f32 %v1468, %v1540
      %v1542 = vpop.f32.mrb[0].mxu0
      %1543 = vdwg.mxu0
      %v1544 = vadd.f32 %v1369, %v1541
      %v1545 = vld [vmem:[%s11] sm:$0x1]
      %v1546 = vld [vmem:[%s12] sm:$0x1]
      %v1547 = vsel %vm504, %v1544, 0.0
      %1548 = vadd.xlane.f32.xlu0 %v1547
      %v1549 = vpop.xlane.xlu0 %1548
      %v1550 = vmul.f32 %v1549, %v1345
      %v1551 = vsub.f32 %v1544, %v1550
      %v1552 = vmul.f32 %v1551, %v1551
      %v1553 = vsel %vm504, %v1552, 0.0
      %1554 = vadd.xlane.f32.xlu0 %v1553
      %v1555 = vpop.xlane.xlu0 %1554
      %v1556 = vmul.f32 %v1555, %v1345
      %v1557 = vadd.f32 %v1556, 1e-05
      %v1558 = vrsqrt.pop %v1557
      %v1559 = vmul.f32 %v1551, %v1558
      %v1561 = vlaneseq
      %v1562 = vshrl.u32 %v1561, 7
      %v1563 = vsub.s32 0, %v1562
      %v1564 = vrot.slane %v1545, %v1563
      %v1566 = vmul.f32 %v1559, %v1564
      %v1568 = vlaneseq
      %v1569 = vshrl.u32 %v1568, 7
      %v1570 = vsub.s32 0, %v1569
      %v1571 = vrot.slane %v1546, %v1570
      %v1573 = vadd.f32 %v1566, %v1571
      %s1574 = scalar_lea.vmem %s1, 32
      %v1575 = vld [vmem:[%s1574] sm:$0xff]
      %v1576 = vld [vmem:[%s1574 + $0x8] sm:$0xff]
      %v1577 = vld [vmem:[%s1574 + $0x10] sm:$0xff]
      %v1578 = vld [vmem:[%s1574 + $0x18] sm:$0xff]
      %s1579 = scalar_lea.vmem %s2, 1
      %v1580 = vld [vmem:[%s1579] sm:$0x1]
      %v1582 = vlaneseq
      %v1583 = vshrl.u32 %v1582, 7
      %v1584 = vsub.s32 0, %v1583
      %v1585 = vrot.slane %v1580, %v1584
      %v1588 = vsel %vm504, %v1573, 0
      %1590 = vmatprep.subr.mxu0 0.0
      %1591 = vmatpush1.msra.mxu0 %v1575
      %1592 = vmatprep.subr.mxu0 0.0
      %1593 = vmatpush1.msra.mxu0 %v1576
      %1594 = vmatprep.subr.mxu0 0.0
      %1595 = vmatpush1.msra.mxu0 %v1577
      %1596 = vmatprep.subr.mxu0 0.0
      %1597 = vmatpush1.msra.mxu0 %v1578
      %1598 = vmatprep.subr.mxu0 0.0
      %1599 = vmatpush1.msra.mxu0 0.0
      %1600 = vmatprep.subr.mxu0 0.0
      %1601 = vmatpush1.msra.mxu0 0.0
      %1602 = vmatprep.subr.mxu0 0.0
      %1603 = vmatpush1.msra.mxu0 0.0
      %1604 = vmatprep.subr.mxu0 0.0
      %1605 = vmatpush1.msra.mxu0 0.0
      %1606 = vmatprep.subr.mxu0 0.0
      %1607 = vmatpush1.msra.mxu0 0.0
      %1608 = vmatprep.subr.mxu0 0.0
      %1609 = vmatpush1.msra.mxu0 0.0
      %1610 = vmatprep.subr.mxu0 0.0
      %1611 = vmatpush1.msra.mxu0 0.0
      %1612 = vmatprep.subr.mxu0 0.0
      %1613 = vmatpush1.msra.mxu0 0.0
      %1614 = vmatprep.subr.mxu0 0.0
      %1615 = vmatpush1.msra.mxu0 0.0
      %1616 = vmatprep.subr.mxu0 0.0
      %1617 = vmatpush1.msra.mxu0 0.0
      %1618 = vmatprep.subr.mxu0 0.0
      %1619 = vmatpush1.msra.mxu0 0.0
      %1620 = vmatprep.subr.mxu0 0.0
      %1621 = vmatpush1.msra.mxu0 0.0
      %1622 = vmatprep.subr.mxu0 0.0
      %1623 = vmatpush1.msra.mxu0 0.0
      %1624 = vmatprep.subr.mxu0 0.0
      %1625 = vmatpush1.msra.mxu0 0.0
      %1626 = vmatprep.subr.mxu0 0.0
      %1627 = vmatpush1.msra.mxu0 0.0
      %1628 = vmatprep.subr.mxu0 0.0
      %1629 = vmatpush1.msra.mxu0 0.0
      %1630 = vmatprep.subr.mxu0 0.0
      %1631 = vmatpush1.msra.mxu0 0.0
      %1632 = vmatprep.subr.mxu0 0.0
      %1633 = vmatpush1.msra.mxu0 0.0
      %1634 = vmatprep.subr.mxu0 0.0
      %1635 = vmatpush1.msra.mxu0 0.0
      %1636 = vmatprep.subr.mxu0 0.0
      %1637 = vmatpush1.msra.mxu0 0.0
      %1638 = vmatprep.subr.mxu0 0.0
      %1639 = vmatpush1.msra.mxu0 0.0
      %1640 = vmatprep.subr.mxu0 0.0
      %1641 = vmatpush1.msra.mxu0 0.0
      %1642 = vmatprep.subr.mxu0 0.0
      %1643 = vmatpush1.msra.mxu0 0.0
      %1644 = vmatprep.subr.mxu0 0.0
      %1645 = vmatpush1.msra.mxu0 0.0
      %1646 = vmatprep.subr.mxu0 0.0
      %1647 = vmatpush1.msra.mxu0 0.0
      %1648 = vmatprep.subr.mxu0 0.0
      %1649 = vmatpush1.msra.mxu0 0.0
      %1650 = vmatprep.subr.mxu0 0.0
      %1651 = vmatpush1.msra.mxu0 0.0
      %1652 = vmatprep.subr.mxu0 0.0
      %1653 = vmatpush1.msra.mxu0 0.0
      %1654 = vmatprep.mubr.f32.mxu0 0.0
      %1655 = vmatmul.mubr.f32.gmra.mrb[0].mxu0 %v1588
      %v1656 = vpop.f32.mrb[0].mxu0
      %v1657 = vadd.f32 %v1585, %v1656
      %v1658 = vpop.f32.mrb[0].mxu0
      %1659 = vdwg.mxu0
      %1661 = vrot.lane.b32.xlu0 %v1657, 96
      %v1662 = vpop.permute.xlu0 %1661
      %v1663 = vsel %vm581, %v1657, 0
      %v1665 = vsel %vm581, %v1662, 0
      %1667 = vmatprep.subr.mxu0 0.0
      %1668 = vmatpush1.xpose.msra.mxu0 %v1665
      %1669 = vmatprep.subr.mxu0 0.0
      %1670 = vmatpush1.xpose.msra.mxu0 0.0
      %1671 = vmatprep.subr.mxu0 0.0
      %1672 = vmatpush1.xpose.msra.mxu0 0.0
      %1673 = vmatprep.subr.mxu0 0.0
      %1674 = vmatpush1.xpose.msra.mxu0 0.0
      %1675 = vmatprep.subr.mxu0 0.0
      %1676 = vmatpush1.xpose.msra.mxu0 0.0
      %1677 = vmatprep.subr.mxu0 0.0
      %1678 = vmatpush1.xpose.msra.mxu0 0.0
      %1679 = vmatprep.subr.mxu0 0.0
      %1680 = vmatpush1.xpose.msra.mxu0 0.0
      %1681 = vmatprep.subr.mxu0 0.0
      %1682 = vmatpush1.xpose.msra.mxu0 0.0
      %1683 = vmatprep.subr.mxu0 0.0
      %1684 = vmatpush1.xpose.msra.mxu0 0.0
      %1685 = vmatprep.subr.mxu0 0.0
      %1686 = vmatpush1.xpose.msra.mxu0 0.0
      %1687 = vmatprep.subr.mxu0 0.0
      %1688 = vmatpush1.xpose.msra.mxu0 0.0
      %1689 = vmatprep.subr.mxu0 0.0
      %1690 = vmatpush1.xpose.msra.mxu0 0.0
      %1691 = vmatprep.subr.mxu0 0.0
      %1692 = vmatpush1.xpose.msra.mxu0 0.0
      %1693 = vmatprep.subr.mxu0 0.0
      %1694 = vmatpush1.xpose.msra.mxu0 0.0
      %1695 = vmatprep.subr.mxu0 0.0
      %1696 = vmatpush1.xpose.msra.mxu0 0.0
      %1697 = vmatprep.subr.mxu0 0.0
      %1698 = vmatpush1.xpose.msra.mxu0 0.0
      %1699 = vmatprep.subr.mxu0 0.0
      %1700 = vmatpush1.xpose.msra.mxu0 0.0
      %1701 = vmatprep.subr.mxu0 0.0
      %1702 = vmatpush1.xpose.msra.mxu0 0.0
      %1703 = vmatprep.subr.mxu0 0.0
      %1704 = vmatpush1.xpose.msra.mxu0 0.0
      %1705 = vmatprep.subr.mxu0 0.0
      %1706 = vmatpush1.xpose.msra.mxu0 0.0
      %1707 = vmatprep.subr.mxu0 0.0
      %1708 = vmatpush1.xpose.msra.mxu0 0.0
      %1709 = vmatprep.subr.mxu0 0.0
      %1710 = vmatpush1.xpose.msra.mxu0 0.0
      %1711 = vmatprep.subr.mxu0 0.0
      %1712 = vmatpush1.xpose.msra.mxu0 0.0
      %1713 = vmatprep.subr.mxu0 0.0
      %1714 = vmatpush1.xpose.msra.mxu0 0.0
      %1715 = vmatprep.subr.mxu0 0.0
      %1716 = vmatpush1.xpose.msra.mxu0 0.0
      %1717 = vmatprep.subr.mxu0 0.0
      %1718 = vmatpush1.xpose.msra.mxu0 0.0
      %1719 = vmatprep.subr.mxu0 0.0
      %1720 = vmatpush1.xpose.msra.mxu0 0.0
      %1721 = vmatprep.subr.mxu0 0.0
      %1722 = vmatpush1.xpose.msra.mxu0 0.0
      %1723 = vmatprep.subr.mxu0 0.0
      %1724 = vmatpush1.xpose.msra.mxu0 0.0
      %1725 = vmatprep.subr.mxu0 0.0
      %1726 = vmatpush1.xpose.msra.mxu0 0.0
      %1727 = vmatprep.subr.mxu0 0.0
      %1728 = vmatpush1.xpose.msra.mxu0 0.0
      %1729 = vmatprep.subr.mxu0 0.0
      %1730 = vmatpush1.xpose.msra.mxu0 0.0
      %1731 = vmatprep.mubr.f32.mxu0 0.0
      %1732 = vmatmul.mubr.f32.gmra.mrb[0].mxu0 %v1663
      %v1733 = vpop.f32.mrb[0].mxu0
      %v1734 = vadd.f32 0.0, %v1733
      %v1735 = vpop.f32.mrb[0].mxu0
      %1736 = vdwg.mxu0
      %v1737 = vsel %vm581, %v1734, -inf
      %1738 = vmax.xlane.f32.xlu0 %v1737
      %v1739 = vpop.xlane.xlu0 %1738
      %v1740 = vsub.f32 %v1734, %v1739
      %v1741 = vmul.f32 %v1740, 1.442695
      %v1742 = vpow.pop %v1741
      %v1743 = vsel %vm581, %v1742, 0.0
      %1744 = vadd.xlane.f32.xlu0 %v1743
      %v1745 = vpop.xlane.xlu0 %1744
      %v1746 = vrcp.pop %v1745
      %v1747 = vmul.f32 %v1742, %v1746
      %1748 = vrot.lane.b32.xlu0 %v1657, 64
      %v1749 = vpop.permute.xlu0 %1748
      %v1752 = vsel %vm581, %v1747, 0
      %1754 = vmatprep.subr.mxu0 0.0
      %1755 = vmatpush1.msra.mxu0 %v1749
      %1756 = vmatprep.subr.mxu0 0.0
      %1757 = vmatpush1.msra.mxu0 0.0
      %1758 = vmatprep.subr.mxu0 0.0
      %1759 = vmatpush1.msra.mxu0 0.0
      %1760 = vmatprep.subr.mxu0 0.0
      %1761 = vmatpush1.msra.mxu0 0.0
      %1762 = vmatprep.subr.mxu0 0.0
      %1763 = vmatpush1.msra.mxu0 0.0
      %1764 = vmatprep.subr.mxu0 0.0
      %1765 = vmatpush1.msra.mxu0 0.0
      %1766 = vmatprep.subr.mxu0 0.0
      %1767 = vmatpush1.msra.mxu0 0.0
      %1768 = vmatprep.subr.mxu0 0.0
      %1769 = vmatpush1.msra.mxu0 0.0
      %1770 = vmatprep.subr.mxu0 0.0
      %1771 = vmatpush1.msra.mxu0 0.0
      %1772 = vmatprep.subr.mxu0 0.0
      %1773 = vmatpush1.msra.mxu0 0.0
      %1774 = vmatprep.subr.mxu0 0.0
      %1775 = vmatpush1.msra.mxu0 0.0
      %1776 = vmatprep.subr.mxu0 0.0
      %1777 = vmatpush1.msra.mxu0 0.0
      %1778 = vmatprep.subr.mxu0 0.0
      %1779 = vmatpush1.msra.mxu0 0.0
      %1780 = vmatprep.subr.mxu0 0.0
      %1781 = vmatpush1.msra.mxu0 0.0
      %1782 = vmatprep.subr.mxu0 0.0
      %1783 = vmatpush1.msra.mxu0 0.0
      %1784 = vmatprep.subr.mxu0 0.0
      %1785 = vmatpush1.msra.mxu0 0.0
      %1786 = vmatprep.subr.mxu0 0.0
      %1787 = vmatpush1.msra.mxu0 0.0
      %1788 = vmatprep.subr.mxu0 0.0
      %1789 = vmatpush1.msra.mxu0 0.0
      %1790 = vmatprep.subr.mxu0 0.0
      %1791 = vmatpush1.msra.mxu0 0.0
      %1792 = vmatprep.subr.mxu0 0.0
      %1793 = vmatpush1.msra.mxu0 0.0
      %1794 = vmatprep.subr.mxu0 0.0
      %1795 = vmatpush1.msra.mxu0 0.0
      %1796 = vmatprep.subr.mxu0 0.0
      %1797 = vmatpush1.msra.mxu0 0.0
      %1798 = vmatprep.subr.mxu0 0.0
      %1799 = vmatpush1.msra.mxu0 0.0
      %1800 = vmatprep.subr.mxu0 0.0
      %1801 = vmatpush1.msra.mxu0 0.0
      %1802 = vmatprep.subr.mxu0 0.0
      %1803 = vmatpush1.msra.mxu0 0.0
      %1804 = vmatprep.subr.mxu0 0.0
      %1805 = vmatpush1.msra.mxu0 0.0
      %1806 = vmatprep.subr.mxu0 0.0
      %1807 = vmatpush1.msra.mxu0 0.0
      %1808 = vmatprep.subr.mxu0 0.0
      %1809 = vmatpush1.msra.mxu0 0.0
      %1810 = vmatprep.subr.mxu0 0.0
      %1811 = vmatpush1.msra.mxu0 0.0
      %1812 = vmatprep.subr.mxu0 0.0
      %1813 = vmatpush1.msra.mxu0 0.0
      %1814 = vmatprep.subr.mxu0 0.0
      %1815 = vmatpush1.msra.mxu0 0.0
      %1816 = vmatprep.subr.mxu0 0.0
      %1817 = vmatpush1.msra.mxu0 0.0
      %1818 = vmatprep.mubr.f32.mxu0 0.0
      %1819 = vmatmul.mubr.f32.gmra.mrb[0].mxu0 %v1752
      %v1820 = vpop.f32.mrb[0].mxu0
      %v1821 = vadd.f32 0.0, %v1820
      %v1822 = vpop.f32.mrb[0].mxu0
      %1823 = vdwg.mxu0
      %1824 = vrot.lane.b32.xlu0 %v1657, 120
      %v1825 = vpop.permute.xlu0 %1824
      %1826 = vrot.lane.b32.xlu0 %v1657, 88
      %v1827 = vpop.permute.xlu0 %1826
      %v1828 = vsel %vm581, %v1825, 0
      %v1830 = vsel %vm581, %v1827, 0
      %1832 = vmatprep.subr.mxu0 0.0
      %1833 = vmatpush1.xpose.msra.mxu0 %v1830
      %1834 = vmatprep.subr.mxu0 0.0
      %1835 = vmatpush1.xpose.msra.mxu0 0.0
      %1836 = vmatprep.subr.mxu0 0.0
      %1837 = vmatpush1.xpose.msra.mxu0 0.0
      %1838 = vmatprep.subr.mxu0 0.0
      %1839 = vmatpush1.xpose.msra.mxu0 0.0
      %1840 = vmatprep.subr.mxu0 0.0
      %1841 = vmatpush1.xpose.msra.mxu0 0.0
      %1842 = vmatprep.subr.mxu0 0.0
      %1843 = vmatpush1.xpose.msra.mxu0 0.0
      %1844 = vmatprep.subr.mxu0 0.0
      %1845 = vmatpush1.xpose.msra.mxu0 0.0
      %1846 = vmatprep.subr.mxu0 0.0
      %1847 = vmatpush1.xpose.msra.mxu0 0.0
      %1848 = vmatprep.subr.mxu0 0.0
      %1849 = vmatpush1.xpose.msra.mxu0 0.0
      %1850 = vmatprep.subr.mxu0 0.0
      %1851 = vmatpush1.xpose.msra.mxu0 0.0
      %1852 = vmatprep.subr.mxu0 0.0
      %1853 = vmatpush1.xpose.msra.mxu0 0.0
      %1854 = vmatprep.subr.mxu0 0.0
      %1855 = vmatpush1.xpose.msra.mxu0 0.0
      %1856 = vmatprep.subr.mxu0 0.0
      %1857 = vmatpush1.xpose.msra.mxu0 0.0
      %1858 = vmatprep.subr.mxu0 0.0
      %1859 = vmatpush1.xpose.msra.mxu0 0.0
      %1860 = vmatprep.subr.mxu0 0.0
      %1861 = vmatpush1.xpose.msra.mxu0 0.0
      %1862 = vmatprep.subr.mxu0 0.0
      %1863 = vmatpush1.xpose.msra.mxu0 0.0
      %1864 = vmatprep.subr.mxu0 0.0
      %1865 = vmatpush1.xpose.msra.mxu0 0.0
      %1866 = vmatprep.subr.mxu0 0.0
      %1867 = vmatpush1.xpose.msra.mxu0 0.0
      %1868 = vmatprep.subr.mxu0 0.0
      %1869 = vmatpush1.xpose.msra.mxu0 0.0
      %1870 = vmatprep.subr.mxu0 0.0
      %1871 = vmatpush1.xpose.msra.mxu0 0.0
      %1872 = vmatprep.subr.mxu0 0.0
      %1873 = vmatpush1.xpose.msra.mxu0 0.0
      %1874 = vmatprep.subr.mxu0 0.0
      %1875 = vmatpush1.xpose.msra.mxu0 0.0
      %1876 = vmatprep.subr.mxu0 0.0
      %1877 = vmatpush1.xpose.msra.mxu0 0.0
      %1878 = vmatprep.subr.mxu0 0.0
      %1879 = vmatpush1.xpose.msra.mxu0 0.0
      %1880 = vmatprep.subr.mxu0 0.0
      %1881 = vmatpush1.xpose.msra.mxu0 0.0
      %1882 = vmatprep.subr.mxu0 0.0
      %1883 = vmatpush1.xpose.msra.mxu0 0.0
      %1884 = vmatprep.subr.mxu0 0.0
      %1885 = vmatpush1.xpose.msra.mxu0 0.0
      %1886 = vmatprep.subr.mxu0 0.0
      %1887 = vmatpush1.xpose.msra.mxu0 0.0
      %1888 = vmatprep.subr.mxu0 0.0
      %1889 = vmatpush1.xpose.msra.mxu0 0.0
      %1890 = vmatprep.subr.mxu0 0.0
      %1891 = vmatpush1.xpose.msra.mxu0 0.0
      %1892 = vmatprep.subr.mxu0 0.0
      %1893 = vmatpush1.xpose.msra.mxu0 0.0
      %1894 = vmatprep.subr.mxu0 0.0
      %1895 = vmatpush1.xpose.msra.mxu0 0.0
      %1896 = vmatprep.mubr.f32.mxu0 0.0
      %1897 = vmatmul.mubr.f32.gmra.mrb[0].mxu0 %v1828
      %v1898 = vpop.f32.mrb[0].mxu0
      %v1899 = vadd.f32 0.0, %v1898
      %v1900 = vpop.f32.mrb[0].mxu0
      %1901 = vdwg.mxu0
      %v1902 = vsel %vm581, %v1899, -inf
      %1903 = vmax.xlane.f32.xlu0 %v1902
      %v1904 = vpop.xlane.xlu0 %1903
      %v1905 = vsub.f32 %v1899, %v1904
      %v1906 = vmul.f32 %v1905, 1.442695
      %v1907 = vpow.pop %v1906
      %v1908 = vsel %vm581, %v1907, 0.0
      %1909 = vadd.xlane.f32.xlu0 %v1908
      %v1910 = vpop.xlane.xlu0 %1909
      %v1911 = vrcp.pop %v1910
      %v1912 = vmul.f32 %v1907, %v1911
      %1913 = vrot.lane.b32.xlu0 %v1657, 56
      %v1914 = vpop.permute.xlu0 %1913
      %v1917 = vsel %vm581, %v1912, 0
      %1919 = vmatprep.subr.mxu0 0.0
      %1920 = vmatpush1.msra.mxu0 %v1914
      %1921 = vmatprep.subr.mxu0 0.0
      %1922 = vmatpush1.msra.mxu0 0.0
      %1923 = vmatprep.subr.mxu0 0.0
      %1924 = vmatpush1.msra.mxu0 0.0
      %1925 = vmatprep.subr.mxu0 0.0
      %1926 = vmatpush1.msra.mxu0 0.0
      %1927 = vmatprep.subr.mxu0 0.0
      %1928 = vmatpush1.msra.mxu0 0.0
      %1929 = vmatprep.subr.mxu0 0.0
      %1930 = vmatpush1.msra.mxu0 0.0
      %1931 = vmatprep.subr.mxu0 0.0
      %1932 = vmatpush1.msra.mxu0 0.0
      %1933 = vmatprep.subr.mxu0 0.0
      %1934 = vmatpush1.msra.mxu0 0.0
      %1935 = vmatprep.subr.mxu0 0.0
      %1936 = vmatpush1.msra.mxu0 0.0
      %1937 = vmatprep.subr.mxu0 0.0
      %1938 = vmatpush1.msra.mxu0 0.0
      %1939 = vmatprep.subr.mxu0 0.0
      %1940 = vmatpush1.msra.mxu0 0.0
      %1941 = vmatprep.subr.mxu0 0.0
      %1942 = vmatpush1.msra.mxu0 0.0
      %1943 = vmatprep.subr.mxu0 0.0
      %1944 = vmatpush1.msra.mxu0 0.0
      %1945 = vmatprep.subr.mxu0 0.0
      %1946 = vmatpush1.msra.mxu0 0.0
      %1947 = vmatprep.subr.mxu0 0.0
      %1948 = vmatpush1.msra.mxu0 0.0
      %1949 = vmatprep.subr.mxu0 0.0
      %1950 = vmatpush1.msra.mxu0 0.0
      %1951 = vmatprep.subr.mxu0 0.0
      %1952 = vmatpush1.msra.mxu0 0.0
      %1953 = vmatprep.subr.mxu0 0.0
      %1954 = vmatpush1.msra.mxu0 0.0
      %1955 = vmatprep.subr.mxu0 0.0
      %1956 = vmatpush1.msra.mxu0 0.0
      %1957 = vmatprep.subr.mxu0 0.0
      %1958 = vmatpush1.msra.mxu0 0.0
      %1959 = vmatprep.subr.mxu0 0.0
      %1960 = vmatpush1.msra.mxu0 0.0
      %1961 = vmatprep.subr.mxu0 0.0
      %1962 = vmatpush1.msra.mxu0 0.0
      %1963 = vmatprep.subr.mxu0 0.0
      %1964 = vmatpush1.msra.mxu0 0.0
      %1965 = vmatprep.subr.mxu0 0.0
      %1966 = vmatpush1.msra.mxu0 0.0
      %1967 = vmatprep.subr.mxu0 0.0
      %1968 = vmatpush1.msra.mxu0 0.0
      %1969 = vmatprep.subr.mxu0 0.0
      %1970 = vmatpush1.msra.mxu0 0.0
      %1971 = vmatprep.subr.mxu0 0.0
      %1972 = vmatpush1.msra.mxu0 0.0
      %1973 = vmatprep.subr.mxu0 0.0
      %1974 = vmatpush1.msra.mxu0 0.0
      %1975 = vmatprep.subr.mxu0 0.0
      %1976 = vmatpush1.msra.mxu0 0.0
      %1977 = vmatprep.subr.mxu0 0.0
      %1978 = vmatpush1.msra.mxu0 0.0
      %1979 = vmatprep.subr.mxu0 0.0
      %1980 = vmatpush1.msra.mxu0 0.0
      %1981 = vmatprep.subr.mxu0 0.0
      %1982 = vmatpush1.msra.mxu0 0.0
      %1983 = vmatprep.mubr.f32.mxu0 0.0
      %1984 = vmatmul.mubr.f32.gmra.mrb[0].mxu0 %v1917
      %v1985 = vpop.f32.mrb[0].mxu0
      %v1986 = vadd.f32 0.0, %v1985
      %v1987 = vpop.f32.mrb[0].mxu0
      %1988 = vdwg.mxu0
      %1989 = vrot.lane.b32.xlu0 %v1657, 112
      %v1990 = vpop.permute.xlu0 %1989
      %1991 = vrot.lane.b32.xlu0 %v1657, 80
      %v1992 = vpop.permute.xlu0 %1991
      %v1993 = vsel %vm581, %v1990, 0
      %v1995 = vsel %vm581, %v1992, 0
      %1997 = vmatprep.subr.mxu0 0.0
      %1998 = vmatpush1.xpose.msra.mxu0 %v1995
      %1999 = vmatprep.subr.mxu0 0.0
      %2000 = vmatpush1.xpose.msra.mxu0 0.0
      %2001 = vmatprep.subr.mxu0 0.0
      %2002 = vmatpush1.xpose.msra.mxu0 0.0
      %2003 = vmatprep.subr.mxu0 0.0
      %2004 = vmatpush1.xpose.msra.mxu0 0.0
      %2005 = vmatprep.subr.mxu0 0.0
      %2006 = vmatpush1.xpose.msra.mxu0 0.0
      %2007 = vmatprep.subr.mxu0 0.0
      %2008 = vmatpush1.xpose.msra.mxu0 0.0
      %2009 = vmatprep.subr.mxu0 0.0
      %2010 = vmatpush1.xpose.msra.mxu0 0.0
      %2011 = vmatprep.subr.mxu0 0.0
      %2012 = vmatpush1.xpose.msra.mxu0 0.0
      %2013 = vmatprep.subr.mxu0 0.0
      %2014 = vmatpush1.xpose.msra.mxu0 0.0
      %2015 = vmatprep.subr.mxu0 0.0
      %2016 = vmatpush1.xpose.msra.mxu0 0.0
      %2017 = vmatprep.subr.mxu0 0.0
      %2018 = vmatpush1.xpose.msra.mxu0 0.0
      %2019 = vmatprep.subr.mxu0 0.0
      %2020 = vmatpush1.xpose.msra.mxu0 0.0
      %2021 = vmatprep.subr.mxu0 0.0
      %2022 = vmatpush1.xpose.msra.mxu0 0.0
      %2023 = vmatprep.subr.mxu0 0.0
      %2024 = vmatpush1.xpose.msra.mxu0 0.0
      %2025 = vmatprep.subr.mxu0 0.0
      %2026 = vmatpush1.xpose.msra.mxu0 0.0
      %2027 = vmatprep.subr.mxu0 0.0
      %2028 = vmatpush1.xpose.msra.mxu0 0.0
      %2029 = vmatprep.subr.mxu0 0.0
      %2030 = vmatpush1.xpose.msra.mxu0 0.0
      %2031 = vmatprep.subr.mxu0 0.0
      %2032 = vmatpush1.xpose.msra.mxu0 0.0
      %2033 = vmatprep.subr.mxu0 0.0
      %2034 = vmatpush1.xpose.msra.mxu0 0.0
      %2035 = vmatprep.subr.mxu0 0.0
      %2036 = vmatpush1.xpose.msra.mxu0 0.0
      %2037 = vmatprep.subr.mxu0 0.0
      %2038 = vmatpush1.xpose.msra.mxu0 0.0
      %2039 = vmatprep.subr.mxu0 0.0
      %2040 = vmatpush1.xpose.msra.mxu0 0.0
      %2041 = vmatprep.subr.mxu0 0.0
      %2042 = vmatpush1.xpose.msra.mxu0 0.0
      %2043 = vmatprep.subr.mxu0 0.0
      %2044 = vmatpush1.xpose.msra.mxu0 0.0
      %2045 = vmatprep.subr.mxu0 0.0
      %2046 = vmatpush1.xpose.msra.mxu0 0.0
      %2047 = vmatprep.subr.mxu0 0.0
      %2048 = vmatpush1.xpose.msra.mxu0 0.0
      %2049 = vmatprep.subr.mxu0 0.0
      %2050 = vmatpush1.xpose.msra.mxu0 0.0
      %2051 = vmatprep.subr.mxu0 0.0
      %2052 = vmatpush1.xpose.msra.mxu0 0.0
      %2053 = vmatprep.subr.mxu0 0.0
      %2054 = vmatpush1.xpose.msra.mxu0 0.0
      %2055 = vmatprep.subr.mxu0 0.0
      %2056 = vmatpush1.xpose.msra.mxu0 0.0
      %2057 = vmatprep.subr.mxu0 0.0
      %2058 = vmatpush1.xpose.msra.mxu0 0.0
      %2059 = vmatprep.subr.mxu0 0.0
      %2060 = vmatpush1.xpose.msra.mxu0 0.0
      %2061 = vmatprep.mubr.f32.mxu0 0.0
      %2062 = vmatmul.mubr.f32.gmra.mrb[0].mxu0 %v1993
      %v2063 = vpop.f32.mrb[0].mxu0
      %v2064 = vadd.f32 0.0, %v2063
      %v2065 = vpop.f32.mrb[0].mxu0
      %2066 = vdwg.mxu0
      %v2067 = vsel %vm581, %v2064, -inf
      %2068 = vmax.xlane.f32.xlu0 %v2067
      %v2069 = vpop.xlane.xlu0 %2068
      %v2070 = vsub.f32 %v2064, %v2069
      %v2071 = vmul.f32 %v2070, 1.442695
      %v2072 = vpow.pop %v2071
      %v2073 = vsel %vm581, %v2072, 0.0
      %2074 = vadd.xlane.f32.xlu0 %v2073
      %v2075 = vpop.xlane.xlu0 %2074
      %v2076 = vrcp.pop %v2075
      %v2077 = vmul.f32 %v2072, %v2076
      %2078 = vrot.lane.b32.xlu0 %v1657, 48
      %v2079 = vpop.permute.xlu0 %2078
      %v2082 = vsel %vm581, %v2077, 0
      %2084 = vmatprep.subr.mxu0 0.0
      %2085 = vmatpush1.msra.mxu0 %v2079
      %2086 = vmatprep.subr.mxu0 0.0
      %2087 = vmatpush1.msra.mxu0 0.0
      %2088 = vmatprep.subr.mxu0 0.0
      %2089 = vmatpush1.msra.mxu0 0.0
      %2090 = vmatprep.subr.mxu0 0.0
      %2091 = vmatpush1.msra.mxu0 0.0
      %2092 = vmatprep.subr.mxu0 0.0
      %2093 = vmatpush1.msra.mxu0 0.0
      %2094 = vmatprep.subr.mxu0 0.0
      %2095 = vmatpush1.msra.mxu0 0.0
      %2096 = vmatprep.subr.mxu0 0.0
      %2097 = vmatpush1.msra.mxu0 0.0
      %2098 = vmatprep.subr.mxu0 0.0
      %2099 = vmatpush1.msra.mxu0 0.0
      %2100 = vmatprep.subr.mxu0 0.0
      %2101 = vmatpush1.msra.mxu0 0.0
      %2102 = vmatprep.subr.mxu0 0.0
      %2103 = vmatpush1.msra.mxu0 0.0
      %2104 = vmatprep.subr.mxu0 0.0
      %2105 = vmatpush1.msra.mxu0 0.0
      %2106 = vmatprep.subr.mxu0 0.0
      %2107 = vmatpush1.msra.mxu0 0.0
      %2108 = vmatprep.subr.mxu0 0.0
      %2109 = vmatpush1.msra.mxu0 0.0
      %2110 = vmatprep.subr.mxu0 0.0
      %2111 = vmatpush1.msra.mxu0 0.0
      %2112 = vmatprep.subr.mxu0 0.0
      %2113 = vmatpush1.msra.mxu0 0.0
      %2114 = vmatprep.subr.mxu0 0.0
      %2115 = vmatpush1.msra.mxu0 0.0
      %2116 = vmatprep.subr.mxu0 0.0
      %2117 = vmatpush1.msra.mxu0 0.0
      %2118 = vmatprep.subr.mxu0 0.0
      %2119 = vmatpush1.msra.mxu0 0.0
      %2120 = vmatprep.subr.mxu0 0.0
      %2121 = vmatpush1.msra.mxu0 0.0
      %2122 = vmatprep.subr.mxu0 0.0
      %2123 = vmatpush1.msra.mxu0 0.0
      %2124 = vmatprep.subr.mxu0 0.0
      %2125 = vmatpush1.msra.mxu0 0.0
      %2126 = vmatprep.subr.mxu0 0.0
      %2127 = vmatpush1.msra.mxu0 0.0
      %2128 = vmatprep.subr.mxu0 0.0
      %2129 = vmatpush1.msra.mxu0 0.0
      %2130 = vmatprep.subr.mxu0 0.0
      %2131 = vmatpush1.msra.mxu0 0.0
      %2132 = vmatprep.subr.mxu0 0.0
      %2133 = vmatpush1.msra.mxu0 0.0
      %2134 = vmatprep.subr.mxu0 0.0
      %2135 = vmatpush1.msra.mxu0 0.0
      %2136 = vmatprep.subr.mxu0 0.0
      %2137 = vmatpush1.msra.mxu0 0.0
      %2138 = vmatprep.subr.mxu0 0.0
      %2139 = vmatpush1.msra.mxu0 0.0
      %2140 = vmatprep.subr.mxu0 0.0
      %2141 = vmatpush1.msra.mxu0 0.0
      %2142 = vmatprep.subr.mxu0 0.0
      %2143 = vmatpush1.msra.mxu0 0.0
      %2144 = vmatprep.subr.mxu0 0.0
      %2145 = vmatpush1.msra.mxu0 0.0
      %2146 = vmatprep.subr.mxu0 0.0
      %2147 = vmatpush1.msra.mxu0 0.0
      %2148 = vmatprep.mubr.f32.mxu0 0.0
      %2149 = vmatmul.mubr.f32.gmra.mrb[0].mxu0 %v2082
      %v2150 = vpop.f32.mrb[0].mxu0
      %v2151 = vadd.f32 0.0, %v2150
      %v2152 = vpop.f32.mrb[0].mxu0
      %2153 = vdwg.mxu0
      %2154 = vrot.lane.b32.xlu0 %v1657, 104
      %v2155 = vpop.permute.xlu0 %2154
      %2156 = vrot.lane.b32.xlu0 %v1657, 72
      %v2157 = vpop.permute.xlu0 %2156
      %v2158 = vsel %vm581, %v2155, 0
      %v2160 = vsel %vm581, %v2157, 0
      %2162 = vmatprep.subr.mxu0 0.0
      %2163 = vmatpush1.xpose.msra.mxu0 %v2160
      %2164 = vmatprep.subr.mxu0 0.0
      %2165 = vmatpush1.xpose.msra.mxu0 0.0
      %2166 = vmatprep.subr.mxu0 0.0
      %2167 = vmatpush1.xpose.msra.mxu0 0.0
      %2168 = vmatprep.subr.mxu0 0.0
      %2169 = vmatpush1.xpose.msra.mxu0 0.0
      %2170 = vmatprep.subr.mxu0 0.0
      %2171 = vmatpush1.xpose.msra.mxu0 0.0
      %2172 = vmatprep.subr.mxu0 0.0
      %2173 = vmatpush1.xpose.msra.mxu0 0.0
      %2174 = vmatprep.subr.mxu0 0.0
      %2175 = vmatpush1.xpose.msra.mxu0 0.0
      %2176 = vmatprep.subr.mxu0 0.0
      %2177 = vmatpush1.xpose.msra.mxu0 0.0
      %2178 = vmatprep.subr.mxu0 0.0
      %2179 = vmatpush1.xpose.msra.mxu0 0.0
      %2180 = vmatprep.subr.mxu0 0.0
      %2181 = vmatpush1.xpose.msra.mxu0 0.0
      %2182 = vmatprep.subr.mxu0 0.0
      %2183 = vmatpush1.xpose.msra.mxu0 0.0
      %2184 = vmatprep.subr.mxu0 0.0
      %2185 = vmatpush1.xpose.msra.mxu0 0.0
      %2186 = vmatprep.subr.mxu0 0.0
      %2187 = vmatpush1.xpose.msra.mxu0 0.0
      %2188 = vmatprep.subr.mxu0 0.0
      %2189 = vmatpush1.xpose.msra.mxu0 0.0
      %2190 = vmatprep.subr.mxu0 0.0
      %2191 = vmatpush1.xpose.msra.mxu0 0.0
      %2192 = vmatprep.subr.mxu0 0.0
      %2193 = vmatpush1.xpose.msra.mxu0 0.0
      %2194 = vmatprep.subr.mxu0 0.0
      %2195 = vmatpush1.xpose.msra.mxu0 0.0
      %2196 = vmatprep.subr.mxu0 0.0
      %2197 = vmatpush1.xpose.msra.mxu0 0.0
      %2198 = vmatprep.subr.mxu0 0.0
      %2199 = vmatpush1.xpose.msra.mxu0 0.0
      %2200 = vmatprep.subr.mxu0 0.0
      %2201 = vmatpush1.xpose.msra.mxu0 0.0
      %2202 = vmatprep.subr.mxu0 0.0
      %2203 = vmatpush1.xpose.msra.mxu0 0.0
      %2204 = vmatprep.subr.mxu0 0.0
      %2205 = vmatpush1.xpose.msra.mxu0 0.0
      %2206 = vmatprep.subr.mxu0 0.0
      %2207 = vmatpush1.xpose.msra.mxu0 0.0
      %2208 = vmatprep.subr.mxu0 0.0
      %2209 = vmatpush1.xpose.msra.mxu0 0.0
      %2210 = vmatprep.subr.mxu0 0.0
      %2211 = vmatpush1.xpose.msra.mxu0 0.0
      %2212 = vmatprep.subr.mxu0 0.0
      %2213 = vmatpush1.xpose.msra.mxu0 0.0
      %2214 = vmatprep.subr.mxu0 0.0
      %2215 = vmatpush1.xpose.msra.mxu0 0.0
      %2216 = vmatprep.subr.mxu0 0.0
      %2217 = vmatpush1.xpose.msra.mxu0 0.0
      %2218 = vmatprep.subr.mxu0 0.0
      %2219 = vmatpush1.xpose.msra.mxu0 0.0
      %2220 = vmatprep.subr.mxu0 0.0
      %2221 = vmatpush1.xpose.msra.mxu0 0.0
      %2222 = vmatprep.subr.mxu0 0.0
      %2223 = vmatpush1.xpose.msra.mxu0 0.0
      %2224 = vmatprep.subr.mxu0 0.0
      %2225 = vmatpush1.xpose.msra.mxu0 0.0
      %2226 = vmatprep.mubr.f32.mxu0 0.0
      %2227 = vmatmul.mubr.f32.gmra.mrb[0].mxu0 %v2158
      %v2228 = vpop.f32.mrb[0].mxu0
      %v2229 = vadd.f32 0.0, %v2228
      %v2230 = vpop.f32.mrb[0].mxu0
      %2231 = vdwg.mxu0
      %v2232 = vsel %vm581, %v2229, -inf
      %2233 = vmax.xlane.f32.xlu0 %v2232
      %v2234 = vpop.xlane.xlu0 %2233
      %v2235 = vsub.f32 %v2229, %v2234
      %v2236 = vmul.f32 %v2235, 1.442695
      %v2237 = vpow.pop %v2236
      %v2238 = vsel %vm581, %v2237, 0.0
      %2239 = vadd.xlane.f32.xlu0 %v2238
      %v2240 = vpop.xlane.xlu0 %2239
      %v2241 = vrcp.pop %v2240
      %v2242 = vmul.f32 %v2237, %v2241
      %2243 = vrot.lane.b32.xlu0 %v1657, 40
      %v2244 = vpop.permute.xlu0 %2243
      %v2247 = vsel %vm581, %v2242, 0
      %2249 = vmatprep.subr.mxu0 0.0
      %2250 = vmatpush1.msra.mxu0 %v2244
      %2251 = vmatprep.subr.mxu0 0.0
      %2252 = vmatpush1.msra.mxu0 0.0
      %2253 = vmatprep.subr.mxu0 0.0
      %2254 = vmatpush1.msra.mxu0 0.0
      %2255 = vmatprep.subr.mxu0 0.0
      %2256 = vmatpush1.msra.mxu0 0.0
      %2257 = vmatprep.subr.mxu0 0.0
      %2258 = vmatpush1.msra.mxu0 0.0
      %2259 = vmatprep.subr.mxu0 0.0
      %2260 = vmatpush1.msra.mxu0 0.0
      %2261 = vmatprep.subr.mxu0 0.0
      %2262 = vmatpush1.msra.mxu0 0.0
      %2263 = vmatprep.subr.mxu0 0.0
      %2264 = vmatpush1.msra.mxu0 0.0
      %2265 = vmatprep.subr.mxu0 0.0
      %2266 = vmatpush1.msra.mxu0 0.0
      %2267 = vmatprep.subr.mxu0 0.0
      %2268 = vmatpush1.msra.mxu0 0.0
      %2269 = vmatprep.subr.mxu0 0.0
      %2270 = vmatpush1.msra.mxu0 0.0
      %2271 = vmatprep.subr.mxu0 0.0
      %2272 = vmatpush1.msra.mxu0 0.0
      %2273 = vmatprep.subr.mxu0 0.0
      %2274 = vmatpush1.msra.mxu0 0.0
      %2275 = vmatprep.subr.mxu0 0.0
      %2276 = vmatpush1.msra.mxu0 0.0
      %2277 = vmatprep.subr.mxu0 0.0
      %2278 = vmatpush1.msra.mxu0 0.0
      %2279 = vmatprep.subr.mxu0 0.0
      %2280 = vmatpush1.msra.mxu0 0.0
      %2281 = vmatprep.subr.mxu0 0.0
      %2282 = vmatpush1.msra.mxu0 0.0
      %2283 = vmatprep.subr.mxu0 0.0
      %2284 = vmatpush1.msra.mxu0 0.0
      %2285 = vmatprep.subr.mxu0 0.0
      %2286 = vmatpush1.msra.mxu0 0.0
      %2287 = vmatprep.subr.mxu0 0.0
      %2288 = vmatpush1.msra.mxu0 0.0
      %2289 = vmatprep.subr.mxu0 0.0
      %2290 = vmatpush1.msra.mxu0 0.0
      %2291 = vmatprep.subr.mxu0 0.0
      %2292 = vmatpush1.msra.mxu0 0.0
      %2293 = vmatprep.subr.mxu0 0.0
      %2294 = vmatpush1.msra.mxu0 0.0
      %2295 = vmatprep.subr.mxu0 0.0
      %2296 = vmatpush1.msra.mxu0 0.0
      %2297 = vmatprep.subr.mxu0 0.0
      %2298 = vmatpush1.msra.mxu0 0.0
      %2299 = vmatprep.subr.mxu0 0.0
      %2300 = vmatpush1.msra.mxu0 0.0
      %2301 = vmatprep.subr.mxu0 0.0
      %2302 = vmatpush1.msra.mxu0 0.0
      %2303 = vmatprep.subr.mxu0 0.0
      %2304 = vmatpush1.msra.mxu0 0.0
      %2305 = vmatprep.subr.mxu0 0.0
      %2306 = vmatpush1.msra.mxu0 0.0
      %2307 = vmatprep.subr.mxu0 0.0
      %2308 = vmatpush1.msra.mxu0 0.0
      %2309 = vmatprep.subr.mxu0 0.0
      %2310 = vmatpush1.msra.mxu0 0.0
      %2311 = vmatprep.subr.mxu0 0.0
      %2312 = vmatpush1.msra.mxu0 0.0
      %2313 = vmatprep.mubr.f32.mxu0 0.0
      %2314 = vmatmul.mubr.f32.gmra.mrb[0].mxu0 %v2247
      %v2315 = vpop.f32.mrb[0].mxu0
      %v2316 = vadd.f32 0.0, %v2315
      %v2317 = vpop.f32.mrb[0].mxu0
      %2318 = vdwg.mxu0
      %2320 = vrot.lane.b32.xlu0 %v1986, 8
      %v2321 = vpop.permute.xlu0 %2320
      %2324 = vrot.lane.b32.xlu0 %v2151, 16
      %v2325 = vpop.permute.xlu0 %2324
      %2328 = vrot.lane.b32.xlu0 %v2316, 24
      %v2329 = vpop.permute.xlu0 %2328
      %v2331 = vsel %vm581, %v1821, %v2321
      %v2332 = vsel %vm1251, %v2331, %v2325
      %v2333 = vsel %vm1253, %v2332, %v2329
      %s2334 = scalar_lea.vmem %s3, 32
      %v2335 = vld [vmem:[%s2334] sm:$0xff]
      %v2336 = vld [vmem:[%s2334 + $0x8] sm:$0xff]
      %v2337 = vld [vmem:[%s2334 + $0x10] sm:$0xff]
      %v2338 = vld [vmem:[%s2334 + $0x18] sm:$0xff]
      %s2339 = scalar_lea.vmem %s4, 1
      %v2340 = vld [vmem:[%s2339] sm:$0x1]
      %v2342 = vlaneseq
      %v2343 = vshrl.u32 %v2342, 7
      %v2344 = vsub.s32 0, %v2343
      %v2345 = vrot.slane %v2340, %v2344
      %v2348 = vsel %vm504, %v2333, 0
      %2350 = vmatprep.subr.mxu0 0.0
      %2351 = vmatpush1.msra.mxu0 %v2335
      %2352 = vmatprep.subr.mxu0 0.0
      %2353 = vmatpush1.msra.mxu0 %v2336
      %2354 = vmatprep.subr.mxu0 0.0
      %2355 = vmatpush1.msra.mxu0 %v2337
      %2356 = vmatprep.subr.mxu0 0.0
      %2357 = vmatpush1.msra.mxu0 %v2338
      %2358 = vmatprep.subr.mxu0 0.0
      %2359 = vmatpush1.msra.mxu0 0.0
      %2360 = vmatprep.subr.mxu0 0.0
      %2361 = vmatpush1.msra.mxu0 0.0
      %2362 = vmatprep.subr.mxu0 0.0
      %2363 = vmatpush1.msra.mxu0 0.0
      %2364 = vmatprep.subr.mxu0 0.0
      %2365 = vmatpush1.msra.mxu0 0.0
      %2366 = vmatprep.subr.mxu0 0.0
      %2367 = vmatpush1.msra.mxu0 0.0
      %2368 = vmatprep.subr.mxu0 0.0
      %2369 = vmatpush1.msra.mxu0 0.0
      %2370 = vmatprep.subr.mxu0 0.0
      %2371 = vmatpush1.msra.mxu0 0.0
      %2372 = vmatprep.subr.mxu0 0.0
      %2373 = vmatpush1.msra.mxu0 0.0
      %2374 = vmatprep.subr.mxu0 0.0
      %2375 = vmatpush1.msra.mxu0 0.0
      %2376 = vmatprep.subr.mxu0 0.0
      %2377 = vmatpush1.msra.mxu0 0.0
      %2378 = vmatprep.subr.mxu0 0.0
      %2379 = vmatpush1.msra.mxu0 0.0
      %2380 = vmatprep.subr.mxu0 0.0
      %2381 = vmatpush1.msra.mxu0 0.0
      %2382 = vmatprep.subr.mxu0 0.0
      %2383 = vmatpush1.msra.mxu0 0.0
      %2384 = vmatprep.subr.mxu0 0.0
      %2385 = vmatpush1.msra.mxu0 0.0
      %2386 = vmatprep.subr.mxu0 0.0
      %2387 = vmatpush1.msra.mxu0 0.0
      %2388 = vmatprep.subr.mxu0 0.0
      %2389 = vmatpush1.msra.mxu0 0.0
      %2390 = vmatprep.subr.mxu0 0.0
      %2391 = vmatpush1.msra.mxu0 0.0
      %2392 = vmatprep.subr.mxu0 0.0
      %2393 = vmatpush1.msra.mxu0 0.0
      %2394 = vmatprep.subr.mxu0 0.0
      %2395 = vmatpush1.msra.mxu0 0.0
      %2396 = vmatprep.subr.mxu0 0.0
      %2397 = vmatpush1.msra.mxu0 0.0
      %2398 = vmatprep.subr.mxu0 0.0
      %2399 = vmatpush1.msra.mxu0 0.0
      %2400 = vmatprep.subr.mxu0 0.0
      %2401 = vmatpush1.msra.mxu0 0.0
      %2402 = vmatprep.subr.mxu0 0.0
      %2403 = vmatpush1.msra.mxu0 0.0
      %2404 = vmatprep.subr.mxu0 0.0
      %2405 = vmatpush1.msra.mxu0 0.0
      %2406 = vmatprep.subr.mxu0 0.0
      %2407 = vmatpush1.msra.mxu0 0.0
      %2408 = vmatprep.subr.mxu0 0.0
      %2409 = vmatpush1.msra.mxu0 0.0
      %2410 = vmatprep.subr.mxu0 0.0
      %2411 = vmatpush1.msra.mxu0 0.0
      %2412 = vmatprep.subr.mxu0 0.0
      %2413 = vmatpush1.msra.mxu0 0.0
      %2414 = vmatprep.mubr.f32.mxu0 0.0
      %2415 = vmatmul.mubr.f32.gmra.mrb[0].mxu0 %v2348
      %v2416 = vpop.f32.mrb[0].mxu0
      %v2417 = vadd.f32 %v2345, %v2416
      %v2418 = vpop.f32.mrb[0].mxu0
      %2419 = vdwg.mxu0
      %v2420 = vadd.f32 %v1573, %v2417
      %s2421 = scalar_lea.vmem %s5, 1
      %v2422 = vld [vmem:[%s2421] sm:$0x1]
      %s2423 = scalar_lea.vmem %s6, 1
      %v2424 = vld [vmem:[%s2423] sm:$0x1]
      %v2425 = vsel %vm504, %v2420, 0.0
      %2426 = vadd.xlane.f32.xlu0 %v2425
      %v2427 = vpop.xlane.xlu0 %2426
      %v2428 = vmul.f32 %v2427, %v1345
      %v2429 = vsub.f32 %v2420, %v2428
      %v2430 = vmul.f32 %v2429, %v2429
      %v2431 = vsel %vm504, %v2430, 0.0
      %2432 = vadd.xlane.f32.xlu0 %v2431
      %v2433 = vpop.xlane.xlu0 %2432
      %v2434 = vmul.f32 %v2433, %v1345
      %v2435 = vadd.f32 %v2434, 1e-05
      %v2436 = vrsqrt.pop %v2435
      %v2437 = vmul.f32 %v2429, %v2436
      %v2439 = vlaneseq
      %v2440 = vshrl.u32 %v2439, 7
      %v2441 = vsub.s32 0, %v2440
      %v2442 = vrot.slane %v2422, %v2441
      %v2444 = vmul.f32 %v2437, %v2442
      %v2446 = vlaneseq
      %v2447 = vshrl.u32 %v2446, 7
      %v2448 = vsub.s32 0, %v2447
      %v2449 = vrot.slane %v2424, %v2448
      %v2451 = vadd.f32 %v2444, %v2449
      %s2452 = scalar_lea.vmem %s7, 32
      %v2453 = vld [vmem:[%s2452] sm:$0xff]
      %v2454 = vld [vmem:[%s2452 + $0x8] sm:$0xff]
      %v2455 = vld [vmem:[%s2452 + $0x10] sm:$0xff]
      %v2456 = vld [vmem:[%s2452 + $0x18] sm:$0xff]
      %s2457 = scalar_lea.vmem %s8, 1
      %v2458 = vld [vmem:[%s2457] sm:$0x1]
      %v2460 = vlaneseq
      %v2461 = vshrl.u32 %v2460, 7
      %v2462 = vsub.s32 0, %v2461
      %v2463 = vrot.slane %v2458, %v2462
      %v2466 = vsel %vm504, %v2451, 0
      %2468 = vmatprep.subr.mxu0 0.0
      %2469 = vmatpush1.msra.mxu0 %v2453
      %2470 = vmatprep.subr.mxu0 0.0
      %2471 = vmatpush1.msra.mxu0 %v2454
      %2472 = vmatprep.subr.mxu0 0.0
      %2473 = vmatpush1.msra.mxu0 %v2455
      %2474 = vmatprep.subr.mxu0 0.0
      %2475 = vmatpush1.msra.mxu0 %v2456
      %2476 = vmatprep.subr.mxu0 0.0
      %2477 = vmatpush1.msra.mxu0 0.0
      %2478 = vmatprep.subr.mxu0 0.0
      %2479 = vmatpush1.msra.mxu0 0.0
      %2480 = vmatprep.subr.mxu0 0.0
      %2481 = vmatpush1.msra.mxu0 0.0
      %2482 = vmatprep.subr.mxu0 0.0
      %2483 = vmatpush1.msra.mxu0 0.0
      %2484 = vmatprep.subr.mxu0 0.0
      %2485 = vmatpush1.msra.mxu0 0.0
      %2486 = vmatprep.subr.mxu0 0.0
      %2487 = vmatpush1.msra.mxu0 0.0
      %2488 = vmatprep.subr.mxu0 0.0
      %2489 = vmatpush1.msra.mxu0 0.0
      %2490 = vmatprep.subr.mxu0 0.0
      %2491 = vmatpush1.msra.mxu0 0.0
      %2492 = vmatprep.subr.mxu0 0.0
      %2493 = vmatpush1.msra.mxu0 0.0
      %2494 = vmatprep.subr.mxu0 0.0
      %2495 = vmatpush1.msra.mxu0 0.0
      %2496 = vmatprep.subr.mxu0 0.0
      %2497 = vmatpush1.msra.mxu0 0.0
      %2498 = vmatprep.subr.mxu0 0.0
      %2499 = vmatpush1.msra.mxu0 0.0
      %2500 = vmatprep.subr.mxu0 0.0
      %2501 = vmatpush1.msra.mxu0 0.0
      %2502 = vmatprep.subr.mxu0 0.0
      %2503 = vmatpush1.msra.mxu0 0.0
      %2504 = vmatprep.subr.mxu0 0.0
      %2505 = vmatpush1.msra.mxu0 0.0
      %2506 = vmatprep.subr.mxu0 0.0
      %2507 = vmatpush1.msra.mxu0 0.0
      %2508 = vmatprep.subr.mxu0 0.0
      %2509 = vmatpush1.msra.mxu0 0.0
      %2510 = vmatprep.subr.mxu0 0.0
      %2511 = vmatpush1.msra.mxu0 0.0
      %2512 = vmatprep.subr.mxu0 0.0
      %2513 = vmatpush1.msra.mxu0 0.0
      %2514 = vmatprep.subr.mxu0 0.0
      %2515 = vmatpush1.msra.mxu0 0.0
      %2516 = vmatprep.subr.mxu0 0.0
      %2517 = vmatpush1.msra.mxu0 0.0
      %2518 = vmatprep.subr.mxu0 0.0
      %2519 = vmatpush1.msra.mxu0 0.0
      %2520 = vmatprep.subr.mxu0 0.0
      %2521 = vmatpush1.msra.mxu0 0.0
      %2522 = vmatprep.subr.mxu0 0.0
      %2523 = vmatpush1.msra.mxu0 0.0
      %2524 = vmatprep.subr.mxu0 0.0
      %2525 = vmatpush1.msra.mxu0 0.0
      %2526 = vmatprep.subr.mxu0 0.0
      %2527 = vmatpush1.msra.mxu0 0.0
      %2528 = vmatprep.subr.mxu0 0.0
      %2529 = vmatpush1.msra.mxu0 0.0
      %2530 = vmatprep.subr.mxu0 0.0
      %2531 = vmatpush1.msra.mxu0 0.0
      %2532 = vmatprep.mubr.f32.mxu0 0.0
      %2533 = vmatmul.mubr.f32.gmra.mrb[0].mxu0 %v2466
      %v2534 = vpop.f32.mrb[0].mxu0
      %v2535 = vadd.f32 %v2463, %v2534
      %v2536 = vpop.f32.mrb[0].mxu0
      %2537 = vdwg.mxu0
      %v2538 = vmax.f32 %v2535, 0.0
      %s2539 = scalar_lea.vmem %s9, 64
      %v2540 = vld [vmem:[%s2539] sm:$0xff]
      %v2541 = vld [vmem:[%s2539 + $0x8] sm:$0xff]
      %v2542 = vld [vmem:[%s2539 + $0x10] sm:$0xff]
      %v2543 = vld [vmem:[%s2539 + $0x18] sm:$0xff]
      %v2544 = vld [vmem:[%s2539 + $0x20] sm:$0xff]
      %v2545 = vld [vmem:[%s2539 + $0x28] sm:$0xff]
      %v2546 = vld [vmem:[%s2539 + $0x30] sm:$0xff]
      %v2547 = vld [vmem:[%s2539 + $0x38] sm:$0xff]
      %s2548 = scalar_lea.vmem %s10, 1
      %v2549 = vld [vmem:[%s2548] sm:$0x1]
      %v2551 = vlaneseq
      %v2552 = vshrl.u32 %v2551, 7
      %v2553 = vsub.s32 0, %v2552
      %v2554 = vrot.slane %v2549, %v2553
      %v2557 = vsel %vm1470, %v2538, 0
      %2559 = vmatprep.subr.mxu0 0.0
      %2560 = vmatpush1.msra.mxu0 %v2540
      %2561 = vmatprep.subr.mxu0 0.0
      %2562 = vmatpush1.msra.mxu0 %v2541
      %2563 = vmatprep.subr.mxu0 0.0
      %2564 = vmatpush1.msra.mxu0 %v2542
      %2565 = vmatprep.subr.mxu0 0.0
      %2566 = vmatpush1.msra.mxu0 %v2543
      %2567 = vmatprep.subr.mxu0 0.0
      %2568 = vmatpush1.msra.mxu0 %v2544
      %2569 = vmatprep.subr.mxu0 0.0
      %2570 = vmatpush1.msra.mxu0 %v2545
      %2571 = vmatprep.subr.mxu0 0.0
      %2572 = vmatpush1.msra.mxu0 %v2546
      %2573 = vmatprep.subr.mxu0 0.0
      %2574 = vmatpush1.msra.mxu0 %v2547
      %2575 = vmatprep.subr.mxu0 0.0
      %2576 = vmatpush1.msra.mxu0 0.0
      %2577 = vmatprep.subr.mxu0 0.0
      %2578 = vmatpush1.msra.mxu0 0.0
      %2579 = vmatprep.subr.mxu0 0.0
      %2580 = vmatpush1.msra.mxu0 0.0
      %2581 = vmatprep.subr.mxu0 0.0
      %2582 = vmatpush1.msra.mxu0 0.0
      %2583 = vmatprep.subr.mxu0 0.0
      %2584 = vmatpush1.msra.mxu0 0.0
      %2585 = vmatprep.subr.mxu0 0.0
      %2586 = vmatpush1.msra.mxu0 0.0
      %2587 = vmatprep.subr.mxu0 0.0
      %2588 = vmatpush1.msra.mxu0 0.0
      %2589 = vmatprep.subr.mxu0 0.0
      %2590 = vmatpush1.msra.mxu0 0.0
      %2591 = vmatprep.subr.mxu0 0.0
      %2592 = vmatpush1.msra.mxu0 0.0
      %2593 = vmatprep.subr.mxu0 0.0
      %2594 = vmatpush1.msra.mxu0 0.0
      %2595 = vmatprep.subr.mxu0 0.0
      %2596 = vmatpush1.msra.mxu0 0.0
      %2597 = vmatprep.subr.mxu0 0.0
      %2598 = vmatpush1.msra.mxu0 0.0
      %2599 = vmatprep.subr.mxu0 0.0
      %2600 = vmatpush1.msra.mxu0 0.0
      %2601 = vmatprep.subr.mxu0 0.0
      %2602 = vmatpush1.msra.mxu0 0.0
      %2603 = vmatprep.subr.mxu0 0.0
      %2604 = vmatpush1.msra.mxu0 0.0
      %2605 = vmatprep.subr.mxu0 0.0
      %2606 = vmatpush1.msra.mxu0 0.0
      %2607 = vmatprep.subr.mxu0 0.0
      %2608 = vmatpush1.msra.mxu0 0.0
      %2609 = vmatprep.subr.mxu0 0.0
      %2610 = vmatpush1.msra.mxu0 0.0
      %2611 = vmatprep.subr.mxu0 0.0
      %2612 = vmatpush1.msra.mxu0 0.0
      %2613 = vmatprep.subr.mxu0 0.0
      %2614 = vmatpush1.msra.mxu0 0.0
      %2615 = vmatprep.subr.mxu0 0.0
      %2616 = vmatpush1.msra.mxu0 0.0
      %2617 = vmatprep.subr.mxu0 0.0
      %2618 = vmatpush1.msra.mxu0 0.0
      %2619 = vmatprep.subr.mxu0 0.0
      %2620 = vmatpush1.msra.mxu0 0.0
      %2621 = vmatprep.subr.mxu0 0.0
      %2622 = vmatpush1.msra.mxu0 0.0
      %2623 = vmatprep.mubr.f32.mxu0 0.0
      %2624 = vmatmul.mubr.f32.gmra.mrb[0].mxu0 %v2557
      %v2625 = vpop.f32.mrb[0].mxu0
      %v2626 = vadd.f32 %v2554, %v2625
      %v2627 = vpop.f32.mrb[0].mxu0
      %2628 = vdwg.mxu0
      %v2629 = vadd.f32 %v2451, %v2626
      %s2630 = scalar_lea.vmem %s11, 1
      %v2631 = vld [vmem:[%s2630] sm:$0x1]
      %s2632 = scalar_lea.vmem %s12, 1
      %v2633 = vld [vmem:[%s2632] sm:$0x1]
      %v2634 = vsel %vm504, %v2629, 0.0
      %2635 = vadd.xlane.f32.xlu0 %v2634
      %v2636 = vpop.xlane.xlu0 %2635
      %v2637 = vmul.f32 %v2636, %v1345
      %v2638 = vsub.f32 %v2629, %v2637
      %v2639 = vmul.f32 %v2638, %v2638
      %v2640 = vsel %vm504, %v2639, 0.0
      %2641 = vadd.xlane.f32.xlu0 %v2640
      %v2642 = vpop.xlane.xlu0 %2641
      %v2643 = vmul.f32 %v2642, %v1345
      %v2644 = vadd.f32 %v2643, 1e-05
      %v2645 = vrsqrt.pop %v2644
      %v2646 = vmul.f32 %v2638, %v2645
      %v2648 = vlaneseq
      %v2649 = vshrl.u32 %v2648, 7
      %v2650 = vsub.s32 0, %v2649
      %v2651 = vrot.slane %v2631, %v2650
      %v2653 = vmul.f32 %v2646, %v2651
      %v2655 = vlaneseq
      %v2656 = vshrl.u32 %v2655, 7
      %v2657 = vsub.s32 0, %v2656
      %v2658 = vrot.slane %v2633, %v2657
      %v2660 = vadd.f32 %v2653, %v2658
      %v2661 = vld [vmem:[%s13] sm:$0x1]
      %v2663 = vlaneseq
      %v2664 = vshrl.u32 %v2663, 7
      %v2665 = vsub.s32 0, %v2664
      %v2666 = vrot.slane %v2661, %v2665
      %v2668 = vmul.f32 %v2660, %v2666
      %v2669 = vsel %vm504, %v2668, 0.0
      %2670 = vadd.xlane.f32.xlu0 %v2669
      %v2671 = vpop.xlane.xlu0 %2670
      %v2672 = vld [vmem:[#allocation2] sm:$0x1]
      %v2674 = vlaneseq
      %v2675 = vshrl.u32 %v2674, 7
      %v2676 = vsub.s32 0, %v2675
      %v2677 = vrot.slane %v2672, %v2676
      %v2679 = vadd.f32 %v2671, %v2677
      %vm2680 = vcmask 7168
      %2681 = vst.msk [vmem:[%s491] sm:$0xff] %vm2680, %v2679
      %p2682 = scmp.lt.s32.totalorder %s28, 1
      %s2683 = scalar_select %p2682, %s28, 1
      %s2684 = smul.addr %s2683, 8
      %s2685 = scalar_lea.vmem %s15, %s2684
      // Predicated region
      $region81: #{time_series_transformer_forward.1} parent=79 // pred_check
        %p2686 = pneg %p366
      $region82: #{time_series_transformer_forward.1} parent=79 // pred_check_branch
        %2688 = sbr.rel (%p2686) target = $region84
      $region83: #{time_series_transformer_forward.1} parent=79 // pred_region
        _
      $region84: #{time_series_transformer_forward.1} parent=79 // pred_fallthru
        _
    $region80: #{time_series_transformer_forward.1} parent=5 // pred_fallthru
      _
    %p2689 = scmp.le.s32.totalorder 2, %s23
    // Predicated region
    $region85: #{time_series_transformer_forward.1} parent=5 // pred_check
      %p2690 = pneg %p2689
    $region86: #{time_series_transformer_forward.1} parent=5 // pred_check_branch
      %2692 = sbr.rel (%p2690) target = $region88
    $region87: #{time_series_transformer_forward.1} parent=5 // pred_region
      %s2693 = ssub.s32 %s23, 2
      // Predicated region
      $region89: #{time_series_transformer_forward.1} parent=87 // pred_check
        %p2694 = pneg %p372
      $region90: #{time_series_transformer_forward.1} parent=87 // pred_check_branch
        %2696 = sbr.rel (%p2694) target = $region92
      $region91: #{time_series_transformer_forward.1} parent=87 // pred_region
        %p2697 = scmp.lt.s32.totalorder %s29, 1
        %s2698 = scalar_select %p2697, %s29, 1
        %s2699 = smul.addr %s2698, 8
        %s2700 = scalar_lea.vmem %s15, %s2699
      $region92: #{time_series_transformer_forward.1} parent=87 // pred_fallthru
        _
    $region88: #{time_series_transformer_forward.1} parent=5 // pred_fallthru
      _
  $region6: #{time_series_transformer_forward.1} parent=0 // loop_footer
    %s27 = sadd.s32 1, %s23
  $region7: #{time_series_transformer_forward.1} parent=0 // loop_footer_branch
    %22 = sbr.rel target = $region3
  $region8: #{time_series_transformer_forward.1} parent=0 // loop_exit
    _

</llo_original>
